<compile_context>
chip_gen: v7x
topology: tpu7x:2x2x1
jax: 0.10.0
libtpu: 0.0.40
codegen_flags: <defaults>
</compile_context>

<pallas_src>
from functools import partial

import numpy as np
import jax
import jax.numpy as jnp
from jax import lax
from jax.experimental import pallas as pl
from jax.experimental.pallas import tpu as pltpu


def _round_up(x, m):
    return ((x + m - 1) // m) * m


def _bf16_round(a):
    """Round-to-nearest bf16 then back to f32 (mirrors the kernel's MXU casts)."""
    return np.asarray(
        jnp.asarray(np.asarray(a, np.float32)).astype(jnp.bfloat16).astype(jnp.float32))


# --------------------- tile-size / VMEM-budget heuristics ---------------------
def _vmem_bytes(t_block, b_tile, input_size, h_pad):
    G = 4 * h_pad
    blk = t_block * b_tile
    return (2 * blk * input_size * 4            # x blocks (double-buffered, f32)
            + 2 * blk * 2 * 4                   # pad-mask + valid blocks
            + 2 * blk * h_pad * 4               # output blocks
            + 2 * (input_size + h_pad) * G * 2  # bf16 W_ih + W_hh (2 buffers)
            + 2 * G * 4                         # bias
            + blk * G * 4                       # gx VMEM scratch
            + 2 * b_tile * h_pad * 4)           # h / c carries


def _pick_tiles(B, T, input_size, h_pad, budget=40 * 1024 * 1024):
    # b_tile >= 128 keeps the recurrent (b_tile, H)@(H, 4H) MXU matmul row-full;
    # t_block up to 32 amortises the ~0.35us per-grid-step overhead.  Both are
    # multiples of 8 and shrink until the working set fits a v7x-safe budget.
    b_tile = min(128, _round_up(B, 8))
    t_block = min(32, _round_up(T, 8))
    while _vmem_bytes(t_block, b_tile, input_size, h_pad) > budget:
        if t_block > 8:
            t_block -= 8
        elif b_tile > 8:
            b_tile -= 8
        else:
            break
    return b_tile, t_block


# ------------- fused kernel: input projection + masked recurrence -------------
def lstm_fused_kernel(x_ref, pm_ref, valid_ref, wih_ref, whh_ref, bias_ref,
                      emb_ref, gx_sc, h_sc, c_sc):
    """One grid step == one batch tile x t_block timesteps."""
    # Zero carried state at the start of each batch tile's time sweep.
    @pl.when(pl.program_id(1) == 0)
    def _():
        h_sc[...] = jnp.zeros_like(h_sc)
        c_sc[...] = jnp.zeros_like(c_sc)

    H = h_sc.shape[-1]                       # padded hidden (multiple of 128)
    t_block = x_ref.shape[0]
    unroll = min(8, t_block)

    # ---- phase 1 (no serial dependence): gx = x @ W_ih^T + bias into VMEM ----
    # Weight / bias loads are hoisted so the unrolled loops don't re-issue them.
    wih = wih_ref[...]                       # bf16 (I, 4H)
    bias = bias_ref[...]                     # f32  (1, 4H)

    def proj_step(tt, carry):
        xq = x_ref[tt].astype(jnp.bfloat16)  # (b_tile, I)
        gx_sc[tt] = jnp.dot(xq, wih, preferred_element_type=jnp.float32) + bias
        return carry

    lax.fori_loop(0, t_block, proj_step, 0, unroll=unroll)

    # ---- phase 2: masked sequential LSTMCell recurrence ----------------------
    whh = whh_ref[...]                       # bf16 (H, 4H), loop-invariant

    def step(tt, carry):
        h_prev, c_prev = carry
        pad = pm_ref[tt]                     # (b_tile, 1) word-boundary mask
        valid = valid_ref[tt] != 0.0         # (b_tile, 1) t < length
        gx = gx_sc[tt]                       # (b_tile, 4H) f32

        h_m = h_prev * pad                   # state reset at word boundaries
        c_m = c_prev * pad

        gates = gx + jnp.dot(h_m.astype(jnp.bfloat16), whh,
                             preferred_element_type=jnp.float32)
        i_g = jax.nn.sigmoid(gates[:, 0 * H:1 * H])
        f_g = jax.nn.sigmoid(gates[:, 1 * H:2 * H])
        g_g = jnp.tanh(gates[:, 2 * H:3 * H])
        o_g = jax.nn.sigmoid(gates[:, 3 * H:4 * H])
        c_new = f_g * c_m + i_g * g_g
        h_new = o_g * jnp.tanh(c_new)

        # jnp.where -> single vsel per vreg; full lane-dense (b_tile, H) store.
        emb_ref[tt] = jnp.where(valid, h_new, 0.0)
        return (jnp.where(valid, h_new, h_prev),
                jnp.where(valid, c_new, c_prev))

    h_fin, c_fin = lax.fori_loop(0, t_block, step, (h_sc[...], c_sc[...]),
                                 unroll=unroll)
    h_sc[...] = h_fin
    c_sc[...] = c_fin


def lstm_forward_pallas(x_tbi, pm, valid, wih_pad, whh_pad, bias_pad,
                        *, h_pad, t_block, b_tile):
    T_pad, B_pad, I = x_tbi.shape
    G = 4 * h_pad
    assert b_tile % 8 == 0 and t_block % 8 == 0
    nb = B_pad // b_tile                     # >= 2 when B permits -> megacore
    nt = T_pad // t_block

    grid_spec = pltpu.PrefetchScalarGridSpec(
        num_scalar_prefetch=0,
        grid=(nb, nt),                       # batch outer (parallel), time inner
        in_specs=[
            pl.BlockSpec((t_block, b_tile, I), lambda bi, tb: (tb, bi, 0)),
            # TODO(synk): pack pm/valid into a single (t, b, 2) input to cut the
            # two tiny per-step DMAs once measured to matter.
            pl.BlockSpec((t_block, b_tile, 1), lambda bi, tb: (tb, bi, 0)),
            pl.BlockSpec((t_block, b_tile, 1), lambda bi, tb: (tb, bi, 0)),
            pl.BlockSpec((I, G), lambda bi, tb: (0, 0)),       # W_ih (bf16)
            # TODO(synk): add pipeline_mode=pl.Buffered(1) on the loop-invariant
            # weights once single-buffering is honored by the grid pipeline; the
            # bf16 storage already halves their VMEM residency for v7x.
            pl.BlockSpec((h_pad, G), lambda bi, tb: (0, 0)),    # W_hh (bf16)
            pl.BlockSpec((1, G), lambda bi, tb: (0, 0)),        # bias (f32)
        ],
        out_specs=pl.BlockSpec((t_block, b_tile, h_pad),
                               lambda bi, tb: (tb, bi, 0)),
        scratch_shapes=[pltpu.VMEM((t_block, b_tile, G), jnp.float32),  # gx
                        pltpu.VMEM((b_tile, h_pad), jnp.float32),       # h carry
                        pltpu.VMEM((b_tile, h_pad), jnp.float32)],      # c carry
    )

    est = _vmem_bytes(t_block, b_tile, I, h_pad)
    vmem_limit = int(min(56 * 1024 * 1024, max(32 * 1024 * 1024, 2 * est)))

    cost = pl.CostEstimate(
        flops=int(2 * T_pad * B_pad * G * (I + h_pad)
                  + 30 * T_pad * B_pad * h_pad),
        transcendentals=int(5 * T_pad * B_pad * h_pad),
        bytes_accessed=int(4 * (x_tbi.size + pm.size + valid.size
                                + T_pad * B_pad * h_pad + bias_pad.size)
                           + 2 * (wih_pad.size + whh_pad.size)),
    )

    return pl.pallas_call(
        lstm_fused_kernel,
        out_shape=jax.ShapeDtypeStruct((T_pad, B_pad, h_pad), jnp.float32),
        grid_spec=grid_spec,
        compiler_params=pltpu.CompilerParams(
            dimension_semantics=("parallel", "arbitrary"),  # time carries state
            vmem_limit_bytes=vmem_limit),
        cost_estimate=cost,
    )(x_tbi, pm, valid, wih_pad, whh_pad, bias_pad)


# ----------------------------- jitted device path ----------------------------
@partial(jax.jit, static_argnames=("hidden", "h_pad", "t_block", "b_tile"))
def rnn_device_forward(x, mask, length, wih_pad, whh_pad, bias_pad,
                       *, hidden, h_pad, t_block, b_tile):
    B, T, I = x.shape

    # boundary-mask prep on device: mask[:, 0] = 0 ; mask.scatter_(1, length-1, 1)
    mask = mask.at[:, 0].set(0.0)
    end_idx = (length - 1).astype(jnp.int32)
    mask = mask.at[jnp.arange(B), end_idx].set(1.0)

    # pad batch/time to TPU-friendly sizes (time-major for the recurrence);
    # padded rows/steps stay zero (valid=0 keeps state frozen, outputs zero).
    B_pad = _round_up(B, b_tile)
    T_pad = _round_up(T, t_block)
    # TODO(synk): feed x in bf16 once b_tile >= 16 everywhere (halves x DMA).
    x_p = jnp.zeros((T_pad, B_pad, I), jnp.float32)
    x_p = x_p.at[:T, :B, :].set(jnp.transpose(x, (1, 0, 2)).astype(jnp.float32))
    pm = jnp.zeros((T_pad, B_pad, 1), jnp.float32)
    pm = pm.at[:T, :B, 0].set(jnp.transpose(mask, (1, 0)))
    valid = jnp.zeros((T_pad, B_pad, 1), jnp.float32)
    valid = valid.at[:T, :B, 0].set(
        (jnp.arange(T, dtype=jnp.int32)[:, None] < length[None, :]).astype(jnp.float32))

    emb_tbh = lstm_forward_pallas(x_p, pm, valid, wih_pad, whh_pad, bias_pad,
                                  h_pad=h_pad, t_block=t_block, b_tile=b_tile)

    # drop padding, return batch-major on device (single fused XLA transpose).
    # TODO(synk): emit (B, T, H) blocks directly from the kernel to drop this
    # pass once dynamic-sublane stores are verified cheap on all generations.
    emb_bth = jnp.transpose(emb_tbh[:T, :B, :hidden], (1, 0, 2))
    return emb_bth, mask


# ------------------------------ Module port ----------------------------------
def _pad_gate_cols(w, H, H_pad):
    """(rows, 4H) -> (rows, 4H_pad); gate g goes to columns [g*H_pad, g*H_pad+H)."""
    rows = w.shape[0]
    out = np.zeros((rows, 4 * H_pad), np.float32)
    for g in range(4):
        out[:, g * H_pad:g * H_pad + H] = w[:, g * H:(g + 1) * H]
    return out


class PallasRNN:
    def __init__(self, input_size, hidden_size, key):
        self.input_size = input_size
        self.hidden_size = hidden_size
        self.h_pad = _round_up(hidden_size, 128)       # lane-dense hidden

        k = 1.0 / np.sqrt(hidden_size)
        k0, k1, k2, k3 = jax.random.split(key, 4)
        w_ih = jax.random.uniform(k0, (4 * hidden_size, input_size),
                                  jnp.float32, -k, k)
        w_hh = jax.random.uniform(k1, (4 * hidden_size, hidden_size),
                                  jnp.float32, -k, k)
        b_ih = jax.random.uniform(k2, (4 * hidden_size,), jnp.float32, -k, k)
        b_hh = jax.random.uniform(k3, (4 * hidden_size,), jnp.float32, -k, k)

        # Weights are used in bf16 on the MXU (f32 accumulation + f32 gate math
        # stay).  The reference uses these same bf16-rounded values so the
        # tolerance check remains tight.
        self.wih_t = _bf16_round(np.asarray(w_ih).T)   # (I, 4H), bf16-exact f32
        self.whh_t = _bf16_round(np.asarray(w_hh).T)   # (H, 4H)
        self.bias = (np.asarray(b_ih) + np.asarray(b_hh)).reshape(1, 4 * hidden_size)

        H, H_pad = hidden_size, self.h_pad
        wih_pad = _pad_gate_cols(self.wih_t, H, H_pad)
        whh_pad = np.zeros((H_pad, 4 * H_pad), np.float32)
        whh_pad[:H, :] = _pad_gate_cols(self.whh_t, H, H_pad)
        bias_pad = _pad_gate_cols(self.bias, H, H_pad)

        # Padded-lane invariant (review): the inert padded gate lanes rely on
        # every padded weight row/col and bias lane being exactly zero.
        for g in range(4):
            assert not wih_pad[:, g * H_pad + H:(g + 1) * H_pad].any()
            assert not whh_pad[:, g * H_pad + H:(g + 1) * H_pad].any()
            assert not bias_pad[:, g * H_pad + H:(g + 1) * H_pad].any()
        assert not whh_pad[H:, :].any()

        # bf16 cast is exact here (values already bf16-representable).
        self.wih_pad = jnp.asarray(wih_pad, jnp.bfloat16)
        self.whh_pad = jnp.asarray(whh_pad, jnp.bfloat16)
        self.bias_pad = jnp.asarray(bias_pad, jnp.float32)

    def forward(self, x, mask, length):
        B, T, _ = x.shape
        H = self.hidden_size
        assert int(np.max(np.asarray(length))) == T, "example uses max(length)==T"

        b_tile, t_block = _pick_tiles(B, T, self.input_size, self.h_pad)
        emb_bth, mask_prepped = rnn_device_forward(
            jnp.asarray(x, jnp.float32), jnp.asarray(mask, jnp.float32),
            jnp.asarray(length, jnp.int32),
            self.wih_pad, self.whh_pad, self.bias_pad,
            hidden=H, h_pad=self.h_pad, t_block=t_block, b_tile=b_tile)
        jax.block_until_ready(emb_bth)
        embeddings = np.asarray(emb_bth)                 # (B, T, H), one transfer
        mask_np = np.asarray(mask_prepped).copy()

        # --- glue: data-dependent mask padding + gather (host side) ---
        # TODO(synk): dynamic output length (max_word_num) is data-dependent, so
        # the nonzero/gather stays in host numpy rather than a Pallas kernel.
        word_nums = mask_np.sum(1)
        max_wn = word_nums.max()
        max_word_num = int(max_wn)
        for i in range(B):
            p = int(word_nums[i] - max_wn)
            if p != 0:
                mask_np[i, p:] = 1
                while mask_np[i].sum() < max_wn:
                    p -= 1
                    mask_np[i, p:] = 1
        rows, cols = np.nonzero(mask_np)
        index = rows * mask_np.shape[1] + cols - 1
        flat = embeddings.reshape(-1, H)
        word_embeddings = flat[index]
        output = word_embeddings.reshape(B, max_word_num, H).transpose(0, 2, 1)
        return output, word_nums, embeddings


# ------------------------------- reference -----------------------------------
def numpy_lstm_reference(x, mask, length, wih_t, whh_t, bias):
    """Pure-numpy masked recurrence, mirroring the kernel's bf16 matmul inputs."""
    def sig(z):
        return 1.0 / (1.0 + np.exp(-z))
    B, T, _ = x.shape
    H = whh_t.shape[0]
    h = np.zeros((B, H), np.float32)
    c = np.zeros((B, H), np.float32)
    emb = np.zeros((B, T, H), np.float32)
    for t in range(T):
        pad = mask[:, t][:, None]
        h_m = _bf16_round(h * pad)           # kernel feeds bf16 h into the MXU
        c_m = c * pad
        x_q = _bf16_round(x[:, t, :])        # kernel feeds bf16 x into the MXU
        gates = x_q @ wih_t + h_m @ whh_t + bias
        i_g, f_g = sig(gates[:, :H]), sig(gates[:, H:2 * H])
        g_g, o_g = np.tanh(gates[:, 2 * H:3 * H]), sig(gates[:, 3 * H:])
        c_new = f_g * c_m + i_g * g_g
        h_new = o_g * np.tanh(c_new)
        valid = (t < length)[:, None].astype(np.float32)
        h = valid * h_new + (1 - valid) * h
        c = valid * c_new + (1 - valid) * c
        emb[:, t, :] = valid * h_new
    return emb


# --------------------------------- main ---------------------------------------
if __name__ == "__main__":
    B, T, INPUT, HIDDEN = 4, 8, 16, 32
    key = jax.random.PRNGKey(0)
    kx, km, kw = jax.random.split(key, 3)

    x = jax.random.normal(kx, (B, T, INPUT), jnp.float32)
    length = jnp.array([8, 6, 5, 3], jnp.int32)          # sorted descending
    # boundary mask: random 0/1 inside each valid region, zero beyond length
    mask = (jax.random.uniform(km, (B, T)) < 0.3).astype(jnp.float32)
    valid_region = (jnp.arange(T)[None, :] < length[:, None]).astype(jnp.float32)
    mask = mask * valid_region

    rnn = PallasRNN(INPUT, HIDDEN, kw)
    output, word_nums, embeddings = rnn.forward(x, mask, length)
    jax.block_until_ready(jnp.asarray(output))

    # correctness check of the Pallas recurrence against the numpy reference
    mask_mod = np.asarray(mask).copy()
    mask_mod[:, 0] = 0.0
    mask_mod[np.arange(B), np.asarray(length) - 1] = 1.0
    emb_ref = numpy_lstm_reference(np.asarray(x), mask_mod,
                                   np.asarray(length).astype(np.float32),
                                   np.asarray(rnn.wih_t), np.asarray(rnn.whh_t),
                                   np.asarray(rnn.bias))
    np.testing.assert_allclose(embeddings, emb_ref, rtol=1e-3, atol=1e-3)
    assert output.shape == (B, HIDDEN, int(word_nums.max()))
    print("KERNEL_OK")
</pallas_src>

<mosaic_0001>
module attributes {stable_mosaic.version = 11 : i64} {
  func.func @lstm_fused_kernel(%arg0: i32, %arg1: i32, %arg2: memref<8x8x16xf32, #tpu.memory_space<vmem>>, %arg3: memref<8x8x1xf32, #tpu.memory_space<vmem>>, %arg4: memref<8x8x1xf32, #tpu.memory_space<vmem>>, %arg5: memref<16x512xbf16, #tpu.memory_space<vmem>>, %arg6: memref<128x512xbf16, #tpu.memory_space<vmem>>, %arg7: memref<1x512xf32, #tpu.memory_space<vmem>>, %arg8: memref<8x8x128xf32, #tpu.memory_space<vmem>>, %arg9: memref<8x8x512xf32, #tpu.memory_space<vmem>>, %arg10: memref<8x128xf32, #tpu.memory_space<vmem>>, %arg11: memref<8x128xf32, #tpu.memory_space<vmem>>) attributes {dimension_semantics = [#tpu.dimension_semantics<parallel>, #tpu.dimension_semantics<arbitrary>], iteration_bounds = array<i64: 1, 1>, scalar_prefetch = 0 : i64, scratch_operands = 3 : i64, tpu.core_type = #tpu.core_type<tc>, window_params = [{transform_indices = @transform_0, window_bounds = array<i64: 8, 8, 16>}, {transform_indices = @transform_1, window_bounds = array<i64: 8, 8, 1>}, {transform_indices = @transform_2, window_bounds = array<i64: 8, 8, 1>}, {pipeline_mode = #tpu.pipeline_mode<synchronous>, transform_indices = @transform_3, window_bounds = array<i64: 16, 512>}, {pipeline_mode = #tpu.pipeline_mode<synchronous>, transform_indices = @transform_4, window_bounds = array<i64: 128, 512>}, {pipeline_mode = #tpu.pipeline_mode<synchronous>, transform_indices = @transform_5, window_bounds = array<i64: 1, 512>}, {transform_indices = @transform_6, window_bounds = array<i64: 8, 8, 128>}]} {
    %c0_i32 = arith.constant 0 : i32
    %0 = arith.cmpi eq, %arg1, %c0_i32 : i32
    %1 = arith.extui %0 : i1 to i32
    %c0_i32_0 = arith.constant 0 : i32
    %2 = arith.cmpi ne, %1, %c0_i32_0 : i32
    scf.if %2 {
      %cst_175 = arith.constant 0.000000e+00 : f32
      %554 = vector.broadcast %cst_175 : f32 to vector<8x128xf32>
      %c0_176 = arith.constant 0 : index
      %c0_177 = arith.constant 0 : index
      %555 = vector.load %arg10[%c0_176, %c0_177] : memref<8x128xf32, #tpu.memory_space<vmem>>, vector<8x128xf32>
      tpu.vector_store %arg10[%c0_176, %c0_177], %554 {strides = array<i32>} : memref<8x128xf32, #tpu.memory_space<vmem>>, vector<8x128xf32>,
      %cst_178 = arith.constant 0.000000e+00 : f32
      %556 = vector.broadcast %cst_178 : f32 to vector<8x128xf32>
      %c0_179 = arith.constant 0 : index
      %c0_180 = arith.constant 0 : index
      %557 = vector.load %arg11[%c0_179, %c0_180] : memref<8x128xf32, #tpu.memory_space<vmem>>, vector<8x128xf32>
      tpu.vector_store %arg11[%c0_179, %c0_180], %556 {strides = array<i32>} : memref<8x128xf32, #tpu.memory_space<vmem>>, vector<8x128xf32>,
    } else {
    }
    %c0 = arith.constant 0 : index
    %c0_1 = arith.constant 0 : index
    %3 = vector.load %arg5[%c0, %c0_1] : memref<16x512xbf16, #tpu.memory_space<vmem>>, vector<16x512xbf16>
    %c0_2 = arith.constant 0 : index
    %c0_3 = arith.constant 0 : index
    %4 = vector.load %arg7[%c0_2, %c0_3] : memref<1x512xf32, #tpu.memory_space<vmem>>, vector<1x512xf32>
    %c0_i32_4 = arith.constant 0 : i32
    %5 = arith.index_cast %c0_i32_4 : i32 to index
    %c0_5 = arith.constant 0 : index
    %c0_6 = arith.constant 0 : index
    %6 = vector.load %arg2[%5, %c0_5, %c0_6] : memref<8x8x16xf32, #tpu.memory_space<vmem>>, vector<1x8x16xf32>
    %7 = vector.shape_cast %6 : vector<1x8x16xf32> to vector<8x16xf32>
    %8 = arith.truncf %7 : vector<8x16xf32> to vector<8x16xbf16>
    %cst = arith.constant dense<0.000000e+00> : vector<8x512xf32>
    %9 = tpu.matmul %8, %3, %cst {dimension_numbers = #tpu.dot_dimension_numbers<[1], [0], [0], [1], [0, 0, 1, 1], [], []>} : vector<8x16xbf16>, vector<16x512xbf16>, vector<8x512xf32> -> vector<8x512xf32>
    %10 = vector.broadcast %4 : vector<1x512xf32> to vector<8x512xf32>
    %11 = arith.addf %9, %10 : vector<8x512xf32>
    %12 = arith.index_cast %c0_i32_4 : i32 to index
    %c0_7 = arith.constant 0 : index
    %c0_8 = arith.constant 0 : index
    %13 = vector.load %arg9[%12, %c0_7, %c0_8] : memref<8x8x512xf32, #tpu.memory_space<vmem>>, vector<1x8x512xf32>
    %14 = vector.shape_cast %13 : vector<1x8x512xf32> to vector<8x512xf32>
    %15 = vector.shape_cast %11 : vector<8x512xf32> to vector<1x8x512xf32>
    tpu.vector_store %arg9[%12, %c0_7, %c0_8], %15 {strides = array<i32>} : memref<8x8x512xf32, #tpu.memory_space<vmem>>, vector<1x8x512xf32>,
    %c1_i32 = arith.constant 1 : i32
    %16 = arith.index_cast %c1_i32 : i32 to index
    %c0_9 = arith.constant 0 : index
    %c0_10 = arith.constant 0 : index
    %17 = vector.load %arg2[%16, %c0_9, %c0_10] : memref<8x8x16xf32, #tpu.memory_space<vmem>>, vector<1x8x16xf32>
    %18 = vector.shape_cast %17 : vector<1x8x16xf32> to vector<8x16xf32>
    %19 = arith.truncf %18 : vector<8x16xf32> to vector<8x16xbf16>
    %cst_11 = arith.constant dense<0.000000e+00> : vector<8x512xf32>
    %20 = tpu.matmul %19, %3, %cst_11 {dimension_numbers = #tpu.dot_dimension_numbers<[1], [0], [0], [1], [0, 0, 1, 1], [], []>} : vector<8x16xbf16>, vector<16x512xbf16>, vector<8x512xf32> -> vector<8x512xf32>
    %21 = vector.broadcast %4 : vector<1x512xf32> to vector<8x512xf32>
    %22 = arith.addf %20, %21 : vector<8x512xf32>
    %23 = arith.index_cast %c1_i32 : i32 to index
    %c0_12 = arith.constant 0 : index
    %c0_13 = arith.constant 0 : index
    %24 = vector.load %arg9[%23, %c0_12, %c0_13] : memref<8x8x512xf32, #tpu.memory_space<vmem>>, vector<1x8x512xf32>
    %25 = vector.shape_cast %24 : vector<1x8x512xf32> to vector<8x512xf32>
    %26 = vector.shape_cast %22 : vector<8x512xf32> to vector<1x8x512xf32>
    tpu.vector_store %arg9[%23, %c0_12, %c0_13], %26 {strides = array<i32>} : memref<8x8x512xf32, #tpu.memory_space<vmem>>, vector<1x8x512xf32>,
    %c2_i32 = arith.constant 2 : i32
    %27 = arith.index_cast %c2_i32 : i32 to index
    %c0_14 = arith.constant 0 : index
    %c0_15 = arith.constant 0 : index
    %28 = vector.load %arg2[%27, %c0_14, %c0_15] : memref<8x8x16xf32, #tpu.memory_space<vmem>>, vector<1x8x16xf32>
    %29 = vector.shape_cast %28 : vector<1x8x16xf32> to vector<8x16xf32>
    %30 = arith.truncf %29 : vector<8x16xf32> to vector<8x16xbf16>
    %cst_16 = arith.constant dense<0.000000e+00> : vector<8x512xf32>
    %31 = tpu.matmul %30, %3, %cst_16 {dimension_numbers = #tpu.dot_dimension_numbers<[1], [0], [0], [1], [0, 0, 1, 1], [], []>} : vector<8x16xbf16>, vector<16x512xbf16>, vector<8x512xf32> -> vector<8x512xf32>
    %32 = vector.broadcast %4 : vector<1x512xf32> to vector<8x512xf32>
    %33 = arith.addf %31, %32 : vector<8x512xf32>
    %34 = arith.index_cast %c2_i32 : i32 to index
    %c0_17 = arith.constant 0 : index
    %c0_18 = arith.constant 0 : index
    %35 = vector.load %arg9[%34, %c0_17, %c0_18] : memref<8x8x512xf32, #tpu.memory_space<vmem>>, vector<1x8x512xf32>
    %36 = vector.shape_cast %35 : vector<1x8x512xf32> to vector<8x512xf32>
    %37 = vector.shape_cast %33 : vector<8x512xf32> to vector<1x8x512xf32>
    tpu.vector_store %arg9[%34, %c0_17, %c0_18], %37 {strides = array<i32>} : memref<8x8x512xf32, #tpu.memory_space<vmem>>, vector<1x8x512xf32>,
    %c3_i32 = arith.constant 3 : i32
    %38 = arith.index_cast %c3_i32 : i32 to index
    %c0_19 = arith.constant 0 : index
    %c0_20 = arith.constant 0 : index
    %39 = vector.load %arg2[%38, %c0_19, %c0_20] : memref<8x8x16xf32, #tpu.memory_space<vmem>>, vector<1x8x16xf32>
    %40 = vector.shape_cast %39 : vector<1x8x16xf32> to vector<8x16xf32>
    %41 = arith.truncf %40 : vector<8x16xf32> to vector<8x16xbf16>
    %cst_21 = arith.constant dense<0.000000e+00> : vector<8x512xf32>
    %42 = tpu.matmul %41, %3, %cst_21 {dimension_numbers = #tpu.dot_dimension_numbers<[1], [0], [0], [1], [0, 0, 1, 1], [], []>} : vector<8x16xbf16>, vector<16x512xbf16>, vector<8x512xf32> -> vector<8x512xf32>
    %43 = vector.broadcast %4 : vector<1x512xf32> to vector<8x512xf32>
    %44 = arith.addf %42, %43 : vector<8x512xf32>
    %45 = arith.index_cast %c3_i32 : i32 to index
    %c0_22 = arith.constant 0 : index
    %c0_23 = arith.constant 0 : index
    %46 = vector.load %arg9[%45, %c0_22, %c0_23] : memref<8x8x512xf32, #tpu.memory_space<vmem>>, vector<1x8x512xf32>
    %47 = vector.shape_cast %46 : vector<1x8x512xf32> to vector<8x512xf32>
    %48 = vector.shape_cast %44 : vector<8x512xf32> to vector<1x8x512xf32>
    tpu.vector_store %arg9[%45, %c0_22, %c0_23], %48 {strides = array<i32>} : memref<8x8x512xf32, #tpu.memory_space<vmem>>, vector<1x8x512xf32>,
    %c4_i32 = arith.constant 4 : i32
    %49 = arith.index_cast %c4_i32 : i32 to index
    %c0_24 = arith.constant 0 : index
    %c0_25 = arith.constant 0 : index
    %50 = vector.load %arg2[%49, %c0_24, %c0_25] : memref<8x8x16xf32, #tpu.memory_space<vmem>>, vector<1x8x16xf32>
    %51 = vector.shape_cast %50 : vector<1x8x16xf32> to vector<8x16xf32>
    %52 = arith.truncf %51 : vector<8x16xf32> to vector<8x16xbf16>
    %cst_26 = arith.constant dense<0.000000e+00> : vector<8x512xf32>
    %53 = tpu.matmul %52, %3, %cst_26 {dimension_numbers = #tpu.dot_dimension_numbers<[1], [0], [0], [1], [0, 0, 1, 1], [], []>} : vector<8x16xbf16>, vector<16x512xbf16>, vector<8x512xf32> -> vector<8x512xf32>
    %54 = vector.broadcast %4 : vector<1x512xf32> to vector<8x512xf32>
    %55 = arith.addf %53, %54 : vector<8x512xf32>
    %56 = arith.index_cast %c4_i32 : i32 to index
    %c0_27 = arith.constant 0 : index
    %c0_28 = arith.constant 0 : index
    %57 = vector.load %arg9[%56, %c0_27, %c0_28] : memref<8x8x512xf32, #tpu.memory_space<vmem>>, vector<1x8x512xf32>
    %58 = vector.shape_cast %57 : vector<1x8x512xf32> to vector<8x512xf32>
    %59 = vector.shape_cast %55 : vector<8x512xf32> to vector<1x8x512xf32>
    tpu.vector_store %arg9[%56, %c0_27, %c0_28], %59 {strides = array<i32>} : memref<8x8x512xf32, #tpu.memory_space<vmem>>, vector<1x8x512xf32>,
    %c5_i32 = arith.constant 5 : i32
    %60 = arith.index_cast %c5_i32 : i32 to index
    %c0_29 = arith.constant 0 : index
    %c0_30 = arith.constant 0 : index
    %61 = vector.load %arg2[%60, %c0_29, %c0_30] : memref<8x8x16xf32, #tpu.memory_space<vmem>>, vector<1x8x16xf32>
    %62 = vector.shape_cast %61 : vector<1x8x16xf32> to vector<8x16xf32>
    %63 = arith.truncf %62 : vector<8x16xf32> to vector<8x16xbf16>
    %cst_31 = arith.constant dense<0.000000e+00> : vector<8x512xf32>
    %64 = tpu.matmul %63, %3, %cst_31 {dimension_numbers = #tpu.dot_dimension_numbers<[1], [0], [0], [1], [0, 0, 1, 1], [], []>} : vector<8x16xbf16>, vector<16x512xbf16>, vector<8x512xf32> -> vector<8x512xf32>
    %65 = vector.broadcast %4 : vector<1x512xf32> to vector<8x512xf32>
    %66 = arith.addf %64, %65 : vector<8x512xf32>
    %67 = arith.index_cast %c5_i32 : i32 to index
    %c0_32 = arith.constant 0 : index
    %c0_33 = arith.constant 0 : index
    %68 = vector.load %arg9[%67, %c0_32, %c0_33] : memref<8x8x512xf32, #tpu.memory_space<vmem>>, vector<1x8x512xf32>
    %69 = vector.shape_cast %68 : vector<1x8x512xf32> to vector<8x512xf32>
    %70 = vector.shape_cast %66 : vector<8x512xf32> to vector<1x8x512xf32>
    tpu.vector_store %arg9[%67, %c0_32, %c0_33], %70 {strides = array<i32>} : memref<8x8x512xf32, #tpu.memory_space<vmem>>, vector<1x8x512xf32>,
    %c6_i32 = arith.constant 6 : i32
    %71 = arith.index_cast %c6_i32 : i32 to index
    %c0_34 = arith.constant 0 : index
    %c0_35 = arith.constant 0 : index
    %72 = vector.load %arg2[%71, %c0_34, %c0_35] : memref<8x8x16xf32, #tpu.memory_space<vmem>>, vector<1x8x16xf32>
    %73 = vector.shape_cast %72 : vector<1x8x16xf32> to vector<8x16xf32>
    %74 = arith.truncf %73 : vector<8x16xf32> to vector<8x16xbf16>
    %cst_36 = arith.constant dense<0.000000e+00> : vector<8x512xf32>
    %75 = tpu.matmul %74, %3, %cst_36 {dimension_numbers = #tpu.dot_dimension_numbers<[1], [0], [0], [1], [0, 0, 1, 1], [], []>} : vector<8x16xbf16>, vector<16x512xbf16>, vector<8x512xf32> -> vector<8x512xf32>
    %76 = vector.broadcast %4 : vector<1x512xf32> to vector<8x512xf32>
    %77 = arith.addf %75, %76 : vector<8x512xf32>
    %78 = arith.index_cast %c6_i32 : i32 to index
    %c0_37 = arith.constant 0 : index
    %c0_38 = arith.constant 0 : index
    %79 = vector.load %arg9[%78, %c0_37, %c0_38] : memref<8x8x512xf32, #tpu.memory_space<vmem>>, vector<1x8x512xf32>
    %80 = vector.shape_cast %79 : vector<1x8x512xf32> to vector<8x512xf32>
    %81 = vector.shape_cast %77 : vector<8x512xf32> to vector<1x8x512xf32>
    tpu.vector_store %arg9[%78, %c0_37, %c0_38], %81 {strides = array<i32>} : memref<8x8x512xf32, #tpu.memory_space<vmem>>, vector<1x8x512xf32>,
    %c7_i32 = arith.constant 7 : i32
    %82 = arith.index_cast %c7_i32 : i32 to index
    %c0_39 = arith.constant 0 : index
    %c0_40 = arith.constant 0 : index
    %83 = vector.load %arg2[%82, %c0_39, %c0_40] : memref<8x8x16xf32, #tpu.memory_space<vmem>>, vector<1x8x16xf32>
    %84 = vector.shape_cast %83 : vector<1x8x16xf32> to vector<8x16xf32>
    %85 = arith.truncf %84 : vector<8x16xf32> to vector<8x16xbf16>
    %cst_41 = arith.constant dense<0.000000e+00> : vector<8x512xf32>
    %86 = tpu.matmul %85, %3, %cst_41 {dimension_numbers = #tpu.dot_dimension_numbers<[1], [0], [0], [1], [0, 0, 1, 1], [], []>} : vector<8x16xbf16>, vector<16x512xbf16>, vector<8x512xf32> -> vector<8x512xf32>
    %87 = vector.broadcast %4 : vector<1x512xf32> to vector<8x512xf32>
    %88 = arith.addf %86, %87 : vector<8x512xf32>
    %89 = arith.index_cast %c7_i32 : i32 to index
    %c0_42 = arith.constant 0 : index
    %c0_43 = arith.constant 0 : index
    %90 = vector.load %arg9[%89, %c0_42, %c0_43] : memref<8x8x512xf32, #tpu.memory_space<vmem>>, vector<1x8x512xf32>
    %91 = vector.shape_cast %90 : vector<1x8x512xf32> to vector<8x512xf32>
    %92 = vector.shape_cast %88 : vector<8x512xf32> to vector<1x8x512xf32>
    tpu.vector_store %arg9[%89, %c0_42, %c0_43], %92 {strides = array<i32>} : memref<8x8x512xf32, #tpu.memory_space<vmem>>, vector<1x8x512xf32>,
    %c8_i32 = arith.constant 8 : i32
    %c0_44 = arith.constant 0 : index
    %c0_45 = arith.constant 0 : index
    %93 = vector.load %arg6[%c0_44, %c0_45] : memref<128x512xbf16, #tpu.memory_space<vmem>>, vector<128x512xbf16>
    %c0_46 = arith.constant 0 : index
    %c0_47 = arith.constant 0 : index
    %94 = vector.load %arg10[%c0_46, %c0_47] : memref<8x128xf32, #tpu.memory_space<vmem>>, vector<8x128xf32>
    %c0_48 = arith.constant 0 : index
    %c0_49 = arith.constant 0 : index
    %95 = vector.load %arg11[%c0_48, %c0_49] : memref<8x128xf32, #tpu.memory_space<vmem>>, vector<8x128xf32>
    %c0_i32_50 = arith.constant 0 : i32
    %96 = arith.index_cast %c0_i32_50 : i32 to index
    %c0_51 = arith.constant 0 : index
    %c0_52 = arith.constant 0 : index
    %97 = vector.load %arg3[%96, %c0_51, %c0_52] : memref<8x8x1xf32, #tpu.memory_space<vmem>>, vector<1x8x1xf32>
    %98 = vector.shape_cast %97 : vector<1x8x1xf32> to vector<8x1xf32>
    %99 = arith.index_cast %c0_i32_50 : i32 to index
    %c0_53 = arith.constant 0 : index
    %c0_54 = arith.constant 0 : index
    %100 = vector.load %arg4[%99, %c0_53, %c0_54] : memref<8x8x1xf32, #tpu.memory_space<vmem>>, vector<1x8x1xf32>
    %101 = vector.shape_cast %100 : vector<1x8x1xf32> to vector<8x1xf32>
    %cst_55 = arith.constant 0.000000e+00 : f32
    %102 = vector.broadcast %cst_55 : f32 to vector<8x1xf32>
    %103 = arith.cmpf one, %101, %102 : vector<8x1xf32>
    %104 = arith.index_cast %c0_i32_50 : i32 to index
    %c0_56 = arith.constant 0 : index
    %c0_57 = arith.constant 0 : index
    %105 = vector.load %arg9[%104, %c0_56, %c0_57] : memref<8x8x512xf32, #tpu.memory_space<vmem>>, vector<1x8x512xf32>
    %106 = vector.shape_cast %105 : vector<1x8x512xf32> to vector<8x512xf32>
    %107 = vector.broadcast %98 : vector<8x1xf32> to vector<8x128xf32>
    %108 = arith.mulf %94, %107 : vector<8x128xf32>
    %109 = vector.broadcast %98 : vector<8x1xf32> to vector<8x128xf32>
    %110 = arith.mulf %95, %109 : vector<8x128xf32>
    %111 = arith.truncf %108 : vector<8x128xf32> to vector<8x128xbf16>
    %cst_58 = arith.constant dense<0.000000e+00> : vector<8x512xf32>
    %112 = tpu.matmul %111, %93, %cst_58 {dimension_numbers = #tpu.dot_dimension_numbers<[1], [0], [0], [1], [0, 0, 1, 1], [], []>} : vector<8x128xbf16>, vector<128x512xbf16>, vector<8x512xf32> -> vector<8x512xf32>
    %113 = arith.addf %106, %112 : vector<8x512xf32>
    %114 = vector.extract_strided_slice %113 {offsets = [0, 0], sizes = [8, 128], strides = [1, 1]} : vector<8x512xf32> to vector<8x128xf32>
    %115 = arith.negf %114 : vector<8x128xf32>
    %116 = math.exp %115 : vector<8x128xf32>
    %cst_59 = arith.constant 1.000000e+00 : f32
    %117 = vector.broadcast %cst_59 : f32 to vector<8x128xf32>
    %118 = arith.addf %117, %116 : vector<8x128xf32>
    %119 = arith.divf %117, %118 : vector<8x128xf32>
    %120 = vector.extract_strided_slice %113 {offsets = [0, 128], sizes = [8, 128], strides = [1, 1]} : vector<8x512xf32> to vector<8x128xf32>
    %121 = arith.negf %120 : vector<8x128xf32>
    %122 = math.exp %121 : vector<8x128xf32>
    %cst_60 = arith.constant 1.000000e+00 : f32
    %123 = vector.broadcast %cst_60 : f32 to vector<8x128xf32>
    %124 = arith.addf %123, %122 : vector<8x128xf32>
    %125 = arith.divf %123, %124 : vector<8x128xf32>
    %126 = vector.extract_strided_slice %113 {offsets = [0, 256], sizes = [8, 128], strides = [1, 1]} : vector<8x512xf32> to vector<8x128xf32>
    %127 = math.tanh %126 : vector<8x128xf32>
    %128 = vector.extract_strided_slice %113 {offsets = [0, 384], sizes = [8, 128], strides = [1, 1]} : vector<8x512xf32> to vector<8x128xf32>
    %129 = arith.negf %128 : vector<8x128xf32>
    %130 = math.exp %129 : vector<8x128xf32>
    %cst_61 = arith.constant 1.000000e+00 : f32
    %131 = vector.broadcast %cst_61 : f32 to vector<8x128xf32>
    %132 = arith.addf %131, %130 : vector<8x128xf32>
    %133 = arith.divf %131, %132 : vector<8x128xf32>
    %134 = arith.mulf %125, %110 : vector<8x128xf32>
    %135 = arith.mulf %119, %127 : vector<8x128xf32>
    %136 = arith.addf %134, %135 : vector<8x128xf32>
    %137 = math.tanh %136 : vector<8x128xf32>
    %138 = arith.mulf %133, %137 : vector<8x128xf32>
    %cst_62 = arith.constant 0.000000e+00 : f32
    %139 = vector.shape_cast %103 : vector<8x1xi1> to vector<8x1xi1>
    %140 = vector.broadcast %139 : vector<8x1xi1> to vector<8x128xi1>
    %141 = vector.broadcast %cst_62 : f32 to vector<8x128xf32>
    %142 = arith.select %140, %138, %141 : vector<8x128xi1>, vector<8x128xf32>
    %143 = arith.index_cast %c0_i32_50 : i32 to index
    %c0_63 = arith.constant 0 : index
    %c0_64 = arith.constant 0 : index
    %144 = vector.load %arg8[%143, %c0_63, %c0_64] : memref<8x8x128xf32, #tpu.memory_space<vmem>>, vector<1x8x128xf32>
    %145 = vector.shape_cast %144 : vector<1x8x128xf32> to vector<8x128xf32>
    %146 = vector.shape_cast %142 : vector<8x128xf32> to vector<1x8x128xf32>
    tpu.vector_store %arg8[%143, %c0_63, %c0_64], %146 {strides = array<i32>} : memref<8x8x128xf32, #tpu.memory_space<vmem>>, vector<1x8x128xf32>,
    %147 = vector.shape_cast %103 : vector<8x1xi1> to vector<8x1xi1>
    %148 = vector.broadcast %147 : vector<8x1xi1> to vector<8x128xi1>
    %149 = arith.select %148, %138, %94 : vector<8x128xi1>, vector<8x128xf32>
    %150 = vector.shape_cast %103 : vector<8x1xi1> to vector<8x1xi1>
    %151 = vector.broadcast %150 : vector<8x1xi1> to vector<8x128xi1>
    %152 = arith.select %151, %136, %95 : vector<8x128xi1>, vector<8x128xf32>
    %c1_i32_65 = arith.constant 1 : i32
    %153 = arith.index_cast %c1_i32_65 : i32 to index
    %c0_66 = arith.constant 0 : index
    %c0_67 = arith.constant 0 : index
    %154 = vector.load %arg3[%153, %c0_66, %c0_67] : memref<8x8x1xf32, #tpu.memory_space<vmem>>, vector<1x8x1xf32>
    %155 = vector.shape_cast %154 : vector<1x8x1xf32> to vector<8x1xf32>
    %156 = arith.index_cast %c1_i32_65 : i32 to index
    %c0_68 = arith.constant 0 : index
    %c0_69 = arith.constant 0 : index
    %157 = vector.load %arg4[%156, %c0_68, %c0_69] : memref<8x8x1xf32, #tpu.memory_space<vmem>>, vector<1x8x1xf32>
    %158 = vector.shape_cast %157 : vector<1x8x1xf32> to vector<8x1xf32>
    %cst_70 = arith.constant 0.000000e+00 : f32
    %159 = vector.broadcast %cst_70 : f32 to vector<8x1xf32>
    %160 = arith.cmpf one, %158, %159 : vector<8x1xf32>
    %161 = arith.index_cast %c1_i32_65 : i32 to index
    %c0_71 = arith.constant 0 : index
    %c0_72 = arith.constant 0 : index
    %162 = vector.load %arg9[%161, %c0_71, %c0_72] : memref<8x8x512xf32, #tpu.memory_space<vmem>>, vector<1x8x512xf32>
    %163 = vector.shape_cast %162 : vector<1x8x512xf32> to vector<8x512xf32>
    %164 = vector.broadcast %155 : vector<8x1xf32> to vector<8x128xf32>
    %165 = arith.mulf %149, %164 : vector<8x128xf32>
    %166 = vector.broadcast %155 : vector<8x1xf32> to vector<8x128xf32>
    %167 = arith.mulf %152, %166 : vector<8x128xf32>
    %168 = arith.truncf %165 : vector<8x128xf32> to vector<8x128xbf16>
    %cst_73 = arith.constant dense<0.000000e+00> : vector<8x512xf32>
    %169 = tpu.matmul %168, %93, %cst_73 {dimension_numbers = #tpu.dot_dimension_numbers<[1], [0], [0], [1], [0, 0, 1, 1], [], []>} : vector<8x128xbf16>, vector<128x512xbf16>, vector<8x512xf32> -> vector<8x512xf32>
    %170 = arith.addf %163, %169 : vector<8x512xf32>
    %171 = vector.extract_strided_slice %170 {offsets = [0, 0], sizes = [8, 128], strides = [1, 1]} : vector<8x512xf32> to vector<8x128xf32>
    %172 = arith.negf %171 : vector<8x128xf32>
    %173 = math.exp %172 : vector<8x128xf32>
    %cst_74 = arith.constant 1.000000e+00 : f32
    %174 = vector.broadcast %cst_74 : f32 to vector<8x128xf32>
    %175 = arith.addf %174, %173 : vector<8x128xf32>
    %176 = arith.divf %174, %175 : vector<8x128xf32>
    %177 = vector.extract_strided_slice %170 {offsets = [0, 128], sizes = [8, 128], strides = [1, 1]} : vector<8x512xf32> to vector<8x128xf32>
    %178 = arith.negf %177 : vector<8x128xf32>
    %179 = math.exp %178 : vector<8x128xf32>
    %cst_75 = arith.constant 1.000000e+00 : f32
    %180 = vector.broadcast %cst_75 : f32 to vector<8x128xf32>
    %181 = arith.addf %180, %179 : vector<8x128xf32>
    %182 = arith.divf %180, %181 : vector<8x128xf32>
    %183 = vector.extract_strided_slice %170 {offsets = [0, 256], sizes = [8, 128], strides = [1, 1]} : vector<8x512xf32> to vector<8x128xf32>
    %184 = math.tanh %183 : vector<8x128xf32>
    %185 = vector.extract_strided_slice %170 {offsets = [0, 384], sizes = [8, 128], strides = [1, 1]} : vector<8x512xf32> to vector<8x128xf32>
    %186 = arith.negf %185 : vector<8x128xf32>
    %187 = math.exp %186 : vector<8x128xf32>
    %cst_76 = arith.constant 1.000000e+00 : f32
    %188 = vector.broadcast %cst_76 : f32 to vector<8x128xf32>
    %189 = arith.addf %188, %187 : vector<8x128xf32>
    %190 = arith.divf %188, %189 : vector<8x128xf32>
    %191 = arith.mulf %182, %167 : vector<8x128xf32>
    %192 = arith.mulf %176, %184 : vector<8x128xf32>
    %193 = arith.addf %191, %192 : vector<8x128xf32>
    %194 = math.tanh %193 : vector<8x128xf32>
    %195 = arith.mulf %190, %194 : vector<8x128xf32>
    %cst_77 = arith.constant 0.000000e+00 : f32
    %196 = vector.shape_cast %160 : vector<8x1xi1> to vector<8x1xi1>
    %197 = vector.broadcast %196 : vector<8x1xi1> to vector<8x128xi1>
    %198 = vector.broadcast %cst_77 : f32 to vector<8x128xf32>
    %199 = arith.select %197, %195, %198 : vector<8x128xi1>, vector<8x128xf32>
    %200 = arith.index_cast %c1_i32_65 : i32 to index
    %c0_78 = arith.constant 0 : index
    %c0_79 = arith.constant 0 : index
    %201 = vector.load %arg8[%200, %c0_78, %c0_79] : memref<8x8x128xf32, #tpu.memory_space<vmem>>, vector<1x8x128xf32>
    %202 = vector.shape_cast %201 : vector<1x8x128xf32> to vector<8x128xf32>
    %203 = vector.shape_cast %199 : vector<8x128xf32> to vector<1x8x128xf32>
    tpu.vector_store %arg8[%200, %c0_78, %c0_79], %203 {strides = array<i32>} : memref<8x8x128xf32, #tpu.memory_space<vmem>>, vector<1x8x128xf32>,
    %204 = vector.shape_cast %160 : vector<8x1xi1> to vector<8x1xi1>
    %205 = vector.broadcast %204 : vector<8x1xi1> to vector<8x128xi1>
    %206 = arith.select %205, %195, %149 : vector<8x128xi1>, vector<8x128xf32>
    %207 = vector.shape_cast %160 : vector<8x1xi1> to vector<8x1xi1>
    %208 = vector.broadcast %207 : vector<8x1xi1> to vector<8x128xi1>
    %209 = arith.select %208, %193, %152 : vector<8x128xi1>, vector<8x128xf32>
    %c2_i32_80 = arith.constant 2 : i32
    %210 = arith.index_cast %c2_i32_80 : i32 to index
    %c0_81 = arith.constant 0 : index
    %c0_82 = arith.constant 0 : index
    %211 = vector.load %arg3[%210, %c0_81, %c0_82] : memref<8x8x1xf32, #tpu.memory_space<vmem>>, vector<1x8x1xf32>
    %212 = vector.shape_cast %211 : vector<1x8x1xf32> to vector<8x1xf32>
    %213 = arith.index_cast %c2_i32_80 : i32 to index
    %c0_83 = arith.constant 0 : index
    %c0_84 = arith.constant 0 : index
    %214 = vector.load %arg4[%213, %c0_83, %c0_84] : memref<8x8x1xf32, #tpu.memory_space<vmem>>, vector<1x8x1xf32>
    %215 = vector.shape_cast %214 : vector<1x8x1xf32> to vector<8x1xf32>
    %cst_85 = arith.constant 0.000000e+00 : f32
    %216 = vector.broadcast %cst_85 : f32 to vector<8x1xf32>
    %217 = arith.cmpf one, %215, %216 : vector<8x1xf32>
    %218 = arith.index_cast %c2_i32_80 : i32 to index
    %c0_86 = arith.constant 0 : index
    %c0_87 = arith.constant 0 : index
    %219 = vector.load %arg9[%218, %c0_86, %c0_87] : memref<8x8x512xf32, #tpu.memory_space<vmem>>, vector<1x8x512xf32>
    %220 = vector.shape_cast %219 : vector<1x8x512xf32> to vector<8x512xf32>
    %221 = vector.broadcast %212 : vector<8x1xf32> to vector<8x128xf32>
    %222 = arith.mulf %206, %221 : vector<8x128xf32>
    %223 = vector.broadcast %212 : vector<8x1xf32> to vector<8x128xf32>
    %224 = arith.mulf %209, %223 : vector<8x128xf32>
    %225 = arith.truncf %222 : vector<8x128xf32> to vector<8x128xbf16>
    %cst_88 = arith.constant dense<0.000000e+00> : vector<8x512xf32>
    %226 = tpu.matmul %225, %93, %cst_88 {dimension_numbers = #tpu.dot_dimension_numbers<[1], [0], [0], [1], [0, 0, 1, 1], [], []>} : vector<8x128xbf16>, vector<128x512xbf16>, vector<8x512xf32> -> vector<8x512xf32>
    %227 = arith.addf %220, %226 : vector<8x512xf32>
    %228 = vector.extract_strided_slice %227 {offsets = [0, 0], sizes = [8, 128], strides = [1, 1]} : vector<8x512xf32> to vector<8x128xf32>
    %229 = arith.negf %228 : vector<8x128xf32>
    %230 = math.exp %229 : vector<8x128xf32>
    %cst_89 = arith.constant 1.000000e+00 : f32
    %231 = vector.broadcast %cst_89 : f32 to vector<8x128xf32>
    %232 = arith.addf %231, %230 : vector<8x128xf32>
    %233 = arith.divf %231, %232 : vector<8x128xf32>
    %234 = vector.extract_strided_slice %227 {offsets = [0, 128], sizes = [8, 128], strides = [1, 1]} : vector<8x512xf32> to vector<8x128xf32>
    %235 = arith.negf %234 : vector<8x128xf32>
    %236 = math.exp %235 : vector<8x128xf32>
    %cst_90 = arith.constant 1.000000e+00 : f32
    %237 = vector.broadcast %cst_90 : f32 to vector<8x128xf32>
    %238 = arith.addf %237, %236 : vector<8x128xf32>
    %239 = arith.divf %237, %238 : vector<8x128xf32>
    %240 = vector.extract_strided_slice %227 {offsets = [0, 256], sizes = [8, 128], strides = [1, 1]} : vector<8x512xf32> to vector<8x128xf32>
    %241 = math.tanh %240 : vector<8x128xf32>
    %242 = vector.extract_strided_slice %227 {offsets = [0, 384], sizes = [8, 128], strides = [1, 1]} : vector<8x512xf32> to vector<8x128xf32>
    %243 = arith.negf %242 : vector<8x128xf32>
    %244 = math.exp %243 : vector<8x128xf32>
    %cst_91 = arith.constant 1.000000e+00 : f32
    %245 = vector.broadcast %cst_91 : f32 to vector<8x128xf32>
    %246 = arith.addf %245, %244 : vector<8x128xf32>
    %247 = arith.divf %245, %246 : vector<8x128xf32>
    %248 = arith.mulf %239, %224 : vector<8x128xf32>
    %249 = arith.mulf %233, %241 : vector<8x128xf32>
    %250 = arith.addf %248, %249 : vector<8x128xf32>
    %251 = math.tanh %250 : vector<8x128xf32>
    %252 = arith.mulf %247, %251 : vector<8x128xf32>
    %cst_92 = arith.constant 0.000000e+00 : f32
    %253 = vector.shape_cast %217 : vector<8x1xi1> to vector<8x1xi1>
    %254 = vector.broadcast %253 : vector<8x1xi1> to vector<8x128xi1>
    %255 = vector.broadcast %cst_92 : f32 to vector<8x128xf32>
    %256 = arith.select %254, %252, %255 : vector<8x128xi1>, vector<8x128xf32>
    %257 = arith.index_cast %c2_i32_80 : i32 to index
    %c0_93 = arith.constant 0 : index
    %c0_94 = arith.constant 0 : index
    %258 = vector.load %arg8[%257, %c0_93, %c0_94] : memref<8x8x128xf32, #tpu.memory_space<vmem>>, vector<1x8x128xf32>
    %259 = vector.shape_cast %258 : vector<1x8x128xf32> to vector<8x128xf32>
    %260 = vector.shape_cast %256 : vector<8x128xf32> to vector<1x8x128xf32>
    tpu.vector_store %arg8[%257, %c0_93, %c0_94], %260 {strides = array<i32>} : memref<8x8x128xf32, #tpu.memory_space<vmem>>, vector<1x8x128xf32>,
    %261 = vector.shape_cast %217 : vector<8x1xi1> to vector<8x1xi1>
    %262 = vector.broadcast %261 : vector<8x1xi1> to vector<8x128xi1>
    %263 = arith.select %262, %252, %206 : vector<8x128xi1>, vector<8x128xf32>
    %264 = vector.shape_cast %217 : vector<8x1xi1> to vector<8x1xi1>
    %265 = vector.broadcast %264 : vector<8x1xi1> to vector<8x128xi1>
    %266 = arith.select %265, %250, %209 : vector<8x128xi1>, vector<8x128xf32>
    %c3_i32_95 = arith.constant 3 : i32
    %267 = arith.index_cast %c3_i32_95 : i32 to index
    %c0_96 = arith.constant 0 : index
    %c0_97 = arith.constant 0 : index
    %268 = vector.load %arg3[%267, %c0_96, %c0_97] : memref<8x8x1xf32, #tpu.memory_space<vmem>>, vector<1x8x1xf32>
    %269 = vector.shape_cast %268 : vector<1x8x1xf32> to vector<8x1xf32>
    %270 = arith.index_cast %c3_i32_95 : i32 to index
    %c0_98 = arith.constant 0 : index
    %c0_99 = arith.constant 0 : index
    %271 = vector.load %arg4[%270, %c0_98, %c0_99] : memref<8x8x1xf32, #tpu.memory_space<vmem>>, vector<1x8x1xf32>
    %272 = vector.shape_cast %271 : vector<1x8x1xf32> to vector<8x1xf32>
    %cst_100 = arith.constant 0.000000e+00 : f32
    %273 = vector.broadcast %cst_100 : f32 to vector<8x1xf32>
    %274 = arith.cmpf one, %272, %273 : vector<8x1xf32>
    %275 = arith.index_cast %c3_i32_95 : i32 to index
    %c0_101 = arith.constant 0 : index
    %c0_102 = arith.constant 0 : index
    %276 = vector.load %arg9[%275, %c0_101, %c0_102] : memref<8x8x512xf32, #tpu.memory_space<vmem>>, vector<1x8x512xf32>
    %277 = vector.shape_cast %276 : vector<1x8x512xf32> to vector<8x512xf32>
    %278 = vector.broadcast %269 : vector<8x1xf32> to vector<8x128xf32>
    %279 = arith.mulf %263, %278 : vector<8x128xf32>
    %280 = vector.broadcast %269 : vector<8x1xf32> to vector<8x128xf32>
    %281 = arith.mulf %266, %280 : vector<8x128xf32>
    %282 = arith.truncf %279 : vector<8x128xf32> to vector<8x128xbf16>
    %cst_103 = arith.constant dense<0.000000e+00> : vector<8x512xf32>
    %283 = tpu.matmul %282, %93, %cst_103 {dimension_numbers = #tpu.dot_dimension_numbers<[1], [0], [0], [1], [0, 0, 1, 1], [], []>} : vector<8x128xbf16>, vector<128x512xbf16>, vector<8x512xf32> -> vector<8x512xf32>
    %284 = arith.addf %277, %283 : vector<8x512xf32>
    %285 = vector.extract_strided_slice %284 {offsets = [0, 0], sizes = [8, 128], strides = [1, 1]} : vector<8x512xf32> to vector<8x128xf32>
    %286 = arith.negf %285 : vector<8x128xf32>
    %287 = math.exp %286 : vector<8x128xf32>
    %cst_104 = arith.constant 1.000000e+00 : f32
    %288 = vector.broadcast %cst_104 : f32 to vector<8x128xf32>
    %289 = arith.addf %288, %287 : vector<8x128xf32>
    %290 = arith.divf %288, %289 : vector<8x128xf32>
    %291 = vector.extract_strided_slice %284 {offsets = [0, 128], sizes = [8, 128], strides = [1, 1]} : vector<8x512xf32> to vector<8x128xf32>
    %292 = arith.negf %291 : vector<8x128xf32>
    %293 = math.exp %292 : vector<8x128xf32>
    %cst_105 = arith.constant 1.000000e+00 : f32
    %294 = vector.broadcast %cst_105 : f32 to vector<8x128xf32>
    %295 = arith.addf %294, %293 : vector<8x128xf32>
    %296 = arith.divf %294, %295 : vector<8x128xf32>
    %297 = vector.extract_strided_slice %284 {offsets = [0, 256], sizes = [8, 128], strides = [1, 1]} : vector<8x512xf32> to vector<8x128xf32>
    %298 = math.tanh %297 : vector<8x128xf32>
    %299 = vector.extract_strided_slice %284 {offsets = [0, 384], sizes = [8, 128], strides = [1, 1]} : vector<8x512xf32> to vector<8x128xf32>
    %300 = arith.negf %299 : vector<8x128xf32>
    %301 = math.exp %300 : vector<8x128xf32>
    %cst_106 = arith.constant 1.000000e+00 : f32
    %302 = vector.broadcast %cst_106 : f32 to vector<8x128xf32>
    %303 = arith.addf %302, %301 : vector<8x128xf32>
    %304 = arith.divf %302, %303 : vector<8x128xf32>
    %305 = arith.mulf %296, %281 : vector<8x128xf32>
    %306 = arith.mulf %290, %298 : vector<8x128xf32>
    %307 = arith.addf %305, %306 : vector<8x128xf32>
    %308 = math.tanh %307 : vector<8x128xf32>
    %309 = arith.mulf %304, %308 : vector<8x128xf32>
    %cst_107 = arith.constant 0.000000e+00 : f32
    %310 = vector.shape_cast %274 : vector<8x1xi1> to vector<8x1xi1>
    %311 = vector.broadcast %310 : vector<8x1xi1> to vector<8x128xi1>
    %312 = vector.broadcast %cst_107 : f32 to vector<8x128xf32>
    %313 = arith.select %311, %309, %312 : vector<8x128xi1>, vector<8x128xf32>
    %314 = arith.index_cast %c3_i32_95 : i32 to index
    %c0_108 = arith.constant 0 : index
    %c0_109 = arith.constant 0 : index
    %315 = vector.load %arg8[%314, %c0_108, %c0_109] : memref<8x8x128xf32, #tpu.memory_space<vmem>>, vector<1x8x128xf32>
    %316 = vector.shape_cast %315 : vector<1x8x128xf32> to vector<8x128xf32>
    %317 = vector.shape_cast %313 : vector<8x128xf32> to vector<1x8x128xf32>
    tpu.vector_store %arg8[%314, %c0_108, %c0_109], %317 {strides = array<i32>} : memref<8x8x128xf32, #tpu.memory_space<vmem>>, vector<1x8x128xf32>,
    %318 = vector.shape_cast %274 : vector<8x1xi1> to vector<8x1xi1>
    %319 = vector.broadcast %318 : vector<8x1xi1> to vector<8x128xi1>
    %320 = arith.select %319, %309, %263 : vector<8x128xi1>, vector<8x128xf32>
    %321 = vector.shape_cast %274 : vector<8x1xi1> to vector<8x1xi1>
    %322 = vector.broadcast %321 : vector<8x1xi1> to vector<8x128xi1>
    %323 = arith.select %322, %307, %266 : vector<8x128xi1>, vector<8x128xf32>
    %c4_i32_110 = arith.constant 4 : i32
    %324 = arith.index_cast %c4_i32_110 : i32 to index
    %c0_111 = arith.constant 0 : index
    %c0_112 = arith.constant 0 : index
    %325 = vector.load %arg3[%324, %c0_111, %c0_112] : memref<8x8x1xf32, #tpu.memory_space<vmem>>, vector<1x8x1xf32>
    %326 = vector.shape_cast %325 : vector<1x8x1xf32> to vector<8x1xf32>
    %327 = arith.index_cast %c4_i32_110 : i32 to index
    %c0_113 = arith.constant 0 : index
    %c0_114 = arith.constant 0 : index
    %328 = vector.load %arg4[%327, %c0_113, %c0_114] : memref<8x8x1xf32, #tpu.memory_space<vmem>>, vector<1x8x1xf32>
    %329 = vector.shape_cast %328 : vector<1x8x1xf32> to vector<8x1xf32>
    %cst_115 = arith.constant 0.000000e+00 : f32
    %330 = vector.broadcast %cst_115 : f32 to vector<8x1xf32>
    %331 = arith.cmpf one, %329, %330 : vector<8x1xf32>
    %332 = arith.index_cast %c4_i32_110 : i32 to index
    %c0_116 = arith.constant 0 : index
    %c0_117 = arith.constant 0 : index
    %333 = vector.load %arg9[%332, %c0_116, %c0_117] : memref<8x8x512xf32, #tpu.memory_space<vmem>>, vector<1x8x512xf32>
    %334 = vector.shape_cast %333 : vector<1x8x512xf32> to vector<8x512xf32>
    %335 = vector.broadcast %326 : vector<8x1xf32> to vector<8x128xf32>
    %336 = arith.mulf %320, %335 : vector<8x128xf32>
    %337 = vector.broadcast %326 : vector<8x1xf32> to vector<8x128xf32>
    %338 = arith.mulf %323, %337 : vector<8x128xf32>
    %339 = arith.truncf %336 : vector<8x128xf32> to vector<8x128xbf16>
    %cst_118 = arith.constant dense<0.000000e+00> : vector<8x512xf32>
    %340 = tpu.matmul %339, %93, %cst_118 {dimension_numbers = #tpu.dot_dimension_numbers<[1], [0], [0], [1], [0, 0, 1, 1], [], []>} : vector<8x128xbf16>, vector<128x512xbf16>, vector<8x512xf32> -> vector<8x512xf32>
    %341 = arith.addf %334, %340 : vector<8x512xf32>
    %342 = vector.extract_strided_slice %341 {offsets = [0, 0], sizes = [8, 128], strides = [1, 1]} : vector<8x512xf32> to vector<8x128xf32>
    %343 = arith.negf %342 : vector<8x128xf32>
    %344 = math.exp %343 : vector<8x128xf32>
    %cst_119 = arith.constant 1.000000e+00 : f32
    %345 = vector.broadcast %cst_119 : f32 to vector<8x128xf32>
    %346 = arith.addf %345, %344 : vector<8x128xf32>
    %347 = arith.divf %345, %346 : vector<8x128xf32>
    %348 = vector.extract_strided_slice %341 {offsets = [0, 128], sizes = [8, 128], strides = [1, 1]} : vector<8x512xf32> to vector<8x128xf32>
    %349 = arith.negf %348 : vector<8x128xf32>
    %350 = math.exp %349 : vector<8x128xf32>
    %cst_120 = arith.constant 1.000000e+00 : f32
    %351 = vector.broadcast %cst_120 : f32 to vector<8x128xf32>
    %352 = arith.addf %351, %350 : vector<8x128xf32>
    %353 = arith.divf %351, %352 : vector<8x128xf32>
    %354 = vector.extract_strided_slice %341 {offsets = [0, 256], sizes = [8, 128], strides = [1, 1]} : vector<8x512xf32> to vector<8x128xf32>
    %355 = math.tanh %354 : vector<8x128xf32>
    %356 = vector.extract_strided_slice %341 {offsets = [0, 384], sizes = [8, 128], strides = [1, 1]} : vector<8x512xf32> to vector<8x128xf32>
    %357 = arith.negf %356 : vector<8x128xf32>
    %358 = math.exp %357 : vector<8x128xf32>
    %cst_121 = arith.constant 1.000000e+00 : f32
    %359 = vector.broadcast %cst_121 : f32 to vector<8x128xf32>
    %360 = arith.addf %359, %358 : vector<8x128xf32>
    %361 = arith.divf %359, %360 : vector<8x128xf32>
    %362 = arith.mulf %353, %338 : vector<8x128xf32>
    %363 = arith.mulf %347, %355 : vector<8x128xf32>
    %364 = arith.addf %362, %363 : vector<8x128xf32>
    %365 = math.tanh %364 : vector<8x128xf32>
    %366 = arith.mulf %361, %365 : vector<8x128xf32>
    %cst_122 = arith.constant 0.000000e+00 : f32
    %367 = vector.shape_cast %331 : vector<8x1xi1> to vector<8x1xi1>
    %368 = vector.broadcast %367 : vector<8x1xi1> to vector<8x128xi1>
    %369 = vector.broadcast %cst_122 : f32 to vector<8x128xf32>
    %370 = arith.select %368, %366, %369 : vector<8x128xi1>, vector<8x128xf32>
    %371 = arith.index_cast %c4_i32_110 : i32 to index
    %c0_123 = arith.constant 0 : index
    %c0_124 = arith.constant 0 : index
    %372 = vector.load %arg8[%371, %c0_123, %c0_124] : memref<8x8x128xf32, #tpu.memory_space<vmem>>, vector<1x8x128xf32>
    %373 = vector.shape_cast %372 : vector<1x8x128xf32> to vector<8x128xf32>
    %374 = vector.shape_cast %370 : vector<8x128xf32> to vector<1x8x128xf32>
    tpu.vector_store %arg8[%371, %c0_123, %c0_124], %374 {strides = array<i32>} : memref<8x8x128xf32, #tpu.memory_space<vmem>>, vector<1x8x128xf32>,
    %375 = vector.shape_cast %331 : vector<8x1xi1> to vector<8x1xi1>
    %376 = vector.broadcast %375 : vector<8x1xi1> to vector<8x128xi1>
    %377 = arith.select %376, %366, %320 : vector<8x128xi1>, vector<8x128xf32>
    %378 = vector.shape_cast %331 : vector<8x1xi1> to vector<8x1xi1>
    %379 = vector.broadcast %378 : vector<8x1xi1> to vector<8x128xi1>
    %380 = arith.select %379, %364, %323 : vector<8x128xi1>, vector<8x128xf32>
    %c5_i32_125 = arith.constant 5 : i32
    %381 = arith.index_cast %c5_i32_125 : i32 to index
    %c0_126 = arith.constant 0 : index
    %c0_127 = arith.constant 0 : index
    %382 = vector.load %arg3[%381, %c0_126, %c0_127] : memref<8x8x1xf32, #tpu.memory_space<vmem>>, vector<1x8x1xf32>
    %383 = vector.shape_cast %382 : vector<1x8x1xf32> to vector<8x1xf32>
    %384 = arith.index_cast %c5_i32_125 : i32 to index
    %c0_128 = arith.constant 0 : index
    %c0_129 = arith.constant 0 : index
    %385 = vector.load %arg4[%384, %c0_128, %c0_129] : memref<8x8x1xf32, #tpu.memory_space<vmem>>, vector<1x8x1xf32>
    %386 = vector.shape_cast %385 : vector<1x8x1xf32> to vector<8x1xf32>
    %cst_130 = arith.constant 0.000000e+00 : f32
    %387 = vector.broadcast %cst_130 : f32 to vector<8x1xf32>
    %388 = arith.cmpf one, %386, %387 : vector<8x1xf32>
    %389 = arith.index_cast %c5_i32_125 : i32 to index
    %c0_131 = arith.constant 0 : index
    %c0_132 = arith.constant 0 : index
    %390 = vector.load %arg9[%389, %c0_131, %c0_132] : memref<8x8x512xf32, #tpu.memory_space<vmem>>, vector<1x8x512xf32>
    %391 = vector.shape_cast %390 : vector<1x8x512xf32> to vector<8x512xf32>
    %392 = vector.broadcast %383 : vector<8x1xf32> to vector<8x128xf32>
    %393 = arith.mulf %377, %392 : vector<8x128xf32>
    %394 = vector.broadcast %383 : vector<8x1xf32> to vector<8x128xf32>
    %395 = arith.mulf %380, %394 : vector<8x128xf32>
    %396 = arith.truncf %393 : vector<8x128xf32> to vector<8x128xbf16>
    %cst_133 = arith.constant dense<0.000000e+00> : vector<8x512xf32>
    %397 = tpu.matmul %396, %93, %cst_133 {dimension_numbers = #tpu.dot_dimension_numbers<[1], [0], [0], [1], [0, 0, 1, 1], [], []>} : vector<8x128xbf16>, vector<128x512xbf16>, vector<8x512xf32> -> vector<8x512xf32>
    %398 = arith.addf %391, %397 : vector<8x512xf32>
    %399 = vector.extract_strided_slice %398 {offsets = [0, 0], sizes = [8, 128], strides = [1, 1]} : vector<8x512xf32> to vector<8x128xf32>
    %400 = arith.negf %399 : vector<8x128xf32>
    %401 = math.exp %400 : vector<8x128xf32>
    %cst_134 = arith.constant 1.000000e+00 : f32
    %402 = vector.broadcast %cst_134 : f32 to vector<8x128xf32>
    %403 = arith.addf %402, %401 : vector<8x128xf32>
    %404 = arith.divf %402, %403 : vector<8x128xf32>
    %405 = vector.extract_strided_slice %398 {offsets = [0, 128], sizes = [8, 128], strides = [1, 1]} : vector<8x512xf32> to vector<8x128xf32>
    %406 = arith.negf %405 : vector<8x128xf32>
    %407 = math.exp %406 : vector<8x128xf32>
    %cst_135 = arith.constant 1.000000e+00 : f32
    %408 = vector.broadcast %cst_135 : f32 to vector<8x128xf32>
    %409 = arith.addf %408, %407 : vector<8x128xf32>
    %410 = arith.divf %408, %409 : vector<8x128xf32>
    %411 = vector.extract_strided_slice %398 {offsets = [0, 256], sizes = [8, 128], strides = [1, 1]} : vector<8x512xf32> to vector<8x128xf32>
    %412 = math.tanh %411 : vector<8x128xf32>
    %413 = vector.extract_strided_slice %398 {offsets = [0, 384], sizes = [8, 128], strides = [1, 1]} : vector<8x512xf32> to vector<8x128xf32>
    %414 = arith.negf %413 : vector<8x128xf32>
    %415 = math.exp %414 : vector<8x128xf32>
    %cst_136 = arith.constant 1.000000e+00 : f32
    %416 = vector.broadcast %cst_136 : f32 to vector<8x128xf32>
    %417 = arith.addf %416, %415 : vector<8x128xf32>
    %418 = arith.divf %416, %417 : vector<8x128xf32>
    %419 = arith.mulf %410, %395 : vector<8x128xf32>
    %420 = arith.mulf %404, %412 : vector<8x128xf32>
    %421 = arith.addf %419, %420 : vector<8x128xf32>
    %422 = math.tanh %421 : vector<8x128xf32>
    %423 = arith.mulf %418, %422 : vector<8x128xf32>
    %cst_137 = arith.constant 0.000000e+00 : f32
    %424 = vector.shape_cast %388 : vector<8x1xi1> to vector<8x1xi1>
    %425 = vector.broadcast %424 : vector<8x1xi1> to vector<8x128xi1>
    %426 = vector.broadcast %cst_137 : f32 to vector<8x128xf32>
    %427 = arith.select %425, %423, %426 : vector<8x128xi1>, vector<8x128xf32>
    %428 = arith.index_cast %c5_i32_125 : i32 to index
    %c0_138 = arith.constant 0 : index
    %c0_139 = arith.constant 0 : index
    %429 = vector.load %arg8[%428, %c0_138, %c0_139] : memref<8x8x128xf32, #tpu.memory_space<vmem>>, vector<1x8x128xf32>
    %430 = vector.shape_cast %429 : vector<1x8x128xf32> to vector<8x128xf32>
    %431 = vector.shape_cast %427 : vector<8x128xf32> to vector<1x8x128xf32>
    tpu.vector_store %arg8[%428, %c0_138, %c0_139], %431 {strides = array<i32>} : memref<8x8x128xf32, #tpu.memory_space<vmem>>, vector<1x8x128xf32>,
    %432 = vector.shape_cast %388 : vector<8x1xi1> to vector<8x1xi1>
    %433 = vector.broadcast %432 : vector<8x1xi1> to vector<8x128xi1>
    %434 = arith.select %433, %423, %377 : vector<8x128xi1>, vector<8x128xf32>
    %435 = vector.shape_cast %388 : vector<8x1xi1> to vector<8x1xi1>
    %436 = vector.broadcast %435 : vector<8x1xi1> to vector<8x128xi1>
    %437 = arith.select %436, %421, %380 : vector<8x128xi1>, vector<8x128xf32>
    %c6_i32_140 = arith.constant 6 : i32
    %438 = arith.index_cast %c6_i32_140 : i32 to index
    %c0_141 = arith.constant 0 : index
    %c0_142 = arith.constant 0 : index
    %439 = vector.load %arg3[%438, %c0_141, %c0_142] : memref<8x8x1xf32, #tpu.memory_space<vmem>>, vector<1x8x1xf32>
    %440 = vector.shape_cast %439 : vector<1x8x1xf32> to vector<8x1xf32>
    %441 = arith.index_cast %c6_i32_140 : i32 to index
    %c0_143 = arith.constant 0 : index
    %c0_144 = arith.constant 0 : index
    %442 = vector.load %arg4[%441, %c0_143, %c0_144] : memref<8x8x1xf32, #tpu.memory_space<vmem>>, vector<1x8x1xf32>
    %443 = vector.shape_cast %442 : vector<1x8x1xf32> to vector<8x1xf32>
    %cst_145 = arith.constant 0.000000e+00 : f32
    %444 = vector.broadcast %cst_145 : f32 to vector<8x1xf32>
    %445 = arith.cmpf one, %443, %444 : vector<8x1xf32>
    %446 = arith.index_cast %c6_i32_140 : i32 to index
    %c0_146 = arith.constant 0 : index
    %c0_147 = arith.constant 0 : index
    %447 = vector.load %arg9[%446, %c0_146, %c0_147] : memref<8x8x512xf32, #tpu.memory_space<vmem>>, vector<1x8x512xf32>
    %448 = vector.shape_cast %447 : vector<1x8x512xf32> to vector<8x512xf32>
    %449 = vector.broadcast %440 : vector<8x1xf32> to vector<8x128xf32>
    %450 = arith.mulf %434, %449 : vector<8x128xf32>
    %451 = vector.broadcast %440 : vector<8x1xf32> to vector<8x128xf32>
    %452 = arith.mulf %437, %451 : vector<8x128xf32>
    %453 = arith.truncf %450 : vector<8x128xf32> to vector<8x128xbf16>
    %cst_148 = arith.constant dense<0.000000e+00> : vector<8x512xf32>
    %454 = tpu.matmul %453, %93, %cst_148 {dimension_numbers = #tpu.dot_dimension_numbers<[1], [0], [0], [1], [0, 0, 1, 1], [], []>} : vector<8x128xbf16>, vector<128x512xbf16>, vector<8x512xf32> -> vector<8x512xf32>
    %455 = arith.addf %448, %454 : vector<8x512xf32>
    %456 = vector.extract_strided_slice %455 {offsets = [0, 0], sizes = [8, 128], strides = [1, 1]} : vector<8x512xf32> to vector<8x128xf32>
    %457 = arith.negf %456 : vector<8x128xf32>
    %458 = math.exp %457 : vector<8x128xf32>
    %cst_149 = arith.constant 1.000000e+00 : f32
    %459 = vector.broadcast %cst_149 : f32 to vector<8x128xf32>
    %460 = arith.addf %459, %458 : vector<8x128xf32>
    %461 = arith.divf %459, %460 : vector<8x128xf32>
    %462 = vector.extract_strided_slice %455 {offsets = [0, 128], sizes = [8, 128], strides = [1, 1]} : vector<8x512xf32> to vector<8x128xf32>
    %463 = arith.negf %462 : vector<8x128xf32>
    %464 = math.exp %463 : vector<8x128xf32>
    %cst_150 = arith.constant 1.000000e+00 : f32
    %465 = vector.broadcast %cst_150 : f32 to vector<8x128xf32>
    %466 = arith.addf %465, %464 : vector<8x128xf32>
    %467 = arith.divf %465, %466 : vector<8x128xf32>
    %468 = vector.extract_strided_slice %455 {offsets = [0, 256], sizes = [8, 128], strides = [1, 1]} : vector<8x512xf32> to vector<8x128xf32>
    %469 = math.tanh %468 : vector<8x128xf32>
    %470 = vector.extract_strided_slice %455 {offsets = [0, 384], sizes = [8, 128], strides = [1, 1]} : vector<8x512xf32> to vector<8x128xf32>
    %471 = arith.negf %470 : vector<8x128xf32>
    %472 = math.exp %471 : vector<8x128xf32>
    %cst_151 = arith.constant 1.000000e+00 : f32
    %473 = vector.broadcast %cst_151 : f32 to vector<8x128xf32>
    %474 = arith.addf %473, %472 : vector<8x128xf32>
    %475 = arith.divf %473, %474 : vector<8x128xf32>
    %476 = arith.mulf %467, %452 : vector<8x128xf32>
    %477 = arith.mulf %461, %469 : vector<8x128xf32>
    %478 = arith.addf %476, %477 : vector<8x128xf32>
    %479 = math.tanh %478 : vector<8x128xf32>
    %480 = arith.mulf %475, %479 : vector<8x128xf32>
    %cst_152 = arith.constant 0.000000e+00 : f32
    %481 = vector.shape_cast %445 : vector<8x1xi1> to vector<8x1xi1>
    %482 = vector.broadcast %481 : vector<8x1xi1> to vector<8x128xi1>
    %483 = vector.broadcast %cst_152 : f32 to vector<8x128xf32>
    %484 = arith.select %482, %480, %483 : vector<8x128xi1>, vector<8x128xf32>
    %485 = arith.index_cast %c6_i32_140 : i32 to index
    %c0_153 = arith.constant 0 : index
    %c0_154 = arith.constant 0 : index
    %486 = vector.load %arg8[%485, %c0_153, %c0_154] : memref<8x8x128xf32, #tpu.memory_space<vmem>>, vector<1x8x128xf32>
    %487 = vector.shape_cast %486 : vector<1x8x128xf32> to vector<8x128xf32>
    %488 = vector.shape_cast %484 : vector<8x128xf32> to vector<1x8x128xf32>
    tpu.vector_store %arg8[%485, %c0_153, %c0_154], %488 {strides = array<i32>} : memref<8x8x128xf32, #tpu.memory_space<vmem>>, vector<1x8x128xf32>,
    %489 = vector.shape_cast %445 : vector<8x1xi1> to vector<8x1xi1>
    %490 = vector.broadcast %489 : vector<8x1xi1> to vector<8x128xi1>
    %491 = arith.select %490, %480, %434 : vector<8x128xi1>, vector<8x128xf32>
    %492 = vector.shape_cast %445 : vector<8x1xi1> to vector<8x1xi1>
    %493 = vector.broadcast %492 : vector<8x1xi1> to vector<8x128xi1>
    %494 = arith.select %493, %478, %437 : vector<8x128xi1>, vector<8x128xf32>
    %c7_i32_155 = arith.constant 7 : i32
    %495 = arith.index_cast %c7_i32_155 : i32 to index
    %c0_156 = arith.constant 0 : index
    %c0_157 = arith.constant 0 : index
    %496 = vector.load %arg3[%495, %c0_156, %c0_157] : memref<8x8x1xf32, #tpu.memory_space<vmem>>, vector<1x8x1xf32>
    %497 = vector.shape_cast %496 : vector<1x8x1xf32> to vector<8x1xf32>
    %498 = arith.index_cast %c7_i32_155 : i32 to index
    %c0_158 = arith.constant 0 : index
    %c0_159 = arith.constant 0 : index
    %499 = vector.load %arg4[%498, %c0_158, %c0_159] : memref<8x8x1xf32, #tpu.memory_space<vmem>>, vector<1x8x1xf32>
    %500 = vector.shape_cast %499 : vector<1x8x1xf32> to vector<8x1xf32>
    %cst_160 = arith.constant 0.000000e+00 : f32
    %501 = vector.broadcast %cst_160 : f32 to vector<8x1xf32>
    %502 = arith.cmpf one, %500, %501 : vector<8x1xf32>
    %503 = arith.index_cast %c7_i32_155 : i32 to index
    %c0_161 = arith.constant 0 : index
    %c0_162 = arith.constant 0 : index
    %504 = vector.load %arg9[%503, %c0_161, %c0_162] : memref<8x8x512xf32, #tpu.memory_space<vmem>>, vector<1x8x512xf32>
    %505 = vector.shape_cast %504 : vector<1x8x512xf32> to vector<8x512xf32>
    %506 = vector.broadcast %497 : vector<8x1xf32> to vector<8x128xf32>
    %507 = arith.mulf %491, %506 : vector<8x128xf32>
    %508 = vector.broadcast %497 : vector<8x1xf32> to vector<8x128xf32>
    %509 = arith.mulf %494, %508 : vector<8x128xf32>
    %510 = arith.truncf %507 : vector<8x128xf32> to vector<8x128xbf16>
    %cst_163 = arith.constant dense<0.000000e+00> : vector<8x512xf32>
    %511 = tpu.matmul %510, %93, %cst_163 {dimension_numbers = #tpu.dot_dimension_numbers<[1], [0], [0], [1], [0, 0, 1, 1], [], []>} : vector<8x128xbf16>, vector<128x512xbf16>, vector<8x512xf32> -> vector<8x512xf32>
    %512 = arith.addf %505, %511 : vector<8x512xf32>
    %513 = vector.extract_strided_slice %512 {offsets = [0, 0], sizes = [8, 128], strides = [1, 1]} : vector<8x512xf32> to vector<8x128xf32>
    %514 = arith.negf %513 : vector<8x128xf32>
    %515 = math.exp %514 : vector<8x128xf32>
    %cst_164 = arith.constant 1.000000e+00 : f32
    %516 = vector.broadcast %cst_164 : f32 to vector<8x128xf32>
    %517 = arith.addf %516, %515 : vector<8x128xf32>
    %518 = arith.divf %516, %517 : vector<8x128xf32>
    %519 = vector.extract_strided_slice %512 {offsets = [0, 128], sizes = [8, 128], strides = [1, 1]} : vector<8x512xf32> to vector<8x128xf32>
    %520 = arith.negf %519 : vector<8x128xf32>
    %521 = math.exp %520 : vector<8x128xf32>
    %cst_165 = arith.constant 1.000000e+00 : f32
    %522 = vector.broadcast %cst_165 : f32 to vector<8x128xf32>
    %523 = arith.addf %522, %521 : vector<8x128xf32>
    %524 = arith.divf %522, %523 : vector<8x128xf32>
    %525 = vector.extract_strided_slice %512 {offsets = [0, 256], sizes = [8, 128], strides = [1, 1]} : vector<8x512xf32> to vector<8x128xf32>
    %526 = math.tanh %525 : vector<8x128xf32>
    %527 = vector.extract_strided_slice %512 {offsets = [0, 384], sizes = [8, 128], strides = [1, 1]} : vector<8x512xf32> to vector<8x128xf32>
    %528 = arith.negf %527 : vector<8x128xf32>
    %529 = math.exp %528 : vector<8x128xf32>
    %cst_166 = arith.constant 1.000000e+00 : f32
    %530 = vector.broadcast %cst_166 : f32 to vector<8x128xf32>
    %531 = arith.addf %530, %529 : vector<8x128xf32>
    %532 = arith.divf %530, %531 : vector<8x128xf32>
    %533 = arith.mulf %524, %509 : vector<8x128xf32>
    %534 = arith.mulf %518, %526 : vector<8x128xf32>
    %535 = arith.addf %533, %534 : vector<8x128xf32>
    %536 = math.tanh %535 : vector<8x128xf32>
    %537 = arith.mulf %532, %536 : vector<8x128xf32>
    %cst_167 = arith.constant 0.000000e+00 : f32
    %538 = vector.shape_cast %502 : vector<8x1xi1> to vector<8x1xi1>
    %539 = vector.broadcast %538 : vector<8x1xi1> to vector<8x128xi1>
    %540 = vector.broadcast %cst_167 : f32 to vector<8x128xf32>
    %541 = arith.select %539, %537, %540 : vector<8x128xi1>, vector<8x128xf32>
    %542 = arith.index_cast %c7_i32_155 : i32 to index
    %c0_168 = arith.constant 0 : index
    %c0_169 = arith.constant 0 : index
    %543 = vector.load %arg8[%542, %c0_168, %c0_169] : memref<8x8x128xf32, #tpu.memory_space<vmem>>, vector<1x8x128xf32>
    %544 = vector.shape_cast %543 : vector<1x8x128xf32> to vector<8x128xf32>
    %545 = vector.shape_cast %541 : vector<8x128xf32> to vector<1x8x128xf32>
    tpu.vector_store %arg8[%542, %c0_168, %c0_169], %545 {strides = array<i32>} : memref<8x8x128xf32, #tpu.memory_space<vmem>>, vector<1x8x128xf32>,
    %546 = vector.shape_cast %502 : vector<8x1xi1> to vector<8x1xi1>
    %547 = vector.broadcast %546 : vector<8x1xi1> to vector<8x128xi1>
    %548 = arith.select %547, %537, %491 : vector<8x128xi1>, vector<8x128xf32>
    %549 = vector.shape_cast %502 : vector<8x1xi1> to vector<8x1xi1>
    %550 = vector.broadcast %549 : vector<8x1xi1> to vector<8x128xi1>
    %551 = arith.select %550, %535, %494 : vector<8x128xi1>, vector<8x128xf32>
    %c8_i32_170 = arith.constant 8 : i32
    %c0_171 = arith.constant 0 : index
    %c0_172 = arith.constant 0 : index
    %552 = vector.load %arg10[%c0_171, %c0_172] : memref<8x128xf32, #tpu.memory_space<vmem>>, vector<8x128xf32>
    tpu.vector_store %arg10[%c0_171, %c0_172], %548 {strides = array<i32>} : memref<8x128xf32, #tpu.memory_space<vmem>>, vector<8x128xf32>,
    %c0_173 = arith.constant 0 : index
    %c0_174 = arith.constant 0 : index
    %553 = vector.load %arg11[%c0_173, %c0_174] : memref<8x128xf32, #tpu.memory_space<vmem>>, vector<8x128xf32>
    tpu.vector_store %arg11[%c0_173, %c0_174], %551 {strides = array<i32>} : memref<8x128xf32, #tpu.memory_space<vmem>>, vector<8x128xf32>,
    return
  }
  func.func @transform_0(%arg0: i32, %arg1: i32) -> (i32, i32, i32) {
    %c0_i32 = arith.constant 0 : i32
    %c0_i32_0 = arith.constant 0 : i32
    return %arg1, %arg0, %c0_i32 : i32, i32, i32
  }
  func.func @transform_1(%arg0: i32, %arg1: i32) -> (i32, i32, i32) {
    %c0_i32 = arith.constant 0 : i32
    %c0_i32_0 = arith.constant 0 : i32
    return %arg1, %arg0, %c0_i32 : i32, i32, i32
  }
  func.func @transform_2(%arg0: i32, %arg1: i32) -> (i32, i32, i32) {
    %c0_i32 = arith.constant 0 : i32
    %c0_i32_0 = arith.constant 0 : i32
    return %arg1, %arg0, %c0_i32 : i32, i32, i32
  }
  func.func @transform_3(%arg0: i32, %arg1: i32) -> (i32, i32) {
    %c0_i32 = arith.constant 0 : i32
    %c0_i32_0 = arith.constant 0 : i32
    %c0_i32_1 = arith.constant 0 : i32
    return %c0_i32, %c0_i32_0 : i32, i32
  }
  func.func @transform_4(%arg0: i32, %arg1: i32) -> (i32, i32) {
    %c0_i32 = arith.constant 0 : i32
    %c0_i32_0 = arith.constant 0 : i32
    %c0_i32_1 = arith.constant 0 : i32
    return %c0_i32, %c0_i32_0 : i32, i32
  }
  func.func @transform_5(%arg0: i32, %arg1: i32) -> (i32, i32) {
    %c0_i32 = arith.constant 0 : i32
    %c0_i32_0 = arith.constant 0 : i32
    %c0_i32_1 = arith.constant 0 : i32
    return %c0_i32, %c0_i32_0 : i32, i32
  }
  func.func @transform_6(%arg0: i32, %arg1: i32) -> (i32, i32, i32) {
    %c0_i32 = arith.constant 0 : i32
    %c0_i32_0 = arith.constant 0 : i32
    return %arg1, %arg0, %c0_i32 : i32, i32, i32
  }
}

</mosaic_0001>

<llo_original>
// kernel: rnn_device_forward.1
$region0: #{rnn_device_forward.1}
  #allocation0 [shape = 'u32[]', space=smem, size = 0x4, offset = 0x4, fixed_abs, tag = 'smem constant byte address 0x4 - core index']
  #allocation1 [shape = 'u32[144,128]{1,0:T(1,128)}', space=vmem, size = 0x12000, scoped, tag = 'internal scratch']
  #allocation2 [shape = 'f32[8,8,512]{2,1,0:T(8,128)}', space=vmem, size = 0x20000, scoped, tag = 'scratch operand']
  #allocation3 [shape = 'f32[8,128]{1,0:T(8,128)}', space=vmem, size = 0x1000, scoped, tag = 'scratch operand']
  #allocation4 [shape = 'f32[8,128]{1,0:T(8,128)}', space=vmem, size = 0x1000, scoped, tag = 'scratch operand']
  %s0 = inlined_call_operand.vmem [shape: f32[8,8,16], index: 0, kind: input, shape index: {}]
  %s1 = inlined_call_operand.vmem [shape: f32[8,8,1], index: 1, kind: input, shape index: {}]
  %s2 = inlined_call_operand.vmem [shape: f32[8,8,1], index: 2, kind: input, shape index: {}]
  %s3 = inlined_call_operand.vmem [shape: bf16[16,512], index: 3, kind: input, shape index: {}]
  %s4 = inlined_call_operand.vmem [shape: bf16[128,512], index: 4, kind: input, shape index: {}]
  %s5 = inlined_call_operand.vmem [shape: f32[1,512], index: 5, kind: input, shape index: {}]
  %s6 = inlined_call_operand.vmem [shape: f32[8,8,128], index: 6, kind: output, shape index: {}]
  %s7 = sld [smem:[#allocation0]]
  $region38: #{rnn_device_forward.1} parent=0
    _
  %s9 = ssub.s32 1, %s7
  %s10 = scalar_select 0, %s9, %s7
  // Predicated region
  $region2: #{rnn_device_forward.1} parent=0 // pred_check
    _
  $region3: #{rnn_device_forward.1} parent=0 // pred_check_branch
    %12 = sbr.rel (0) target = $region5
  $region4: #{rnn_device_forward.1} parent=0 // pred_region
    _
  $region5: #{rnn_device_forward.1} parent=0 // pred_fallthru
    _
  // Predicated region
  $region6: #{rnn_device_forward.1} parent=0 // pred_check
    _
  $region7: #{rnn_device_forward.1} parent=0 // pred_check_branch
    %14 = sbr.rel (0) target = $region9
  $region8: #{rnn_device_forward.1} parent=0 // pred_region
    _
  $region9: #{rnn_device_forward.1} parent=0 // pred_fallthru
    _
  // Predicated region
  $region10: #{rnn_device_forward.1} parent=0 // pred_check
    _
  $region11: #{rnn_device_forward.1} parent=0 // pred_check_branch
    %16 = sbr.rel (0) target = $region13
  $region12: #{rnn_device_forward.1} parent=0 // pred_region
    _
  $region13: #{rnn_device_forward.1} parent=0 // pred_fallthru
    _
  // Predicated region
  $region14: #{rnn_device_forward.1} parent=0 // pred_check
    _
  $region15: #{rnn_device_forward.1} parent=0 // pred_check_branch
    %18 = sbr.rel (0) target = $region17
  $region16: #{rnn_device_forward.1} parent=0 // pred_region
    _
  $region17: #{rnn_device_forward.1} parent=0 // pred_fallthru
    _
  // Predicated region
  $region18: #{rnn_device_forward.1} parent=0 // pred_check
    _
  $region19: #{rnn_device_forward.1} parent=0 // pred_check_branch
    %20 = sbr.rel (0) target = $region21
  $region20: #{rnn_device_forward.1} parent=0 // pred_region
    _
  $region21: #{rnn_device_forward.1} parent=0 // pred_fallthru
    _
  // Predicated region
  $region22: #{rnn_device_forward.1} parent=0 // pred_check
    _
  $region23: #{rnn_device_forward.1} parent=0 // pred_check_branch
    %22 = sbr.rel (0) target = $region25
  $region24: #{rnn_device_forward.1} parent=0 // pred_region
    _
  $region25: #{rnn_device_forward.1} parent=0 // pred_fallthru
    _
  %p24 = scmp.eq.s32.totalorder 0, 0
  // Predicated region
  $region26: #{rnn_device_forward.1} parent=0 // pred_check
    %p25 = pneg %p24
  $region27: #{rnn_device_forward.1} parent=0 // pred_check_branch
    %27 = sbr.rel (%p25) target = $region29
  $region28: #{rnn_device_forward.1} parent=0 // pred_region
    %28 = vst [vmem:[#allocation3] sm:$0xff] 0.0
    %29 = vst [vmem:[#allocation4] sm:$0xff] 0.0
  $region29: #{rnn_device_forward.1} parent=0 // pred_fallthru
    _
  %v30 = vld [vmem:[%s3] sm:$0xff]
  %v31 = vld [vmem:[%s3 + $0x8] sm:$0xff]
  %v32 = vld [vmem:[%s3 + $0x10] sm:$0xff]
  %v33 = vld [vmem:[%s3 + $0x18] sm:$0xff]
  %v34 = vld [vmem:[%s5] sm:$0xf]
  %v35 = vld [vmem:[%s0] sm:$0xff]
  %v36 = vpack.c.bf16 %v35, %v35
  %v38 = vlaneseq
  %v39 = vshrl.u32 %v38, 7
  %v40 = vsub.s32 0, %v39
  %v41 = vrot.slane %v34, %v40
  %v42 = vlaneseq
  %v43 = vshrl.u32 %v42, 7
  %v44 = vsub.s32 1, %v43
  %v45 = vrot.slane %v34, %v44
  %v46 = vlaneseq
  %v47 = vshrl.u32 %v46, 7
  %v48 = vsub.s32 2, %v47
  %v49 = vrot.slane %v34, %v48
  %v50 = vlaneseq
  %v51 = vshrl.u32 %v50, 7
  %v52 = vsub.s32 3, %v51
  %v53 = vrot.slane %v34, %v52
  %v62 = vunpack.c.l.b16 %v30
  %v63 = vunpack.c.h.b16 %v30
  %v64 = vunpack.c.l.b16 %v31
  %v65 = vunpack.c.h.b16 %v31
  %v66 = vunpack.c.l.b16 %v32
  %v67 = vunpack.c.h.b16 %v32
  %v68 = vunpack.c.l.b16 %v33
  %v69 = vunpack.c.h.b16 %v33
  %v70 = vpack.c.b16 %v66, %v62
  %v71 = vpack.c.b16 %v67, %v63
  %v72 = vpack.c.b16 %v68, %v64
  %v73 = vpack.c.b16 %v69, %v65
  %vm78 = vcmask 130048
  %v80 = vsel %vm78, %v36, 0
  %82 = vmatprep.subr.bf16.mxu0 %v71
  %83 = vmatpush1.bf16.msra.mxu0 %v70
  %84 = vmatprep.subr.bf16.mxu0 0
  %85 = vmatpush1.bf16.msra.mxu0 0
  %86 = vmatprep.subr.bf16.mxu0 0
  %87 = vmatpush1.bf16.msra.mxu0 0
  %88 = vmatprep.subr.bf16.mxu0 0
  %89 = vmatpush1.bf16.msra.mxu0 0
  %90 = vmatprep.subr.bf16.mxu0 0
  %91 = vmatpush1.bf16.msra.mxu0 0
  %92 = vmatprep.subr.bf16.mxu0 0
  %93 = vmatpush1.bf16.msra.mxu0 0
  %94 = vmatprep.subr.bf16.mxu0 0
  %95 = vmatpush1.bf16.msra.mxu0 0
  %96 = vmatprep.subr.bf16.mxu0 0
  %97 = vmatpush1.bf16.msra.mxu0 0
  %98 = vmatprep.subr.bf16.mxu0 0
  %99 = vmatpush1.bf16.msra.mxu0 0
  %100 = vmatprep.subr.bf16.mxu0 0
  %101 = vmatpush1.bf16.msra.mxu0 0
  %102 = vmatprep.subr.bf16.mxu0 0
  %103 = vmatpush1.bf16.msra.mxu0 0
  %104 = vmatprep.subr.bf16.mxu0 0
  %105 = vmatpush1.bf16.msra.mxu0 0
  %106 = vmatprep.subr.bf16.mxu0 0
  %107 = vmatpush1.bf16.msra.mxu0 0
  %108 = vmatprep.subr.bf16.mxu0 0
  %109 = vmatpush1.bf16.msra.mxu0 0
  %110 = vmatprep.subr.bf16.mxu0 0
  %111 = vmatpush1.bf16.msra.mxu0 0
  %112 = vmatprep.subr.bf16.mxu0 0
  %113 = vmatpush1.bf16.msra.mxu0 0
  %114 = vmatprep.mubr.bf16.mxu0 0
  %115 = vmatmul.mubr.bf16.gmra.mrb[0].mxu0 %v80
  %v116 = vpop.f32.mrb[0].mxu0
  %v117 = vadd.f32 %v41, %v116
  %v118 = vpop.f32.mrb[0].mxu0
  %v119 = vadd.f32 %v45, %v118
  %v120 = vpop.f32.mrb[0].mxu0
  %v121 = vpop.f32.mrb[0].mxu0
  %122 = vdwg.mxu0
  %123 = vmatprep.subr.bf16.mxu0 %v73
  %124 = vmatpush1.bf16.msra.mxu0 %v72
  %125 = vmatprep.subr.bf16.mxu0 0
  %126 = vmatpush1.bf16.msra.mxu0 0
  %127 = vmatprep.subr.bf16.mxu0 0
  %128 = vmatpush1.bf16.msra.mxu0 0
  %129 = vmatprep.subr.bf16.mxu0 0
  %130 = vmatpush1.bf16.msra.mxu0 0
  %131 = vmatprep.subr.bf16.mxu0 0
  %132 = vmatpush1.bf16.msra.mxu0 0
  %133 = vmatprep.subr.bf16.mxu0 0
  %134 = vmatpush1.bf16.msra.mxu0 0
  %135 = vmatprep.subr.bf16.mxu0 0
  %136 = vmatpush1.bf16.msra.mxu0 0
  %137 = vmatprep.subr.bf16.mxu0 0
  %138 = vmatpush1.bf16.msra.mxu0 0
  %139 = vmatprep.subr.bf16.mxu0 0
  %140 = vmatpush1.bf16.msra.mxu0 0
  %141 = vmatprep.subr.bf16.mxu0 0
  %142 = vmatpush1.bf16.msra.mxu0 0
  %143 = vmatprep.subr.bf16.mxu0 0
  %144 = vmatpush1.bf16.msra.mxu0 0
  %145 = vmatprep.subr.bf16.mxu0 0
  %146 = vmatpush1.bf16.msra.mxu0 0
  %147 = vmatprep.subr.bf16.mxu0 0
  %148 = vmatpush1.bf16.msra.mxu0 0
  %149 = vmatprep.subr.bf16.mxu0 0
  %150 = vmatpush1.bf16.msra.mxu0 0
  %151 = vmatprep.subr.bf16.mxu0 0
  %152 = vmatpush1.bf16.msra.mxu0 0
  %153 = vmatprep.subr.bf16.mxu0 0
  %154 = vmatpush1.bf16.msra.mxu0 0
  %155 = vmatprep.mubr.bf16.mxu0 0
  %156 = vmatmul.mubr.bf16.gmra.mrb[0].mxu0 %v80
  %v157 = vpop.f32.mrb[0].mxu0
  %v158 = vadd.f32 %v49, %v157
  %v159 = vpop.f32.mrb[0].mxu0
  %v160 = vadd.f32 %v53, %v159
  %v161 = vpop.f32.mrb[0].mxu0
  %v162 = vpop.f32.mrb[0].mxu0
  %163 = vdwg.mxu0
  %164 = vst [vmem:[#allocation2] sm:$0xff] %v117
  %165 = vst [vmem:[#allocation2 + $0x8] sm:$0xff] %v119
  %166 = vst [vmem:[#allocation2 + $0x10] sm:$0xff] %v158
  %167 = vst [vmem:[#allocation2 + $0x18] sm:$0xff] %v160
  %s168 = scalar_lea.vmem %s0, 8
  %v169 = vld [vmem:[%s168] sm:$0xff]
  %v170 = vpack.c.bf16 %v169, %v169
  %v172 = vsel %vm78, %v170, 0
  %174 = vmatprep.subr.bf16.mxu0 %v71
  %175 = vmatpush1.bf16.msra.mxu0 %v70
  %176 = vmatprep.subr.bf16.mxu0 0
  %177 = vmatpush1.bf16.msra.mxu0 0
  %178 = vmatprep.subr.bf16.mxu0 0
  %179 = vmatpush1.bf16.msra.mxu0 0
  %180 = vmatprep.subr.bf16.mxu0 0
  %181 = vmatpush1.bf16.msra.mxu0 0
  %182 = vmatprep.subr.bf16.mxu0 0
  %183 = vmatpush1.bf16.msra.mxu0 0
  %184 = vmatprep.subr.bf16.mxu0 0
  %185 = vmatpush1.bf16.msra.mxu0 0
  %186 = vmatprep.subr.bf16.mxu0 0
  %187 = vmatpush1.bf16.msra.mxu0 0
  %188 = vmatprep.subr.bf16.mxu0 0
  %189 = vmatpush1.bf16.msra.mxu0 0
  %190 = vmatprep.subr.bf16.mxu0 0
  %191 = vmatpush1.bf16.msra.mxu0 0
  %192 = vmatprep.subr.bf16.mxu0 0
  %193 = vmatpush1.bf16.msra.mxu0 0
  %194 = vmatprep.subr.bf16.mxu0 0
  %195 = vmatpush1.bf16.msra.mxu0 0
  %196 = vmatprep.subr.bf16.mxu0 0
  %197 = vmatpush1.bf16.msra.mxu0 0
  %198 = vmatprep.subr.bf16.mxu0 0
  %199 = vmatpush1.bf16.msra.mxu0 0
  %200 = vmatprep.subr.bf16.mxu0 0
  %201 = vmatpush1.bf16.msra.mxu0 0
  %202 = vmatprep.subr.bf16.mxu0 0
  %203 = vmatpush1.bf16.msra.mxu0 0
  %204 = vmatprep.subr.bf16.mxu0 0
  %205 = vmatpush1.bf16.msra.mxu0 0
  %206 = vmatprep.mubr.bf16.mxu0 0
  %207 = vmatmul.mubr.bf16.gmra.mrb[0].mxu0 %v172
  %v208 = vpop.f32.mrb[0].mxu0
  %v209 = vadd.f32 %v41, %v208
  %v210 = vpop.f32.mrb[0].mxu0
  %v211 = vadd.f32 %v45, %v210
  %v212 = vpop.f32.mrb[0].mxu0
  %v213 = vpop.f32.mrb[0].mxu0
  %214 = vdwg.mxu0
  %215 = vmatprep.subr.bf16.mxu0 %v73
  %216 = vmatpush1.bf16.msra.mxu0 %v72
  %217 = vmatprep.subr.bf16.mxu0 0
  %218 = vmatpush1.bf16.msra.mxu0 0
  %219 = vmatprep.subr.bf16.mxu0 0
  %220 = vmatpush1.bf16.msra.mxu0 0
  %221 = vmatprep.subr.bf16.mxu0 0
  %222 = vmatpush1.bf16.msra.mxu0 0
  %223 = vmatprep.subr.bf16.mxu0 0
  %224 = vmatpush1.bf16.msra.mxu0 0
  %225 = vmatprep.subr.bf16.mxu0 0
  %226 = vmatpush1.bf16.msra.mxu0 0
  %227 = vmatprep.subr.bf16.mxu0 0
  %228 = vmatpush1.bf16.msra.mxu0 0
  %229 = vmatprep.subr.bf16.mxu0 0
  %230 = vmatpush1.bf16.msra.mxu0 0
  %231 = vmatprep.subr.bf16.mxu0 0
  %232 = vmatpush1.bf16.msra.mxu0 0
  %233 = vmatprep.subr.bf16.mxu0 0
  %234 = vmatpush1.bf16.msra.mxu0 0
  %235 = vmatprep.subr.bf16.mxu0 0
  %236 = vmatpush1.bf16.msra.mxu0 0
  %237 = vmatprep.subr.bf16.mxu0 0
  %238 = vmatpush1.bf16.msra.mxu0 0
  %239 = vmatprep.subr.bf16.mxu0 0
  %240 = vmatpush1.bf16.msra.mxu0 0
  %241 = vmatprep.subr.bf16.mxu0 0
  %242 = vmatpush1.bf16.msra.mxu0 0
  %243 = vmatprep.subr.bf16.mxu0 0
  %244 = vmatpush1.bf16.msra.mxu0 0
  %245 = vmatprep.subr.bf16.mxu0 0
  %246 = vmatpush1.bf16.msra.mxu0 0
  %247 = vmatprep.mubr.bf16.mxu0 0
  %248 = vmatmul.mubr.bf16.gmra.mrb[0].mxu0 %v172
  %v249 = vpop.f32.mrb[0].mxu0
  %v250 = vadd.f32 %v49, %v249
  %v251 = vpop.f32.mrb[0].mxu0
  %v252 = vadd.f32 %v53, %v251
  %v253 = vpop.f32.mrb[0].mxu0
  %v254 = vpop.f32.mrb[0].mxu0
  %255 = vdwg.mxu0
  %s256 = scalar_lea.vmem [#allocation2], 32
  %257 = vst [vmem:[%s256] sm:$0xff] %v209
  %258 = vst [vmem:[%s256 + $0x8] sm:$0xff] %v211
  %259 = vst [vmem:[%s256 + $0x10] sm:$0xff] %v250
  %260 = vst [vmem:[%s256 + $0x18] sm:$0xff] %v252
  %s261 = scalar_lea.vmem %s0, 16
  %v262 = vld [vmem:[%s261] sm:$0xff]
  %v263 = vpack.c.bf16 %v262, %v262
  %v265 = vsel %vm78, %v263, 0
  %267 = vmatprep.subr.bf16.mxu0 %v71
  %268 = vmatpush1.bf16.msra.mxu0 %v70
  %269 = vmatprep.subr.bf16.mxu0 0
  %270 = vmatpush1.bf16.msra.mxu0 0
  %271 = vmatprep.subr.bf16.mxu0 0
  %272 = vmatpush1.bf16.msra.mxu0 0
  %273 = vmatprep.subr.bf16.mxu0 0
  %274 = vmatpush1.bf16.msra.mxu0 0
  %275 = vmatprep.subr.bf16.mxu0 0
  %276 = vmatpush1.bf16.msra.mxu0 0
  %277 = vmatprep.subr.bf16.mxu0 0
  %278 = vmatpush1.bf16.msra.mxu0 0
  %279 = vmatprep.subr.bf16.mxu0 0
  %280 = vmatpush1.bf16.msra.mxu0 0
  %281 = vmatprep.subr.bf16.mxu0 0
  %282 = vmatpush1.bf16.msra.mxu0 0
  %283 = vmatprep.subr.bf16.mxu0 0
  %284 = vmatpush1.bf16.msra.mxu0 0
  %285 = vmatprep.subr.bf16.mxu0 0
  %286 = vmatpush1.bf16.msra.mxu0 0
  %287 = vmatprep.subr.bf16.mxu0 0
  %288 = vmatpush1.bf16.msra.mxu0 0
  %289 = vmatprep.subr.bf16.mxu0 0
  %290 = vmatpush1.bf16.msra.mxu0 0
  %291 = vmatprep.subr.bf16.mxu0 0
  %292 = vmatpush1.bf16.msra.mxu0 0
  %293 = vmatprep.subr.bf16.mxu0 0
  %294 = vmatpush1.bf16.msra.mxu0 0
  %295 = vmatprep.subr.bf16.mxu0 0
  %296 = vmatpush1.bf16.msra.mxu0 0
  %297 = vmatprep.subr.bf16.mxu0 0
  %298 = vmatpush1.bf16.msra.mxu0 0
  %299 = vmatprep.mubr.bf16.mxu0 0
  %300 = vmatmul.mubr.bf16.gmra.mrb[0].mxu0 %v265
  %v301 = vpop.f32.mrb[0].mxu0
  %v302 = vadd.f32 %v41, %v301
  %v303 = vpop.f32.mrb[0].mxu0
  %v304 = vadd.f32 %v45, %v303
  %v305 = vpop.f32.mrb[0].mxu0
  %v306 = vpop.f32.mrb[0].mxu0
  %307 = vdwg.mxu0
  %308 = vmatprep.subr.bf16.mxu0 %v73
  %309 = vmatpush1.bf16.msra.mxu0 %v72
  %310 = vmatprep.subr.bf16.mxu0 0
  %311 = vmatpush1.bf16.msra.mxu0 0
  %312 = vmatprep.subr.bf16.mxu0 0
  %313 = vmatpush1.bf16.msra.mxu0 0
  %314 = vmatprep.subr.bf16.mxu0 0
  %315 = vmatpush1.bf16.msra.mxu0 0
  %316 = vmatprep.subr.bf16.mxu0 0
  %317 = vmatpush1.bf16.msra.mxu0 0
  %318 = vmatprep.subr.bf16.mxu0 0
  %319 = vmatpush1.bf16.msra.mxu0 0
  %320 = vmatprep.subr.bf16.mxu0 0
  %321 = vmatpush1.bf16.msra.mxu0 0
  %322 = vmatprep.subr.bf16.mxu0 0
  %323 = vmatpush1.bf16.msra.mxu0 0
  %324 = vmatprep.subr.bf16.mxu0 0
  %325 = vmatpush1.bf16.msra.mxu0 0
  %326 = vmatprep.subr.bf16.mxu0 0
  %327 = vmatpush1.bf16.msra.mxu0 0
  %328 = vmatprep.subr.bf16.mxu0 0
  %329 = vmatpush1.bf16.msra.mxu0 0
  %330 = vmatprep.subr.bf16.mxu0 0
  %331 = vmatpush1.bf16.msra.mxu0 0
  %332 = vmatprep.subr.bf16.mxu0 0
  %333 = vmatpush1.bf16.msra.mxu0 0
  %334 = vmatprep.subr.bf16.mxu0 0
  %335 = vmatpush1.bf16.msra.mxu0 0
  %336 = vmatprep.subr.bf16.mxu0 0
  %337 = vmatpush1.bf16.msra.mxu0 0
  %338 = vmatprep.subr.bf16.mxu0 0
  %339 = vmatpush1.bf16.msra.mxu0 0
  %340 = vmatprep.mubr.bf16.mxu0 0
  %341 = vmatmul.mubr.bf16.gmra.mrb[0].mxu0 %v265
  %v342 = vpop.f32.mrb[0].mxu0
  %v343 = vadd.f32 %v49, %v342
  %v344 = vpop.f32.mrb[0].mxu0
  %v345 = vadd.f32 %v53, %v344
  %v346 = vpop.f32.mrb[0].mxu0
  %v347 = vpop.f32.mrb[0].mxu0
  %348 = vdwg.mxu0
  %s349 = scalar_lea.vmem [#allocation2], 64
  %350 = vst [vmem:[%s349] sm:$0xff] %v302
  %351 = vst [vmem:[%s349 + $0x8] sm:$0xff] %v304
  %352 = vst [vmem:[%s349 + $0x10] sm:$0xff] %v343
  %353 = vst [vmem:[%s349 + $0x18] sm:$0xff] %v345
  %s354 = scalar_lea.vmem %s0, 24
  %v355 = vld [vmem:[%s354] sm:$0xff]
  %v356 = vpack.c.bf16 %v355, %v355
  %v358 = vsel %vm78, %v356, 0
  %360 = vmatprep.subr.bf16.mxu0 %v71
  %361 = vmatpush1.bf16.msra.mxu0 %v70
  %362 = vmatprep.subr.bf16.mxu0 0
  %363 = vmatpush1.bf16.msra.mxu0 0
  %364 = vmatprep.subr.bf16.mxu0 0
  %365 = vmatpush1.bf16.msra.mxu0 0
  %366 = vmatprep.subr.bf16.mxu0 0
  %367 = vmatpush1.bf16.msra.mxu0 0
  %368 = vmatprep.subr.bf16.mxu0 0
  %369 = vmatpush1.bf16.msra.mxu0 0
  %370 = vmatprep.subr.bf16.mxu0 0
  %371 = vmatpush1.bf16.msra.mxu0 0
  %372 = vmatprep.subr.bf16.mxu0 0
  %373 = vmatpush1.bf16.msra.mxu0 0
  %374 = vmatprep.subr.bf16.mxu0 0
  %375 = vmatpush1.bf16.msra.mxu0 0
  %376 = vmatprep.subr.bf16.mxu0 0
  %377 = vmatpush1.bf16.msra.mxu0 0
  %378 = vmatprep.subr.bf16.mxu0 0
  %379 = vmatpush1.bf16.msra.mxu0 0
  %380 = vmatprep.subr.bf16.mxu0 0
  %381 = vmatpush1.bf16.msra.mxu0 0
  %382 = vmatprep.subr.bf16.mxu0 0
  %383 = vmatpush1.bf16.msra.mxu0 0
  %384 = vmatprep.subr.bf16.mxu0 0
  %385 = vmatpush1.bf16.msra.mxu0 0
  %386 = vmatprep.subr.bf16.mxu0 0
  %387 = vmatpush1.bf16.msra.mxu0 0
  %388 = vmatprep.subr.bf16.mxu0 0
  %389 = vmatpush1.bf16.msra.mxu0 0
  %390 = vmatprep.subr.bf16.mxu0 0
  %391 = vmatpush1.bf16.msra.mxu0 0
  %392 = vmatprep.mubr.bf16.mxu0 0
  %393 = vmatmul.mubr.bf16.gmra.mrb[0].mxu0 %v358
  %v394 = vpop.f32.mrb[0].mxu0
  %v395 = vadd.f32 %v41, %v394
  %v396 = vpop.f32.mrb[0].mxu0
  %v397 = vadd.f32 %v45, %v396
  %v398 = vpop.f32.mrb[0].mxu0
  %v399 = vpop.f32.mrb[0].mxu0
  %400 = vdwg.mxu0
  %401 = vmatprep.subr.bf16.mxu0 %v73
  %402 = vmatpush1.bf16.msra.mxu0 %v72
  %403 = vmatprep.subr.bf16.mxu0 0
  %404 = vmatpush1.bf16.msra.mxu0 0
  %405 = vmatprep.subr.bf16.mxu0 0
  %406 = vmatpush1.bf16.msra.mxu0 0
  %407 = vmatprep.subr.bf16.mxu0 0
  %408 = vmatpush1.bf16.msra.mxu0 0
  %409 = vmatprep.subr.bf16.mxu0 0
  %410 = vmatpush1.bf16.msra.mxu0 0
  %411 = vmatprep.subr.bf16.mxu0 0
  %412 = vmatpush1.bf16.msra.mxu0 0
  %413 = vmatprep.subr.bf16.mxu0 0
  %414 = vmatpush1.bf16.msra.mxu0 0
  %415 = vmatprep.subr.bf16.mxu0 0
  %416 = vmatpush1.bf16.msra.mxu0 0
  %417 = vmatprep.subr.bf16.mxu0 0
  %418 = vmatpush1.bf16.msra.mxu0 0
  %419 = vmatprep.subr.bf16.mxu0 0
  %420 = vmatpush1.bf16.msra.mxu0 0
  %421 = vmatprep.subr.bf16.mxu0 0
  %422 = vmatpush1.bf16.msra.mxu0 0
  %423 = vmatprep.subr.bf16.mxu0 0
  %424 = vmatpush1.bf16.msra.mxu0 0
  %425 = vmatprep.subr.bf16.mxu0 0
  %426 = vmatpush1.bf16.msra.mxu0 0
  %427 = vmatprep.subr.bf16.mxu0 0
  %428 = vmatpush1.bf16.msra.mxu0 0
  %429 = vmatprep.subr.bf16.mxu0 0
  %430 = vmatpush1.bf16.msra.mxu0 0
  %431 = vmatprep.subr.bf16.mxu0 0
  %432 = vmatpush1.bf16.msra.mxu0 0
  %433 = vmatprep.mubr.bf16.mxu0 0
  %434 = vmatmul.mubr.bf16.gmra.mrb[0].mxu0 %v358
  %v435 = vpop.f32.mrb[0].mxu0
  %v436 = vadd.f32 %v49, %v435
  %v437 = vpop.f32.mrb[0].mxu0
  %v438 = vadd.f32 %v53, %v437
  %v439 = vpop.f32.mrb[0].mxu0
  %v440 = vpop.f32.mrb[0].mxu0
  %441 = vdwg.mxu0
  %s442 = scalar_lea.vmem [#allocation2], 96
  %443 = vst [vmem:[%s442] sm:$0xff] %v395
  %444 = vst [vmem:[%s442 + $0x8] sm:$0xff] %v397
  %445 = vst [vmem:[%s442 + $0x10] sm:$0xff] %v436
  %446 = vst [vmem:[%s442 + $0x18] sm:$0xff] %v438
  %s447 = scalar_lea.vmem %s0, 32
  %v448 = vld [vmem:[%s447] sm:$0xff]
  %v449 = vpack.c.bf16 %v448, %v448
  %v451 = vsel %vm78, %v449, 0
  %453 = vmatprep.subr.bf16.mxu0 %v71
  %454 = vmatpush1.bf16.msra.mxu0 %v70
  %455 = vmatprep.subr.bf16.mxu0 0
  %456 = vmatpush1.bf16.msra.mxu0 0
  %457 = vmatprep.subr.bf16.mxu0 0
  %458 = vmatpush1.bf16.msra.mxu0 0
  %459 = vmatprep.subr.bf16.mxu0 0
  %460 = vmatpush1.bf16.msra.mxu0 0
  %461 = vmatprep.subr.bf16.mxu0 0
  %462 = vmatpush1.bf16.msra.mxu0 0
  %463 = vmatprep.subr.bf16.mxu0 0
  %464 = vmatpush1.bf16.msra.mxu0 0
  %465 = vmatprep.subr.bf16.mxu0 0
  %466 = vmatpush1.bf16.msra.mxu0 0
  %467 = vmatprep.subr.bf16.mxu0 0
  %468 = vmatpush1.bf16.msra.mxu0 0
  %469 = vmatprep.subr.bf16.mxu0 0
  %470 = vmatpush1.bf16.msra.mxu0 0
  %471 = vmatprep.subr.bf16.mxu0 0
  %472 = vmatpush1.bf16.msra.mxu0 0
  %473 = vmatprep.subr.bf16.mxu0 0
  %474 = vmatpush1.bf16.msra.mxu0 0
  %475 = vmatprep.subr.bf16.mxu0 0
  %476 = vmatpush1.bf16.msra.mxu0 0
  %477 = vmatprep.subr.bf16.mxu0 0
  %478 = vmatpush1.bf16.msra.mxu0 0
  %479 = vmatprep.subr.bf16.mxu0 0
  %480 = vmatpush1.bf16.msra.mxu0 0
  %481 = vmatprep.subr.bf16.mxu0 0
  %482 = vmatpush1.bf16.msra.mxu0 0
  %483 = vmatprep.subr.bf16.mxu0 0
  %484 = vmatpush1.bf16.msra.mxu0 0
  %485 = vmatprep.mubr.bf16.mxu0 0
  %486 = vmatmul.mubr.bf16.gmra.mrb[0].mxu0 %v451
  %v487 = vpop.f32.mrb[0].mxu0
  %v488 = vadd.f32 %v41, %v487
  %v489 = vpop.f32.mrb[0].mxu0
  %v490 = vadd.f32 %v45, %v489
  %v491 = vpop.f32.mrb[0].mxu0
  %v492 = vpop.f32.mrb[0].mxu0
  %493 = vdwg.mxu0
  %494 = vmatprep.subr.bf16.mxu0 %v73
  %495 = vmatpush1.bf16.msra.mxu0 %v72
  %496 = vmatprep.subr.bf16.mxu0 0
  %497 = vmatpush1.bf16.msra.mxu0 0
  %498 = vmatprep.subr.bf16.mxu0 0
  %499 = vmatpush1.bf16.msra.mxu0 0
  %500 = vmatprep.subr.bf16.mxu0 0
  %501 = vmatpush1.bf16.msra.mxu0 0
  %502 = vmatprep.subr.bf16.mxu0 0
  %503 = vmatpush1.bf16.msra.mxu0 0
  %504 = vmatprep.subr.bf16.mxu0 0
  %505 = vmatpush1.bf16.msra.mxu0 0
  %506 = vmatprep.subr.bf16.mxu0 0
  %507 = vmatpush1.bf16.msra.mxu0 0
  %508 = vmatprep.subr.bf16.mxu0 0
  %509 = vmatpush1.bf16.msra.mxu0 0
  %510 = vmatprep.subr.bf16.mxu0 0
  %511 = vmatpush1.bf16.msra.mxu0 0
  %512 = vmatprep.subr.bf16.mxu0 0
  %513 = vmatpush1.bf16.msra.mxu0 0
  %514 = vmatprep.subr.bf16.mxu0 0
  %515 = vmatpush1.bf16.msra.mxu0 0
  %516 = vmatprep.subr.bf16.mxu0 0
  %517 = vmatpush1.bf16.msra.mxu0 0
  %518 = vmatprep.subr.bf16.mxu0 0
  %519 = vmatpush1.bf16.msra.mxu0 0
  %520 = vmatprep.subr.bf16.mxu0 0
  %521 = vmatpush1.bf16.msra.mxu0 0
  %522 = vmatprep.subr.bf16.mxu0 0
  %523 = vmatpush1.bf16.msra.mxu0 0
  %524 = vmatprep.subr.bf16.mxu0 0
  %525 = vmatpush1.bf16.msra.mxu0 0
  %526 = vmatprep.mubr.bf16.mxu0 0
  %527 = vmatmul.mubr.bf16.gmra.mrb[0].mxu0 %v451
  %v528 = vpop.f32.mrb[0].mxu0
  %v529 = vadd.f32 %v49, %v528
  %v530 = vpop.f32.mrb[0].mxu0
  %v531 = vadd.f32 %v53, %v530
  %v532 = vpop.f32.mrb[0].mxu0
  %v533 = vpop.f32.mrb[0].mxu0
  %534 = vdwg.mxu0
  %s535 = scalar_lea.vmem [#allocation2], 128
  %536 = vst [vmem:[%s535] sm:$0xff] %v488
  %537 = vst [vmem:[%s535 + $0x8] sm:$0xff] %v490
  %538 = vst [vmem:[%s535 + $0x10] sm:$0xff] %v529
  %539 = vst [vmem:[%s535 + $0x18] sm:$0xff] %v531
  %s540 = scalar_lea.vmem %s0, 40
  %v541 = vld [vmem:[%s540] sm:$0xff]
  %v542 = vpack.c.bf16 %v541, %v541
  %v544 = vsel %vm78, %v542, 0
  %546 = vmatprep.subr.bf16.mxu0 %v71
  %547 = vmatpush1.bf16.msra.mxu0 %v70
  %548 = vmatprep.subr.bf16.mxu0 0
  %549 = vmatpush1.bf16.msra.mxu0 0
  %550 = vmatprep.subr.bf16.mxu0 0
  %551 = vmatpush1.bf16.msra.mxu0 0
  %552 = vmatprep.subr.bf16.mxu0 0
  %553 = vmatpush1.bf16.msra.mxu0 0
  %554 = vmatprep.subr.bf16.mxu0 0
  %555 = vmatpush1.bf16.msra.mxu0 0
  %556 = vmatprep.subr.bf16.mxu0 0
  %557 = vmatpush1.bf16.msra.mxu0 0
  %558 = vmatprep.subr.bf16.mxu0 0
  %559 = vmatpush1.bf16.msra.mxu0 0
  %560 = vmatprep.subr.bf16.mxu0 0
  %561 = vmatpush1.bf16.msra.mxu0 0
  %562 = vmatprep.subr.bf16.mxu0 0
  %563 = vmatpush1.bf16.msra.mxu0 0
  %564 = vmatprep.subr.bf16.mxu0 0
  %565 = vmatpush1.bf16.msra.mxu0 0
  %566 = vmatprep.subr.bf16.mxu0 0
  %567 = vmatpush1.bf16.msra.mxu0 0
  %568 = vmatprep.subr.bf16.mxu0 0
  %569 = vmatpush1.bf16.msra.mxu0 0
  %570 = vmatprep.subr.bf16.mxu0 0
  %571 = vmatpush1.bf16.msra.mxu0 0
  %572 = vmatprep.subr.bf16.mxu0 0
  %573 = vmatpush1.bf16.msra.mxu0 0
  %574 = vmatprep.subr.bf16.mxu0 0
  %575 = vmatpush1.bf16.msra.mxu0 0
  %576 = vmatprep.subr.bf16.mxu0 0
  %577 = vmatpush1.bf16.msra.mxu0 0
  %578 = vmatprep.mubr.bf16.mxu0 0
  %579 = vmatmul.mubr.bf16.gmra.mrb[0].mxu0 %v544
  %v580 = vpop.f32.mrb[0].mxu0
  %v581 = vadd.f32 %v41, %v580
  %v582 = vpop.f32.mrb[0].mxu0
  %v583 = vadd.f32 %v45, %v582
  %v584 = vpop.f32.mrb[0].mxu0
  %v585 = vpop.f32.mrb[0].mxu0
  %586 = vdwg.mxu0
  %587 = vmatprep.subr.bf16.mxu0 %v73
  %588 = vmatpush1.bf16.msra.mxu0 %v72
  %589 = vmatprep.subr.bf16.mxu0 0
  %590 = vmatpush1.bf16.msra.mxu0 0
  %591 = vmatprep.subr.bf16.mxu0 0
  %592 = vmatpush1.bf16.msra.mxu0 0
  %593 = vmatprep.subr.bf16.mxu0 0
  %594 = vmatpush1.bf16.msra.mxu0 0
  %595 = vmatprep.subr.bf16.mxu0 0
  %596 = vmatpush1.bf16.msra.mxu0 0
  %597 = vmatprep.subr.bf16.mxu0 0
  %598 = vmatpush1.bf16.msra.mxu0 0
  %599 = vmatprep.subr.bf16.mxu0 0
  %600 = vmatpush1.bf16.msra.mxu0 0
  %601 = vmatprep.subr.bf16.mxu0 0
  %602 = vmatpush1.bf16.msra.mxu0 0
  %603 = vmatprep.subr.bf16.mxu0 0
  %604 = vmatpush1.bf16.msra.mxu0 0
  %605 = vmatprep.subr.bf16.mxu0 0
  %606 = vmatpush1.bf16.msra.mxu0 0
  %607 = vmatprep.subr.bf16.mxu0 0
  %608 = vmatpush1.bf16.msra.mxu0 0
  %609 = vmatprep.subr.bf16.mxu0 0
  %610 = vmatpush1.bf16.msra.mxu0 0
  %611 = vmatprep.subr.bf16.mxu0 0
  %612 = vmatpush1.bf16.msra.mxu0 0
  %613 = vmatprep.subr.bf16.mxu0 0
  %614 = vmatpush1.bf16.msra.mxu0 0
  %615 = vmatprep.subr.bf16.mxu0 0
  %616 = vmatpush1.bf16.msra.mxu0 0
  %617 = vmatprep.subr.bf16.mxu0 0
  %618 = vmatpush1.bf16.msra.mxu0 0
  %619 = vmatprep.mubr.bf16.mxu0 0
  %620 = vmatmul.mubr.bf16.gmra.mrb[0].mxu0 %v544
  %v621 = vpop.f32.mrb[0].mxu0
  %v622 = vadd.f32 %v49, %v621
  %v623 = vpop.f32.mrb[0].mxu0
  %v624 = vadd.f32 %v53, %v623
  %v625 = vpop.f32.mrb[0].mxu0
  %v626 = vpop.f32.mrb[0].mxu0
  %627 = vdwg.mxu0
  %s628 = scalar_lea.vmem [#allocation2], 160
  %629 = vst [vmem:[%s628] sm:$0xff] %v581
  %630 = vst [vmem:[%s628 + $0x8] sm:$0xff] %v583
  %631 = vst [vmem:[%s628 + $0x10] sm:$0xff] %v622
  %632 = vst [vmem:[%s628 + $0x18] sm:$0xff] %v624
  %s633 = scalar_lea.vmem %s0, 48
  %v634 = vld [vmem:[%s633] sm:$0xff]
  %v635 = vpack.c.bf16 %v634, %v634
  %v637 = vsel %vm78, %v635, 0
  %639 = vmatprep.subr.bf16.mxu0 %v71
  %640 = vmatpush1.bf16.msra.mxu0 %v70
  %641 = vmatprep.subr.bf16.mxu0 0
  %642 = vmatpush1.bf16.msra.mxu0 0
  %643 = vmatprep.subr.bf16.mxu0 0
  %644 = vmatpush1.bf16.msra.mxu0 0
  %645 = vmatprep.subr.bf16.mxu0 0
  %646 = vmatpush1.bf16.msra.mxu0 0
  %647 = vmatprep.subr.bf16.mxu0 0
  %648 = vmatpush1.bf16.msra.mxu0 0
  %649 = vmatprep.subr.bf16.mxu0 0
  %650 = vmatpush1.bf16.msra.mxu0 0
  %651 = vmatprep.subr.bf16.mxu0 0
  %652 = vmatpush1.bf16.msra.mxu0 0
  %653 = vmatprep.subr.bf16.mxu0 0
  %654 = vmatpush1.bf16.msra.mxu0 0
  %655 = vmatprep.subr.bf16.mxu0 0
  %656 = vmatpush1.bf16.msra.mxu0 0
  %657 = vmatprep.subr.bf16.mxu0 0
  %658 = vmatpush1.bf16.msra.mxu0 0
  %659 = vmatprep.subr.bf16.mxu0 0
  %660 = vmatpush1.bf16.msra.mxu0 0
  %661 = vmatprep.subr.bf16.mxu0 0
  %662 = vmatpush1.bf16.msra.mxu0 0
  %663 = vmatprep.subr.bf16.mxu0 0
  %664 = vmatpush1.bf16.msra.mxu0 0
  %665 = vmatprep.subr.bf16.mxu0 0
  %666 = vmatpush1.bf16.msra.mxu0 0
  %667 = vmatprep.subr.bf16.mxu0 0
  %668 = vmatpush1.bf16.msra.mxu0 0
  %669 = vmatprep.subr.bf16.mxu0 0
  %670 = vmatpush1.bf16.msra.mxu0 0
  %671 = vmatprep.mubr.bf16.mxu0 0
  %672 = vmatmul.mubr.bf16.gmra.mrb[0].mxu0 %v637
  %v673 = vpop.f32.mrb[0].mxu0
  %v674 = vadd.f32 %v41, %v673
  %v675 = vpop.f32.mrb[0].mxu0
  %v676 = vadd.f32 %v45, %v675
  %v677 = vpop.f32.mrb[0].mxu0
  %v678 = vpop.f32.mrb[0].mxu0
  %679 = vdwg.mxu0
  %680 = vmatprep.subr.bf16.mxu0 %v73
  %681 = vmatpush1.bf16.msra.mxu0 %v72
  %682 = vmatprep.subr.bf16.mxu0 0
  %683 = vmatpush1.bf16.msra.mxu0 0
  %684 = vmatprep.subr.bf16.mxu0 0
  %685 = vmatpush1.bf16.msra.mxu0 0
  %686 = vmatprep.subr.bf16.mxu0 0
  %687 = vmatpush1.bf16.msra.mxu0 0
  %688 = vmatprep.subr.bf16.mxu0 0
  %689 = vmatpush1.bf16.msra.mxu0 0
  %690 = vmatprep.subr.bf16.mxu0 0
  %691 = vmatpush1.bf16.msra.mxu0 0
  %692 = vmatprep.subr.bf16.mxu0 0
  %693 = vmatpush1.bf16.msra.mxu0 0
  %694 = vmatprep.subr.bf16.mxu0 0
  %695 = vmatpush1.bf16.msra.mxu0 0
  %696 = vmatprep.subr.bf16.mxu0 0
  %697 = vmatpush1.bf16.msra.mxu0 0
  %698 = vmatprep.subr.bf16.mxu0 0
  %699 = vmatpush1.bf16.msra.mxu0 0
  %700 = vmatprep.subr.bf16.mxu0 0
  %701 = vmatpush1.bf16.msra.mxu0 0
  %702 = vmatprep.subr.bf16.mxu0 0
  %703 = vmatpush1.bf16.msra.mxu0 0
  %704 = vmatprep.subr.bf16.mxu0 0
  %705 = vmatpush1.bf16.msra.mxu0 0
  %706 = vmatprep.subr.bf16.mxu0 0
  %707 = vmatpush1.bf16.msra.mxu0 0
  %708 = vmatprep.subr.bf16.mxu0 0
  %709 = vmatpush1.bf16.msra.mxu0 0
  %710 = vmatprep.subr.bf16.mxu0 0
  %711 = vmatpush1.bf16.msra.mxu0 0
  %712 = vmatprep.mubr.bf16.mxu0 0
  %713 = vmatmul.mubr.bf16.gmra.mrb[0].mxu0 %v637
  %v714 = vpop.f32.mrb[0].mxu0
  %v715 = vadd.f32 %v49, %v714
  %v716 = vpop.f32.mrb[0].mxu0
  %v717 = vadd.f32 %v53, %v716
  %v718 = vpop.f32.mrb[0].mxu0
  %v719 = vpop.f32.mrb[0].mxu0
  %720 = vdwg.mxu0
  %s721 = scalar_lea.vmem [#allocation2], 192
  %722 = vst [vmem:[%s721] sm:$0xff] %v674
  %723 = vst [vmem:[%s721 + $0x8] sm:$0xff] %v676
  %724 = vst [vmem:[%s721 + $0x10] sm:$0xff] %v715
  %725 = vst [vmem:[%s721 + $0x18] sm:$0xff] %v717
  %s726 = scalar_lea.vmem %s0, 56
  %v727 = vld [vmem:[%s726] sm:$0xff]
  %v728 = vpack.c.bf16 %v727, %v727
  %v730 = vsel %vm78, %v728, 0
  %732 = vmatprep.subr.bf16.mxu0 %v71
  %733 = vmatpush1.bf16.msra.mxu0 %v70
  %734 = vmatprep.subr.bf16.mxu0 0
  %735 = vmatpush1.bf16.msra.mxu0 0
  %736 = vmatprep.subr.bf16.mxu0 0
  %737 = vmatpush1.bf16.msra.mxu0 0
  %738 = vmatprep.subr.bf16.mxu0 0
  %739 = vmatpush1.bf16.msra.mxu0 0
  %740 = vmatprep.subr.bf16.mxu0 0
  %741 = vmatpush1.bf16.msra.mxu0 0
  %742 = vmatprep.subr.bf16.mxu0 0
  %743 = vmatpush1.bf16.msra.mxu0 0
  %744 = vmatprep.subr.bf16.mxu0 0
  %745 = vmatpush1.bf16.msra.mxu0 0
  %746 = vmatprep.subr.bf16.mxu0 0
  %747 = vmatpush1.bf16.msra.mxu0 0
  %748 = vmatprep.subr.bf16.mxu0 0
  %749 = vmatpush1.bf16.msra.mxu0 0
  %750 = vmatprep.subr.bf16.mxu0 0
  %751 = vmatpush1.bf16.msra.mxu0 0
  %752 = vmatprep.subr.bf16.mxu0 0
  %753 = vmatpush1.bf16.msra.mxu0 0
  %754 = vmatprep.subr.bf16.mxu0 0
  %755 = vmatpush1.bf16.msra.mxu0 0
  %756 = vmatprep.subr.bf16.mxu0 0
  %757 = vmatpush1.bf16.msra.mxu0 0
  %758 = vmatprep.subr.bf16.mxu0 0
  %759 = vmatpush1.bf16.msra.mxu0 0
  %760 = vmatprep.subr.bf16.mxu0 0
  %761 = vmatpush1.bf16.msra.mxu0 0
  %762 = vmatprep.subr.bf16.mxu0 0
  %763 = vmatpush1.bf16.msra.mxu0 0
  %764 = vmatprep.mubr.bf16.mxu0 0
  %765 = vmatmul.mubr.bf16.gmra.mrb[0].mxu0 %v730
  %v766 = vpop.f32.mrb[0].mxu0
  %v767 = vadd.f32 %v41, %v766
  %v768 = vpop.f32.mrb[0].mxu0
  %v769 = vadd.f32 %v45, %v768
  %v770 = vpop.f32.mrb[0].mxu0
  %v771 = vpop.f32.mrb[0].mxu0
  %772 = vdwg.mxu0
  %773 = vmatprep.subr.bf16.mxu0 %v73
  %774 = vmatpush1.bf16.msra.mxu0 %v72
  %775 = vmatprep.subr.bf16.mxu0 0
  %776 = vmatpush1.bf16.msra.mxu0 0
  %777 = vmatprep.subr.bf16.mxu0 0
  %778 = vmatpush1.bf16.msra.mxu0 0
  %779 = vmatprep.subr.bf16.mxu0 0
  %780 = vmatpush1.bf16.msra.mxu0 0
  %781 = vmatprep.subr.bf16.mxu0 0
  %782 = vmatpush1.bf16.msra.mxu0 0
  %783 = vmatprep.subr.bf16.mxu0 0
  %784 = vmatpush1.bf16.msra.mxu0 0
  %785 = vmatprep.subr.bf16.mxu0 0
  %786 = vmatpush1.bf16.msra.mxu0 0
  %787 = vmatprep.subr.bf16.mxu0 0
  %788 = vmatpush1.bf16.msra.mxu0 0
  %789 = vmatprep.subr.bf16.mxu0 0
  %790 = vmatpush1.bf16.msra.mxu0 0
  %791 = vmatprep.subr.bf16.mxu0 0
  %792 = vmatpush1.bf16.msra.mxu0 0
  %793 = vmatprep.subr.bf16.mxu0 0
  %794 = vmatpush1.bf16.msra.mxu0 0
  %795 = vmatprep.subr.bf16.mxu0 0
  %796 = vmatpush1.bf16.msra.mxu0 0
  %797 = vmatprep.subr.bf16.mxu0 0
  %798 = vmatpush1.bf16.msra.mxu0 0
  %799 = vmatprep.subr.bf16.mxu0 0
  %800 = vmatpush1.bf16.msra.mxu0 0
  %801 = vmatprep.subr.bf16.mxu0 0
  %802 = vmatpush1.bf16.msra.mxu0 0
  %803 = vmatprep.subr.bf16.mxu0 0
  %804 = vmatpush1.bf16.msra.mxu0 0
  %805 = vmatprep.mubr.bf16.mxu0 0
  %806 = vmatmul.mubr.bf16.gmra.mrb[0].mxu0 %v730
  %v807 = vpop.f32.mrb[0].mxu0
  %v808 = vadd.f32 %v49, %v807
  %v809 = vpop.f32.mrb[0].mxu0
  %v810 = vadd.f32 %v53, %v809
  %v811 = vpop.f32.mrb[0].mxu0
  %v812 = vpop.f32.mrb[0].mxu0
  %813 = vdwg.mxu0
  %s814 = scalar_lea.vmem [#allocation2], 224
  %815 = vst [vmem:[%s814] sm:$0xff] %v767
  %816 = vst [vmem:[%s814 + $0x8] sm:$0xff] %v769
  %817 = vst [vmem:[%s814 + $0x10] sm:$0xff] %v808
  %818 = vst [vmem:[%s814 + $0x18] sm:$0xff] %v810
  %v819 = vld [vmem:[%s4] sm:$0xff]
  %v820 = vld [vmem:[%s4 + $0x8] sm:$0xff]
  %v821 = vld [vmem:[%s4 + $0x10] sm:$0xff]
  %v822 = vld [vmem:[%s4 + $0x18] sm:$0xff]
  %v823 = vld [vmem:[%s4 + $0x20] sm:$0xff]
  %v824 = vld [vmem:[%s4 + $0x28] sm:$0xff]
  %v825 = vld [vmem:[%s4 + $0x30] sm:$0xff]
  %v826 = vld [vmem:[%s4 + $0x38] sm:$0xff]
  %v827 = vld [vmem:[%s4 + $0x40] sm:$0xff]
  %v828 = vld [vmem:[%s4 + $0x48] sm:$0xff]
  %v829 = vld [vmem:[%s4 + $0x50] sm:$0xff]
  %v830 = vld [vmem:[%s4 + $0x58] sm:$0xff]
  %v831 = vld [vmem:[%s4 + $0x60] sm:$0xff]
  %v832 = vld [vmem:[%s4 + $0x68] sm:$0xff]
  %v833 = vld [vmem:[%s4 + $0x70] sm:$0xff]
  %v834 = vld [vmem:[%s4 + $0x78] sm:$0xff]
  %v835 = vld [vmem:[%s4 + $0x80] sm:$0xff]
  %v836 = vld [vmem:[%s4 + $0x88] sm:$0xff]
  %v837 = vld [vmem:[%s4 + $0x90] sm:$0xff]
  %v838 = vld [vmem:[%s4 + $0x98] sm:$0xff]
  %v839 = vld [vmem:[%s4 + $0xa0] sm:$0xff]
  %v840 = vld [vmem:[%s4 + $0xa8] sm:$0xff]
  %v841 = vld [vmem:[%s4 + $0xb0] sm:$0xff]
  %v842 = vld [vmem:[%s4 + $0xb8] sm:$0xff]
  %v843 = vld [vmem:[%s4 + $0xc0] sm:$0xff]
  %v844 = vld [vmem:[%s4 + $0xc8] sm:$0xff]
  %v845 = vld [vmem:[%s4 + $0xd0] sm:$0xff]
  %v846 = vld [vmem:[%s4 + $0xd8] sm:$0xff]
  %v847 = vld [vmem:[%s4 + $0xe0] sm:$0xff]
  %v848 = vld [vmem:[%s4 + $0xe8] sm:$0xff]
  %v849 = vld [vmem:[%s4 + $0xf0] sm:$0xff]
  %v850 = vld [vmem:[%s4 + $0xf8] sm:$0xff]
  %v851 = vld [vmem:[#allocation3] sm:$0xff]
  %v852 = vld [vmem:[#allocation4] sm:$0xff]
  %v853 = vld [vmem:[%s1] sm:$0xff]
  %v854 = vld [vmem:[%s2] sm:$0xff]
  %vm855 = vcmp.ne.f32.partialorder %v854, 0.0
  %v856 = vld [vmem:[#allocation2] sm:$0xff]
  %v857 = vld [vmem:[#allocation2 + $0x8] sm:$0xff]
  %v858 = vld [vmem:[#allocation2 + $0x10] sm:$0xff]
  %v859 = vld [vmem:[#allocation2 + $0x18] sm:$0xff]
  %861 = vset.pattern.permute.xlu0 0
  %862 = vperm.xlu0 %861, %v853
  %v863 = vpop.permute.xlu0 %862
  %v865 = vmul.f32 %v851, %v863
  %v866 = vmul.f32 %v852, %v863
  %v867 = vpack.c.bf16 %v865, %v865
  %v900 = vunpack.c.l.b16 %v819
  %v901 = vunpack.c.h.b16 %v819
  %v902 = vunpack.c.l.b16 %v820
  %v903 = vunpack.c.h.b16 %v820
  %v904 = vunpack.c.l.b16 %v821
  %v905 = vunpack.c.h.b16 %v821
  %v906 = vunpack.c.l.b16 %v822
  %v907 = vunpack.c.h.b16 %v822
  %v908 = vunpack.c.l.b16 %v823
  %v909 = vunpack.c.h.b16 %v823
  %v910 = vunpack.c.l.b16 %v824
  %v911 = vunpack.c.h.b16 %v824
  %v912 = vunpack.c.l.b16 %v825
  %v913 = vunpack.c.h.b16 %v825
  %v914 = vunpack.c.l.b16 %v826
  %v915 = vunpack.c.h.b16 %v826
  %v916 = vunpack.c.l.b16 %v827
  %v917 = vunpack.c.h.b16 %v827
  %v918 = vunpack.c.l.b16 %v828
  %v919 = vunpack.c.h.b16 %v828
  %v920 = vunpack.c.l.b16 %v829
  %v921 = vunpack.c.h.b16 %v829
  %v922 = vunpack.c.l.b16 %v830
  %v923 = vunpack.c.h.b16 %v830
  %v924 = vunpack.c.l.b16 %v831
  %v925 = vunpack.c.h.b16 %v831
  %v926 = vunpack.c.l.b16 %v832
  %v927 = vunpack.c.h.b16 %v832
  %v928 = vunpack.c.l.b16 %v833
  %v929 = vunpack.c.h.b16 %v833
  %v930 = vunpack.c.l.b16 %v834
  %v931 = vunpack.c.h.b16 %v834
  %v932 = vunpack.c.l.b16 %v835
  %v933 = vunpack.c.h.b16 %v835
  %v934 = vunpack.c.l.b16 %v836
  %v935 = vunpack.c.h.b16 %v836
  %v936 = vunpack.c.l.b16 %v837
  %v937 = vunpack.c.h.b16 %v837
  %v938 = vunpack.c.l.b16 %v838
  %v939 = vunpack.c.h.b16 %v838
  %v940 = vunpack.c.l.b16 %v839
  %v941 = vunpack.c.h.b16 %v839
  %v942 = vunpack.c.l.b16 %v840
  %v943 = vunpack.c.h.b16 %v840
  %v944 = vunpack.c.l.b16 %v841
  %v945 = vunpack.c.h.b16 %v841
  %v946 = vunpack.c.l.b16 %v842
  %v947 = vunpack.c.h.b16 %v842
  %v948 = vunpack.c.l.b16 %v843
  %v949 = vunpack.c.h.b16 %v843
  %v950 = vunpack.c.l.b16 %v844
  %v951 = vunpack.c.h.b16 %v844
  %v952 = vunpack.c.l.b16 %v845
  %v953 = vunpack.c.h.b16 %v845
  %v954 = vunpack.c.l.b16 %v846
  %v955 = vunpack.c.h.b16 %v846
  %v956 = vunpack.c.l.b16 %v847
  %v957 = vunpack.c.h.b16 %v847
  %v958 = vunpack.c.l.b16 %v848
  %v959 = vunpack.c.h.b16 %v848
  %v960 = vunpack.c.l.b16 %v849
  %v961 = vunpack.c.h.b16 %v849
  %v962 = vunpack.c.l.b16 %v850
  %v963 = vunpack.c.h.b16 %v850
  %v964 = vpack.c.b16 %v904, %v900
  %v965 = vpack.c.b16 %v905, %v901
  %v966 = vpack.c.b16 %v906, %v902
  %v967 = vpack.c.b16 %v907, %v903
  %v968 = vpack.c.b16 %v912, %v908
  %v969 = vpack.c.b16 %v913, %v909
  %v970 = vpack.c.b16 %v914, %v910
  %v971 = vpack.c.b16 %v915, %v911
  %v972 = vpack.c.b16 %v920, %v916
  %v973 = vpack.c.b16 %v921, %v917
  %v974 = vpack.c.b16 %v922, %v918
  %v975 = vpack.c.b16 %v923, %v919
  %v976 = vpack.c.b16 %v928, %v924
  %v977 = vpack.c.b16 %v929, %v925
  %v978 = vpack.c.b16 %v930, %v926
  %v979 = vpack.c.b16 %v931, %v927
  %v980 = vpack.c.b16 %v936, %v932
  %v981 = vpack.c.b16 %v937, %v933
  %v982 = vpack.c.b16 %v938, %v934
  %v983 = vpack.c.b16 %v939, %v935
  %v984 = vpack.c.b16 %v944, %v940
  %v985 = vpack.c.b16 %v945, %v941
  %v986 = vpack.c.b16 %v946, %v942
  %v987 = vpack.c.b16 %v947, %v943
  %v988 = vpack.c.b16 %v952, %v948
  %v989 = vpack.c.b16 %v953, %v949
  %v990 = vpack.c.b16 %v954, %v950
  %v991 = vpack.c.b16 %v955, %v951
  %v992 = vpack.c.b16 %v960, %v956
  %v993 = vpack.c.b16 %v961, %v957
  %v994 = vpack.c.b16 %v962, %v958
  %v995 = vpack.c.b16 %v963, %v959
  %1028 = vmatprep.subr.bf16.mxu0 %v965
  %1029 = vmatpush1.bf16.msra.mxu0 %v964
  %1030 = vmatprep.subr.bf16.mxu0 %v969
  %1031 = vmatpush1.bf16.msra.mxu0 %v968
  %1032 = vmatprep.subr.bf16.mxu0 %v973
  %1033 = vmatpush1.bf16.msra.mxu0 %v972
  %1034 = vmatprep.subr.bf16.mxu0 %v977
  %1035 = vmatpush1.bf16.msra.mxu0 %v976
  %1036 = vmatprep.subr.bf16.mxu0 %v981
  %1037 = vmatpush1.bf16.msra.mxu0 %v980
  %1038 = vmatprep.subr.bf16.mxu0 %v985
  %1039 = vmatpush1.bf16.msra.mxu0 %v984
  %1040 = vmatprep.subr.bf16.mxu0 %v989
  %1041 = vmatpush1.bf16.msra.mxu0 %v988
  %1042 = vmatprep.subr.bf16.mxu0 %v993
  %1043 = vmatpush1.bf16.msra.mxu0 %v992
  %1044 = vmatprep.subr.bf16.mxu0 0
  %1045 = vmatpush1.bf16.msra.mxu0 0
  %1046 = vmatprep.subr.bf16.mxu0 0
  %1047 = vmatpush1.bf16.msra.mxu0 0
  %1048 = vmatprep.subr.bf16.mxu0 0
  %1049 = vmatpush1.bf16.msra.mxu0 0
  %1050 = vmatprep.subr.bf16.mxu0 0
  %1051 = vmatpush1.bf16.msra.mxu0 0
  %1052 = vmatprep.subr.bf16.mxu0 0
  %1053 = vmatpush1.bf16.msra.mxu0 0
  %1054 = vmatprep.subr.bf16.mxu0 0
  %1055 = vmatpush1.bf16.msra.mxu0 0
  %1056 = vmatprep.subr.bf16.mxu0 0
  %1057 = vmatpush1.bf16.msra.mxu0 0
  %1058 = vmatprep.subr.bf16.mxu0 0
  %1059 = vmatpush1.bf16.msra.mxu0 0
  %1060 = vmatprep.mubr.bf16.mxu0 0
  %1061 = vmatmul.mubr.bf16.gmra.mrb[0].mxu0 %v867
  %v1062 = vpop.f32.mrb[0].mxu0
  %v1063 = vadd.f32 0.0, %v1062
  %v1064 = vpop.f32.mrb[0].mxu0
  %v1065 = vadd.f32 0.0, %v1064
  %v1066 = vpop.f32.mrb[0].mxu0
  %v1067 = vpop.f32.mrb[0].mxu0
  %1068 = vdwg.mxu0
  %1069 = vmatprep.subr.bf16.mxu0 %v967
  %1070 = vmatpush1.bf16.msra.mxu0 %v966
  %1071 = vmatprep.subr.bf16.mxu0 %v971
  %1072 = vmatpush1.bf16.msra.mxu0 %v970
  %1073 = vmatprep.subr.bf16.mxu0 %v975
  %1074 = vmatpush1.bf16.msra.mxu0 %v974
  %1075 = vmatprep.subr.bf16.mxu0 %v979
  %1076 = vmatpush1.bf16.msra.mxu0 %v978
  %1077 = vmatprep.subr.bf16.mxu0 %v983
  %1078 = vmatpush1.bf16.msra.mxu0 %v982
  %1079 = vmatprep.subr.bf16.mxu0 %v987
  %1080 = vmatpush1.bf16.msra.mxu0 %v986
  %1081 = vmatprep.subr.bf16.mxu0 %v991
  %1082 = vmatpush1.bf16.msra.mxu0 %v990
  %1083 = vmatprep.subr.bf16.mxu0 %v995
  %1084 = vmatpush1.bf16.msra.mxu0 %v994
  %1085 = vmatprep.subr.bf16.mxu0 0
  %1086 = vmatpush1.bf16.msra.mxu0 0
  %1087 = vmatprep.subr.bf16.mxu0 0
  %1088 = vmatpush1.bf16.msra.mxu0 0
  %1089 = vmatprep.subr.bf16.mxu0 0
  %1090 = vmatpush1.bf16.msra.mxu0 0
  %1091 = vmatprep.subr.bf16.mxu0 0
  %1092 = vmatpush1.bf16.msra.mxu0 0
  %1093 = vmatprep.subr.bf16.mxu0 0
  %1094 = vmatpush1.bf16.msra.mxu0 0
  %1095 = vmatprep.subr.bf16.mxu0 0
  %1096 = vmatpush1.bf16.msra.mxu0 0
  %1097 = vmatprep.subr.bf16.mxu0 0
  %1098 = vmatpush1.bf16.msra.mxu0 0
  %1099 = vmatprep.subr.bf16.mxu0 0
  %1100 = vmatpush1.bf16.msra.mxu0 0
  %1101 = vmatprep.mubr.bf16.mxu0 0
  %1102 = vmatmul.mubr.bf16.gmra.mrb[0].mxu0 %v867
  %v1103 = vpop.f32.mrb[0].mxu0
  %v1104 = vadd.f32 0.0, %v1103
  %v1105 = vpop.f32.mrb[0].mxu0
  %v1106 = vadd.f32 0.0, %v1105
  %v1107 = vpop.f32.mrb[0].mxu0
  %v1108 = vpop.f32.mrb[0].mxu0
  %1109 = vdwg.mxu0
  %v1110 = vadd.f32 %v856, %v1063
  %v1111 = vadd.f32 %v857, %v1065
  %v1112 = vadd.f32 %v858, %v1104
  %v1113 = vadd.f32 %v859, %v1106
  %v1114 = vxor.u32 %v1110, 2147483648
  %v1115 = vmul.f32 %v1114, 1.442695
  %v1116 = vpow.pop %v1115
  %v1117 = vadd.f32 %v1116, 1.0
  %v1118 = vrcp.pop %v1117
  %v1119 = vmul.f32 1.0, %v1118
  %v1120 = vxor.u32 %v1111, 2147483648
  %v1121 = vmul.f32 %v1120, 1.442695
  %v1122 = vpow.pop %v1121
  %v1123 = vadd.f32 %v1122, 1.0
  %v1124 = vrcp.pop %v1123
  %v1125 = vmul.f32 1.0, %v1124
  %v1126 = vtanh.pop %v1112
  %v1127 = vxor.u32 %v1113, 2147483648
  %v1128 = vmul.f32 %v1127, 1.442695
  %v1129 = vpow.pop %v1128
  %v1130 = vadd.f32 %v1129, 1.0
  %v1131 = vrcp.pop %v1130
  %v1132 = vmul.f32 1.0, %v1131
  %v1133 = vmul.f32 %v1125, %v866
  %v1134 = vmul.f32 %v1119, %v1126
  %v1135 = vadd.f32 %v1133, %v1134
  %v1136 = vtanh.pop %v1135
  %v1137 = vmul.f32 %v1132, %v1136
  %v1138 = vsel %vm855, 1, 0
  %1139 = vset.pattern.permute.xlu0 0
  %1140 = vperm.xlu0 %1139, %v1138
  %v1141 = vpop.permute.xlu0 %1140
  %vm1142 = vcmp.eq.s32.totalorder %v1141, 1
  %v1143 = vsel %vm1142, %v1137, 0.0
  %1144 = vst [vmem:[%s6] sm:$0xff] %v1143
  %v1145 = vsel %vm1142, %v1137, %v851
  %v1146 = vsel %vm1142, %v1135, %v852
  %s1147 = scalar_lea.vmem %s1, 8
  %v1148 = vld [vmem:[%s1147] sm:$0xff]
  %s1149 = scalar_lea.vmem %s2, 8
  %v1150 = vld [vmem:[%s1149] sm:$0xff]
  %vm1151 = vcmp.ne.f32.partialorder %v1150, 0.0
  %v1152 = vld [vmem:[%s256] sm:$0xff]
  %v1153 = vld [vmem:[%s256 + $0x8] sm:$0xff]
  %v1154 = vld [vmem:[%s256 + $0x10] sm:$0xff]
  %v1155 = vld [vmem:[%s256 + $0x18] sm:$0xff]
  %1157 = vset.pattern.permute.xlu0 0
  %1158 = vperm.xlu0 %1157, %v1148
  %v1159 = vpop.permute.xlu0 %1158
  %v1161 = vmul.f32 %v1145, %v1159
  %v1162 = vmul.f32 %v1146, %v1159
  %v1163 = vpack.c.bf16 %v1161, %v1161
  %1164 = vmatprep.subr.bf16.mxu0 %v965
  %1165 = vmatpush1.bf16.msra.mxu0 %v964
  %1166 = vmatprep.subr.bf16.mxu0 %v969
  %1167 = vmatpush1.bf16.msra.mxu0 %v968
  %1168 = vmatprep.subr.bf16.mxu0 %v973
  %1169 = vmatpush1.bf16.msra.mxu0 %v972
  %1170 = vmatprep.subr.bf16.mxu0 %v977
  %1171 = vmatpush1.bf16.msra.mxu0 %v976
  %1172 = vmatprep.subr.bf16.mxu0 %v981
  %1173 = vmatpush1.bf16.msra.mxu0 %v980
  %1174 = vmatprep.subr.bf16.mxu0 %v985
  %1175 = vmatpush1.bf16.msra.mxu0 %v984
  %1176 = vmatprep.subr.bf16.mxu0 %v989
  %1177 = vmatpush1.bf16.msra.mxu0 %v988
  %1178 = vmatprep.subr.bf16.mxu0 %v993
  %1179 = vmatpush1.bf16.msra.mxu0 %v992
  %1180 = vmatprep.subr.bf16.mxu0 0
  %1181 = vmatpush1.bf16.msra.mxu0 0
  %1182 = vmatprep.subr.bf16.mxu0 0
  %1183 = vmatpush1.bf16.msra.mxu0 0
  %1184 = vmatprep.subr.bf16.mxu0 0
  %1185 = vmatpush1.bf16.msra.mxu0 0
  %1186 = vmatprep.subr.bf16.mxu0 0
  %1187 = vmatpush1.bf16.msra.mxu0 0
  %1188 = vmatprep.subr.bf16.mxu0 0
  %1189 = vmatpush1.bf16.msra.mxu0 0
  %1190 = vmatprep.subr.bf16.mxu0 0
  %1191 = vmatpush1.bf16.msra.mxu0 0
  %1192 = vmatprep.subr.bf16.mxu0 0
  %1193 = vmatpush1.bf16.msra.mxu0 0
  %1194 = vmatprep.subr.bf16.mxu0 0
  %1195 = vmatpush1.bf16.msra.mxu0 0
  %1196 = vmatprep.mubr.bf16.mxu0 0
  %1197 = vmatmul.mubr.bf16.gmra.mrb[0].mxu0 %v1163
  %v1198 = vpop.f32.mrb[0].mxu0
  %v1199 = vadd.f32 0.0, %v1198
  %v1200 = vpop.f32.mrb[0].mxu0
  %v1201 = vadd.f32 0.0, %v1200
  %v1202 = vpop.f32.mrb[0].mxu0
  %v1203 = vpop.f32.mrb[0].mxu0
  %1204 = vdwg.mxu0
  %1205 = vmatprep.subr.bf16.mxu0 %v967
  %1206 = vmatpush1.bf16.msra.mxu0 %v966
  %1207 = vmatprep.subr.bf16.mxu0 %v971
  %1208 = vmatpush1.bf16.msra.mxu0 %v970
  %1209 = vmatprep.subr.bf16.mxu0 %v975
  %1210 = vmatpush1.bf16.msra.mxu0 %v974
  %1211 = vmatprep.subr.bf16.mxu0 %v979
  %1212 = vmatpush1.bf16.msra.mxu0 %v978
  %1213 = vmatprep.subr.bf16.mxu0 %v983
  %1214 = vmatpush1.bf16.msra.mxu0 %v982
  %1215 = vmatprep.subr.bf16.mxu0 %v987
  %1216 = vmatpush1.bf16.msra.mxu0 %v986
  %1217 = vmatprep.subr.bf16.mxu0 %v991
  %1218 = vmatpush1.bf16.msra.mxu0 %v990
  %1219 = vmatprep.subr.bf16.mxu0 %v995
  %1220 = vmatpush1.bf16.msra.mxu0 %v994
  %1221 = vmatprep.subr.bf16.mxu0 0
  %1222 = vmatpush1.bf16.msra.mxu0 0
  %1223 = vmatprep.subr.bf16.mxu0 0
  %1224 = vmatpush1.bf16.msra.mxu0 0
  %1225 = vmatprep.subr.bf16.mxu0 0
  %1226 = vmatpush1.bf16.msra.mxu0 0
  %1227 = vmatprep.subr.bf16.mxu0 0
  %1228 = vmatpush1.bf16.msra.mxu0 0
  %1229 = vmatprep.subr.bf16.mxu0 0
  %1230 = vmatpush1.bf16.msra.mxu0 0
  %1231 = vmatprep.subr.bf16.mxu0 0
  %1232 = vmatpush1.bf16.msra.mxu0 0
  %1233 = vmatprep.subr.bf16.mxu0 0
  %1234 = vmatpush1.bf16.msra.mxu0 0
  %1235 = vmatprep.subr.bf16.mxu0 0
  %1236 = vmatpush1.bf16.msra.mxu0 0
  %1237 = vmatprep.mubr.bf16.mxu0 0
  %1238 = vmatmul.mubr.bf16.gmra.mrb[0].mxu0 %v1163
  %v1239 = vpop.f32.mrb[0].mxu0
  %v1240 = vadd.f32 0.0, %v1239
  %v1241 = vpop.f32.mrb[0].mxu0
  %v1242 = vadd.f32 0.0, %v1241
  %v1243 = vpop.f32.mrb[0].mxu0
  %v1244 = vpop.f32.mrb[0].mxu0
  %1245 = vdwg.mxu0
  %v1246 = vadd.f32 %v1152, %v1199
  %v1247 = vadd.f32 %v1153, %v1201
  %v1248 = vadd.f32 %v1154, %v1240
  %v1249 = vadd.f32 %v1155, %v1242
  %v1250 = vxor.u32 %v1246, 2147483648
  %v1251 = vmul.f32 %v1250, 1.442695
  %v1252 = vpow.pop %v1251
  %v1253 = vadd.f32 %v1252, 1.0
  %v1254 = vrcp.pop %v1253
  %v1255 = vmul.f32 1.0, %v1254
  %v1256 = vxor.u32 %v1247, 2147483648
  %v1257 = vmul.f32 %v1256, 1.442695
  %v1258 = vpow.pop %v1257
  %v1259 = vadd.f32 %v1258, 1.0
  %v1260 = vrcp.pop %v1259
  %v1261 = vmul.f32 1.0, %v1260
  %v1262 = vtanh.pop %v1248
  %v1263 = vxor.u32 %v1249, 2147483648
  %v1264 = vmul.f32 %v1263, 1.442695
  %v1265 = vpow.pop %v1264
  %v1266 = vadd.f32 %v1265, 1.0
  %v1267 = vrcp.pop %v1266
  %v1268 = vmul.f32 1.0, %v1267
  %v1269 = vmul.f32 %v1261, %v1162
  %v1270 = vmul.f32 %v1255, %v1262
  %v1271 = vadd.f32 %v1269, %v1270
  %v1272 = vtanh.pop %v1271
  %v1273 = vmul.f32 %v1268, %v1272
  %v1274 = vsel %vm1151, 1, 0
  %1275 = vset.pattern.permute.xlu0 0
  %1276 = vperm.xlu0 %1275, %v1274
  %v1277 = vpop.permute.xlu0 %1276
  %vm1278 = vcmp.eq.s32.totalorder %v1277, 1
  %v1279 = vsel %vm1278, %v1273, 0.0
  %s1280 = scalar_lea.vmem %s6, 8
  %1281 = vst [vmem:[%s1280] sm:$0xff] %v1279
  %v1282 = vsel %vm1278, %v1273, %v1145
  %v1283 = vsel %vm1278, %v1271, %v1146
  %s1284 = scalar_lea.vmem %s1, 16
  %v1285 = vld [vmem:[%s1284] sm:$0xff]
  %s1286 = scalar_lea.vmem %s2, 16
  %v1287 = vld [vmem:[%s1286] sm:$0xff]
  %vm1288 = vcmp.ne.f32.partialorder %v1287, 0.0
  %v1289 = vld [vmem:[%s349] sm:$0xff]
  %v1290 = vld [vmem:[%s349 + $0x8] sm:$0xff]
  %v1291 = vld [vmem:[%s349 + $0x10] sm:$0xff]
  %v1292 = vld [vmem:[%s349 + $0x18] sm:$0xff]
  %1294 = vset.pattern.permute.xlu0 0
  %1295 = vperm.xlu0 %1294, %v1285
  %v1296 = vpop.permute.xlu0 %1295
  %v1298 = vmul.f32 %v1282, %v1296
  %v1299 = vmul.f32 %v1283, %v1296
  %v1300 = vpack.c.bf16 %v1298, %v1298
  %1301 = vmatprep.subr.bf16.mxu0 %v965
  %1302 = vmatpush1.bf16.msra.mxu0 %v964
  %1303 = vmatprep.subr.bf16.mxu0 %v969
  %1304 = vmatpush1.bf16.msra.mxu0 %v968
  %1305 = vmatprep.subr.bf16.mxu0 %v973
  %1306 = vmatpush1.bf16.msra.mxu0 %v972
  %1307 = vmatprep.subr.bf16.mxu0 %v977
  %1308 = vmatpush1.bf16.msra.mxu0 %v976
  %1309 = vmatprep.subr.bf16.mxu0 %v981
  %1310 = vmatpush1.bf16.msra.mxu0 %v980
  %1311 = vmatprep.subr.bf16.mxu0 %v985
  %1312 = vmatpush1.bf16.msra.mxu0 %v984
  %1313 = vmatprep.subr.bf16.mxu0 %v989
  %1314 = vmatpush1.bf16.msra.mxu0 %v988
  %1315 = vmatprep.subr.bf16.mxu0 %v993
  %1316 = vmatpush1.bf16.msra.mxu0 %v992
  %1317 = vmatprep.subr.bf16.mxu0 0
  %1318 = vmatpush1.bf16.msra.mxu0 0
  %1319 = vmatprep.subr.bf16.mxu0 0
  %1320 = vmatpush1.bf16.msra.mxu0 0
  %1321 = vmatprep.subr.bf16.mxu0 0
  %1322 = vmatpush1.bf16.msra.mxu0 0
  %1323 = vmatprep.subr.bf16.mxu0 0
  %1324 = vmatpush1.bf16.msra.mxu0 0
  %1325 = vmatprep.subr.bf16.mxu0 0
  %1326 = vmatpush1.bf16.msra.mxu0 0
  %1327 = vmatprep.subr.bf16.mxu0 0
  %1328 = vmatpush1.bf16.msra.mxu0 0
  %1329 = vmatprep.subr.bf16.mxu0 0
  %1330 = vmatpush1.bf16.msra.mxu0 0
  %1331 = vmatprep.subr.bf16.mxu0 0
  %1332 = vmatpush1.bf16.msra.mxu0 0
  %1333 = vmatprep.mubr.bf16.mxu0 0
  %1334 = vmatmul.mubr.bf16.gmra.mrb[0].mxu0 %v1300
  %v1335 = vpop.f32.mrb[0].mxu0
  %v1336 = vadd.f32 0.0, %v1335
  %v1337 = vpop.f32.mrb[0].mxu0
  %v1338 = vadd.f32 0.0, %v1337
  %v1339 = vpop.f32.mrb[0].mxu0
  %v1340 = vpop.f32.mrb[0].mxu0
  %1341 = vdwg.mxu0
  %1342 = vmatprep.subr.bf16.mxu0 %v967
  %1343 = vmatpush1.bf16.msra.mxu0 %v966
  %1344 = vmatprep.subr.bf16.mxu0 %v971
  %1345 = vmatpush1.bf16.msra.mxu0 %v970
  %1346 = vmatprep.subr.bf16.mxu0 %v975
  %1347 = vmatpush1.bf16.msra.mxu0 %v974
  %1348 = vmatprep.subr.bf16.mxu0 %v979
  %1349 = vmatpush1.bf16.msra.mxu0 %v978
  %1350 = vmatprep.subr.bf16.mxu0 %v983
  %1351 = vmatpush1.bf16.msra.mxu0 %v982
  %1352 = vmatprep.subr.bf16.mxu0 %v987
  %1353 = vmatpush1.bf16.msra.mxu0 %v986
  %1354 = vmatprep.subr.bf16.mxu0 %v991
  %1355 = vmatpush1.bf16.msra.mxu0 %v990
  %1356 = vmatprep.subr.bf16.mxu0 %v995
  %1357 = vmatpush1.bf16.msra.mxu0 %v994
  %1358 = vmatprep.subr.bf16.mxu0 0
  %1359 = vmatpush1.bf16.msra.mxu0 0
  %1360 = vmatprep.subr.bf16.mxu0 0
  %1361 = vmatpush1.bf16.msra.mxu0 0
  %1362 = vmatprep.subr.bf16.mxu0 0
  %1363 = vmatpush1.bf16.msra.mxu0 0
  %1364 = vmatprep.subr.bf16.mxu0 0
  %1365 = vmatpush1.bf16.msra.mxu0 0
  %1366 = vmatprep.subr.bf16.mxu0 0
  %1367 = vmatpush1.bf16.msra.mxu0 0
  %1368 = vmatprep.subr.bf16.mxu0 0
  %1369 = vmatpush1.bf16.msra.mxu0 0
  %1370 = vmatprep.subr.bf16.mxu0 0
  %1371 = vmatpush1.bf16.msra.mxu0 0
  %1372 = vmatprep.subr.bf16.mxu0 0
  %1373 = vmatpush1.bf16.msra.mxu0 0
  %1374 = vmatprep.mubr.bf16.mxu0 0
  %1375 = vmatmul.mubr.bf16.gmra.mrb[0].mxu0 %v1300
  %v1376 = vpop.f32.mrb[0].mxu0
  %v1377 = vadd.f32 0.0, %v1376
  %v1378 = vpop.f32.mrb[0].mxu0
  %v1379 = vadd.f32 0.0, %v1378
  %v1380 = vpop.f32.mrb[0].mxu0
  %v1381 = vpop.f32.mrb[0].mxu0
  %1382 = vdwg.mxu0
  %v1383 = vadd.f32 %v1289, %v1336
  %v1384 = vadd.f32 %v1290, %v1338
  %v1385 = vadd.f32 %v1291, %v1377
  %v1386 = vadd.f32 %v1292, %v1379
  %v1387 = vxor.u32 %v1383, 2147483648
  %v1388 = vmul.f32 %v1387, 1.442695
  %v1389 = vpow.pop %v1388
  %v1390 = vadd.f32 %v1389, 1.0
  %v1391 = vrcp.pop %v1390
  %v1392 = vmul.f32 1.0, %v1391
  %v1393 = vxor.u32 %v1384, 2147483648
  %v1394 = vmul.f32 %v1393, 1.442695
  %v1395 = vpow.pop %v1394
  %v1396 = vadd.f32 %v1395, 1.0
  %v1397 = vrcp.pop %v1396
  %v1398 = vmul.f32 1.0, %v1397
  %v1399 = vtanh.pop %v1385
  %v1400 = vxor.u32 %v1386, 2147483648
  %v1401 = vmul.f32 %v1400, 1.442695
  %v1402 = vpow.pop %v1401
  %v1403 = vadd.f32 %v1402, 1.0
  %v1404 = vrcp.pop %v1403
  %v1405 = vmul.f32 1.0, %v1404
  %v1406 = vmul.f32 %v1398, %v1299
  %v1407 = vmul.f32 %v1392, %v1399
  %v1408 = vadd.f32 %v1406, %v1407
  %v1409 = vtanh.pop %v1408
  %v1410 = vmul.f32 %v1405, %v1409
  %v1411 = vsel %vm1288, 1, 0
  %1412 = vset.pattern.permute.xlu0 0
  %1413 = vperm.xlu0 %1412, %v1411
  %v1414 = vpop.permute.xlu0 %1413
  %vm1415 = vcmp.eq.s32.totalorder %v1414, 1
  %v1416 = vsel %vm1415, %v1410, 0.0
  %s1417 = scalar_lea.vmem %s6, 16
  %1418 = vst [vmem:[%s1417] sm:$0xff] %v1416
  %v1419 = vsel %vm1415, %v1410, %v1282
  %v1420 = vsel %vm1415, %v1408, %v1283
  %s1421 = scalar_lea.vmem %s1, 24
  %v1422 = vld [vmem:[%s1421] sm:$0xff]
  %s1423 = scalar_lea.vmem %s2, 24
  %v1424 = vld [vmem:[%s1423] sm:$0xff]
  %vm1425 = vcmp.ne.f32.partialorder %v1424, 0.0
  %v1426 = vld [vmem:[%s442] sm:$0xff]
  %v1427 = vld [vmem:[%s442 + $0x8] sm:$0xff]
  %v1428 = vld [vmem:[%s442 + $0x10] sm:$0xff]
  %v1429 = vld [vmem:[%s442 + $0x18] sm:$0xff]
  %1431 = vset.pattern.permute.xlu0 0
  %1432 = vperm.xlu0 %1431, %v1422
  %v1433 = vpop.permute.xlu0 %1432
  %v1435 = vmul.f32 %v1419, %v1433
  %v1436 = vmul.f32 %v1420, %v1433
  %v1437 = vpack.c.bf16 %v1435, %v1435
  %1438 = vmatprep.subr.bf16.mxu0 %v965
  %1439 = vmatpush1.bf16.msra.mxu0 %v964
  %1440 = vmatprep.subr.bf16.mxu0 %v969
  %1441 = vmatpush1.bf16.msra.mxu0 %v968
  %1442 = vmatprep.subr.bf16.mxu0 %v973
  %1443 = vmatpush1.bf16.msra.mxu0 %v972
  %1444 = vmatprep.subr.bf16.mxu0 %v977
  %1445 = vmatpush1.bf16.msra.mxu0 %v976
  %1446 = vmatprep.subr.bf16.mxu0 %v981
  %1447 = vmatpush1.bf16.msra.mxu0 %v980
  %1448 = vmatprep.subr.bf16.mxu0 %v985
  %1449 = vmatpush1.bf16.msra.mxu0 %v984
  %1450 = vmatprep.subr.bf16.mxu0 %v989
  %1451 = vmatpush1.bf16.msra.mxu0 %v988
  %1452 = vmatprep.subr.bf16.mxu0 %v993
  %1453 = vmatpush1.bf16.msra.mxu0 %v992
  %1454 = vmatprep.subr.bf16.mxu0 0
  %1455 = vmatpush1.bf16.msra.mxu0 0
  %1456 = vmatprep.subr.bf16.mxu0 0
  %1457 = vmatpush1.bf16.msra.mxu0 0
  %1458 = vmatprep.subr.bf16.mxu0 0
  %1459 = vmatpush1.bf16.msra.mxu0 0
  %1460 = vmatprep.subr.bf16.mxu0 0
  %1461 = vmatpush1.bf16.msra.mxu0 0
  %1462 = vmatprep.subr.bf16.mxu0 0
  %1463 = vmatpush1.bf16.msra.mxu0 0
  %1464 = vmatprep.subr.bf16.mxu0 0
  %1465 = vmatpush1.bf16.msra.mxu0 0
  %1466 = vmatprep.subr.bf16.mxu0 0
  %1467 = vmatpush1.bf16.msra.mxu0 0
  %1468 = vmatprep.subr.bf16.mxu0 0
  %1469 = vmatpush1.bf16.msra.mxu0 0
  %1470 = vmatprep.mubr.bf16.mxu0 0
  %1471 = vmatmul.mubr.bf16.gmra.mrb[0].mxu0 %v1437
  %v1472 = vpop.f32.mrb[0].mxu0
  %v1473 = vadd.f32 0.0, %v1472
  %v1474 = vpop.f32.mrb[0].mxu0
  %v1475 = vadd.f32 0.0, %v1474
  %v1476 = vpop.f32.mrb[0].mxu0
  %v1477 = vpop.f32.mrb[0].mxu0
  %1478 = vdwg.mxu0
  %1479 = vmatprep.subr.bf16.mxu0 %v967
  %1480 = vmatpush1.bf16.msra.mxu0 %v966
  %1481 = vmatprep.subr.bf16.mxu0 %v971
  %1482 = vmatpush1.bf16.msra.mxu0 %v970
  %1483 = vmatprep.subr.bf16.mxu0 %v975
  %1484 = vmatpush1.bf16.msra.mxu0 %v974
  %1485 = vmatprep.subr.bf16.mxu0 %v979
  %1486 = vmatpush1.bf16.msra.mxu0 %v978
  %1487 = vmatprep.subr.bf16.mxu0 %v983
  %1488 = vmatpush1.bf16.msra.mxu0 %v982
  %1489 = vmatprep.subr.bf16.mxu0 %v987
  %1490 = vmatpush1.bf16.msra.mxu0 %v986
  %1491 = vmatprep.subr.bf16.mxu0 %v991
  %1492 = vmatpush1.bf16.msra.mxu0 %v990
  %1493 = vmatprep.subr.bf16.mxu0 %v995
  %1494 = vmatpush1.bf16.msra.mxu0 %v994
  %1495 = vmatprep.subr.bf16.mxu0 0
  %1496 = vmatpush1.bf16.msra.mxu0 0
  %1497 = vmatprep.subr.bf16.mxu0 0
  %1498 = vmatpush1.bf16.msra.mxu0 0
  %1499 = vmatprep.subr.bf16.mxu0 0
  %1500 = vmatpush1.bf16.msra.mxu0 0
  %1501 = vmatprep.subr.bf16.mxu0 0
  %1502 = vmatpush1.bf16.msra.mxu0 0
  %1503 = vmatprep.subr.bf16.mxu0 0
  %1504 = vmatpush1.bf16.msra.mxu0 0
  %1505 = vmatprep.subr.bf16.mxu0 0
  %1506 = vmatpush1.bf16.msra.mxu0 0
  %1507 = vmatprep.subr.bf16.mxu0 0
  %1508 = vmatpush1.bf16.msra.mxu0 0
  %1509 = vmatprep.subr.bf16.mxu0 0
  %1510 = vmatpush1.bf16.msra.mxu0 0
  %1511 = vmatprep.mubr.bf16.mxu0 0
  %1512 = vmatmul.mubr.bf16.gmra.mrb[0].mxu0 %v1437
  %v1513 = vpop.f32.mrb[0].mxu0
  %v1514 = vadd.f32 0.0, %v1513
  %v1515 = vpop.f32.mrb[0].mxu0
  %v1516 = vadd.f32 0.0, %v1515
  %v1517 = vpop.f32.mrb[0].mxu0
  %v1518 = vpop.f32.mrb[0].mxu0
  %1519 = vdwg.mxu0
  %v1520 = vadd.f32 %v1426, %v1473
  %v1521 = vadd.f32 %v1427, %v1475
  %v1522 = vadd.f32 %v1428, %v1514
  %v1523 = vadd.f32 %v1429, %v1516
  %v1524 = vxor.u32 %v1520, 2147483648
  %v1525 = vmul.f32 %v1524, 1.442695
  %v1526 = vpow.pop %v1525
  %v1527 = vadd.f32 %v1526, 1.0
  %v1528 = vrcp.pop %v1527
  %v1529 = vmul.f32 1.0, %v1528
  %v1530 = vxor.u32 %v1521, 2147483648
  %v1531 = vmul.f32 %v1530, 1.442695
  %v1532 = vpow.pop %v1531
  %v1533 = vadd.f32 %v1532, 1.0
  %v1534 = vrcp.pop %v1533
  %v1535 = vmul.f32 1.0, %v1534
  %v1536 = vtanh.pop %v1522
  %v1537 = vxor.u32 %v1523, 2147483648
  %v1538 = vmul.f32 %v1537, 1.442695
  %v1539 = vpow.pop %v1538
  %v1540 = vadd.f32 %v1539, 1.0
  %v1541 = vrcp.pop %v1540
  %v1542 = vmul.f32 1.0, %v1541
  %v1543 = vmul.f32 %v1535, %v1436
  %v1544 = vmul.f32 %v1529, %v1536
  %v1545 = vadd.f32 %v1543, %v1544
  %v1546 = vtanh.pop %v1545
  %v1547 = vmul.f32 %v1542, %v1546
  %v1548 = vsel %vm1425, 1, 0
  %1549 = vset.pattern.permute.xlu0 0
  %1550 = vperm.xlu0 %1549, %v1548
  %v1551 = vpop.permute.xlu0 %1550
  %vm1552 = vcmp.eq.s32.totalorder %v1551, 1
  %v1553 = vsel %vm1552, %v1547, 0.0
  %s1554 = scalar_lea.vmem %s6, 24
  %1555 = vst [vmem:[%s1554] sm:$0xff] %v1553
  %v1556 = vsel %vm1552, %v1547, %v1419
  %v1557 = vsel %vm1552, %v1545, %v1420
  %s1558 = scalar_lea.vmem %s1, 32
  %v1559 = vld [vmem:[%s1558] sm:$0xff]
  %s1560 = scalar_lea.vmem %s2, 32
  %v1561 = vld [vmem:[%s1560] sm:$0xff]
  %vm1562 = vcmp.ne.f32.partialorder %v1561, 0.0
  %v1563 = vld [vmem:[%s535] sm:$0xff]
  %v1564 = vld [vmem:[%s535 + $0x8] sm:$0xff]
  %v1565 = vld [vmem:[%s535 + $0x10] sm:$0xff]
  %v1566 = vld [vmem:[%s535 + $0x18] sm:$0xff]
  %1568 = vset.pattern.permute.xlu0 0
  %1569 = vperm.xlu0 %1568, %v1559
  %v1570 = vpop.permute.xlu0 %1569
  %v1572 = vmul.f32 %v1556, %v1570
  %v1573 = vmul.f32 %v1557, %v1570
  %v1574 = vpack.c.bf16 %v1572, %v1572
  %1575 = vmatprep.subr.bf16.mxu0 %v965
  %1576 = vmatpush1.bf16.msra.mxu0 %v964
  %1577 = vmatprep.subr.bf16.mxu0 %v969
  %1578 = vmatpush1.bf16.msra.mxu0 %v968
  %1579 = vmatprep.subr.bf16.mxu0 %v973
  %1580 = vmatpush1.bf16.msra.mxu0 %v972
  %1581 = vmatprep.subr.bf16.mxu0 %v977
  %1582 = vmatpush1.bf16.msra.mxu0 %v976
  %1583 = vmatprep.subr.bf16.mxu0 %v981
  %1584 = vmatpush1.bf16.msra.mxu0 %v980
  %1585 = vmatprep.subr.bf16.mxu0 %v985
  %1586 = vmatpush1.bf16.msra.mxu0 %v984
  %1587 = vmatprep.subr.bf16.mxu0 %v989
  %1588 = vmatpush1.bf16.msra.mxu0 %v988
  %1589 = vmatprep.subr.bf16.mxu0 %v993
  %1590 = vmatpush1.bf16.msra.mxu0 %v992
  %1591 = vmatprep.subr.bf16.mxu0 0
  %1592 = vmatpush1.bf16.msra.mxu0 0
  %1593 = vmatprep.subr.bf16.mxu0 0
  %1594 = vmatpush1.bf16.msra.mxu0 0
  %1595 = vmatprep.subr.bf16.mxu0 0
  %1596 = vmatpush1.bf16.msra.mxu0 0
  %1597 = vmatprep.subr.bf16.mxu0 0
  %1598 = vmatpush1.bf16.msra.mxu0 0
  %1599 = vmatprep.subr.bf16.mxu0 0
  %1600 = vmatpush1.bf16.msra.mxu0 0
  %1601 = vmatprep.subr.bf16.mxu0 0
  %1602 = vmatpush1.bf16.msra.mxu0 0
  %1603 = vmatprep.subr.bf16.mxu0 0
  %1604 = vmatpush1.bf16.msra.mxu0 0
  %1605 = vmatprep.subr.bf16.mxu0 0
  %1606 = vmatpush1.bf16.msra.mxu0 0
  %1607 = vmatprep.mubr.bf16.mxu0 0
  %1608 = vmatmul.mubr.bf16.gmra.mrb[0].mxu0 %v1574
  %v1609 = vpop.f32.mrb[0].mxu0
  %v1610 = vadd.f32 0.0, %v1609
  %v1611 = vpop.f32.mrb[0].mxu0
  %v1612 = vadd.f32 0.0, %v1611
  %v1613 = vpop.f32.mrb[0].mxu0
  %v1614 = vpop.f32.mrb[0].mxu0
  %1615 = vdwg.mxu0
  %1616 = vmatprep.subr.bf16.mxu0 %v967
  %1617 = vmatpush1.bf16.msra.mxu0 %v966
  %1618 = vmatprep.subr.bf16.mxu0 %v971
  %1619 = vmatpush1.bf16.msra.mxu0 %v970
  %1620 = vmatprep.subr.bf16.mxu0 %v975
  %1621 = vmatpush1.bf16.msra.mxu0 %v974
  %1622 = vmatprep.subr.bf16.mxu0 %v979
  %1623 = vmatpush1.bf16.msra.mxu0 %v978
  %1624 = vmatprep.subr.bf16.mxu0 %v983
  %1625 = vmatpush1.bf16.msra.mxu0 %v982
  %1626 = vmatprep.subr.bf16.mxu0 %v987
  %1627 = vmatpush1.bf16.msra.mxu0 %v986
  %1628 = vmatprep.subr.bf16.mxu0 %v991
  %1629 = vmatpush1.bf16.msra.mxu0 %v990
  %1630 = vmatprep.subr.bf16.mxu0 %v995
  %1631 = vmatpush1.bf16.msra.mxu0 %v994
  %1632 = vmatprep.subr.bf16.mxu0 0
  %1633 = vmatpush1.bf16.msra.mxu0 0
  %1634 = vmatprep.subr.bf16.mxu0 0
  %1635 = vmatpush1.bf16.msra.mxu0 0
  %1636 = vmatprep.subr.bf16.mxu0 0
  %1637 = vmatpush1.bf16.msra.mxu0 0
  %1638 = vmatprep.subr.bf16.mxu0 0
  %1639 = vmatpush1.bf16.msra.mxu0 0
  %1640 = vmatprep.subr.bf16.mxu0 0
  %1641 = vmatpush1.bf16.msra.mxu0 0
  %1642 = vmatprep.subr.bf16.mxu0 0
  %1643 = vmatpush1.bf16.msra.mxu0 0
  %1644 = vmatprep.subr.bf16.mxu0 0
  %1645 = vmatpush1.bf16.msra.mxu0 0
  %1646 = vmatprep.subr.bf16.mxu0 0
  %1647 = vmatpush1.bf16.msra.mxu0 0
  %1648 = vmatprep.mubr.bf16.mxu0 0
  %1649 = vmatmul.mubr.bf16.gmra.mrb[0].mxu0 %v1574
  %v1650 = vpop.f32.mrb[0].mxu0
  %v1651 = vadd.f32 0.0, %v1650
  %v1652 = vpop.f32.mrb[0].mxu0
  %v1653 = vadd.f32 0.0, %v1652
  %v1654 = vpop.f32.mrb[0].mxu0
  %v1655 = vpop.f32.mrb[0].mxu0
  %1656 = vdwg.mxu0
  %v1657 = vadd.f32 %v1563, %v1610
  %v1658 = vadd.f32 %v1564, %v1612
  %v1659 = vadd.f32 %v1565, %v1651
  %v1660 = vadd.f32 %v1566, %v1653
  %v1661 = vxor.u32 %v1657, 2147483648
  %v1662 = vmul.f32 %v1661, 1.442695
  %v1663 = vpow.pop %v1662
  %v1664 = vadd.f32 %v1663, 1.0
  %v1665 = vrcp.pop %v1664
  %v1666 = vmul.f32 1.0, %v1665
  %v1667 = vxor.u32 %v1658, 2147483648
  %v1668 = vmul.f32 %v1667, 1.442695
  %v1669 = vpow.pop %v1668
  %v1670 = vadd.f32 %v1669, 1.0
  %v1671 = vrcp.pop %v1670
  %v1672 = vmul.f32 1.0, %v1671
  %v1673 = vtanh.pop %v1659
  %v1674 = vxor.u32 %v1660, 2147483648
  %v1675 = vmul.f32 %v1674, 1.442695
  %v1676 = vpow.pop %v1675
  %v1677 = vadd.f32 %v1676, 1.0
  %v1678 = vrcp.pop %v1677
  %v1679 = vmul.f32 1.0, %v1678
  %v1680 = vmul.f32 %v1672, %v1573
  %v1681 = vmul.f32 %v1666, %v1673
  %v1682 = vadd.f32 %v1680, %v1681
  %v1683 = vtanh.pop %v1682
  %v1684 = vmul.f32 %v1679, %v1683
  %v1685 = vsel %vm1562, 1, 0
  %1686 = vset.pattern.permute.xlu0 0
  %1687 = vperm.xlu0 %1686, %v1685
  %v1688 = vpop.permute.xlu0 %1687
  %vm1689 = vcmp.eq.s32.totalorder %v1688, 1
  %v1690 = vsel %vm1689, %v1684, 0.0
  %s1691 = scalar_lea.vmem %s6, 32
  %1692 = vst [vmem:[%s1691] sm:$0xff] %v1690
  %v1693 = vsel %vm1689, %v1684, %v1556
  %v1694 = vsel %vm1689, %v1682, %v1557
  %s1695 = scalar_lea.vmem %s1, 40
  %v1696 = vld [vmem:[%s1695] sm:$0xff]
  %s1697 = scalar_lea.vmem %s2, 40
  %v1698 = vld [vmem:[%s1697] sm:$0xff]
  %vm1699 = vcmp.ne.f32.partialorder %v1698, 0.0
  %v1700 = vld [vmem:[%s628] sm:$0xff]
  %v1701 = vld [vmem:[%s628 + $0x8] sm:$0xff]
  %v1702 = vld [vmem:[%s628 + $0x10] sm:$0xff]
  %v1703 = vld [vmem:[%s628 + $0x18] sm:$0xff]
  %1705 = vset.pattern.permute.xlu0 0
  %1706 = vperm.xlu0 %1705, %v1696
  %v1707 = vpop.permute.xlu0 %1706
  %v1709 = vmul.f32 %v1693, %v1707
  %v1710 = vmul.f32 %v1694, %v1707
  %v1711 = vpack.c.bf16 %v1709, %v1709
  %1712 = vmatprep.subr.bf16.mxu0 %v965
  %1713 = vmatpush1.bf16.msra.mxu0 %v964
  %1714 = vmatprep.subr.bf16.mxu0 %v969
  %1715 = vmatpush1.bf16.msra.mxu0 %v968
  %1716 = vmatprep.subr.bf16.mxu0 %v973
  %1717 = vmatpush1.bf16.msra.mxu0 %v972
  %1718 = vmatprep.subr.bf16.mxu0 %v977
  %1719 = vmatpush1.bf16.msra.mxu0 %v976
  %1720 = vmatprep.subr.bf16.mxu0 %v981
  %1721 = vmatpush1.bf16.msra.mxu0 %v980
  %1722 = vmatprep.subr.bf16.mxu0 %v985
  %1723 = vmatpush1.bf16.msra.mxu0 %v984
  %1724 = vmatprep.subr.bf16.mxu0 %v989
  %1725 = vmatpush1.bf16.msra.mxu0 %v988
  %1726 = vmatprep.subr.bf16.mxu0 %v993
  %1727 = vmatpush1.bf16.msra.mxu0 %v992
  %1728 = vmatprep.subr.bf16.mxu0 0
  %1729 = vmatpush1.bf16.msra.mxu0 0
  %1730 = vmatprep.subr.bf16.mxu0 0
  %1731 = vmatpush1.bf16.msra.mxu0 0
  %1732 = vmatprep.subr.bf16.mxu0 0
  %1733 = vmatpush1.bf16.msra.mxu0 0
  %1734 = vmatprep.subr.bf16.mxu0 0
  %1735 = vmatpush1.bf16.msra.mxu0 0
  %1736 = vmatprep.subr.bf16.mxu0 0
  %1737 = vmatpush1.bf16.msra.mxu0 0
  %1738 = vmatprep.subr.bf16.mxu0 0
  %1739 = vmatpush1.bf16.msra.mxu0 0
  %1740 = vmatprep.subr.bf16.mxu0 0
  %1741 = vmatpush1.bf16.msra.mxu0 0
  %1742 = vmatprep.subr.bf16.mxu0 0
  %1743 = vmatpush1.bf16.msra.mxu0 0
  %1744 = vmatprep.mubr.bf16.mxu0 0
  %1745 = vmatmul.mubr.bf16.gmra.mrb[0].mxu0 %v1711
  %v1746 = vpop.f32.mrb[0].mxu0
  %v1747 = vadd.f32 0.0, %v1746
  %v1748 = vpop.f32.mrb[0].mxu0
  %v1749 = vadd.f32 0.0, %v1748
  %v1750 = vpop.f32.mrb[0].mxu0
  %v1751 = vpop.f32.mrb[0].mxu0
  %1752 = vdwg.mxu0
  %1753 = vmatprep.subr.bf16.mxu0 %v967
  %1754 = vmatpush1.bf16.msra.mxu0 %v966
  %1755 = vmatprep.subr.bf16.mxu0 %v971
  %1756 = vmatpush1.bf16.msra.mxu0 %v970
  %1757 = vmatprep.subr.bf16.mxu0 %v975
  %1758 = vmatpush1.bf16.msra.mxu0 %v974
  %1759 = vmatprep.subr.bf16.mxu0 %v979
  %1760 = vmatpush1.bf16.msra.mxu0 %v978
  %1761 = vmatprep.subr.bf16.mxu0 %v983
  %1762 = vmatpush1.bf16.msra.mxu0 %v982
  %1763 = vmatprep.subr.bf16.mxu0 %v987
  %1764 = vmatpush1.bf16.msra.mxu0 %v986
  %1765 = vmatprep.subr.bf16.mxu0 %v991
  %1766 = vmatpush1.bf16.msra.mxu0 %v990
  %1767 = vmatprep.subr.bf16.mxu0 %v995
  %1768 = vmatpush1.bf16.msra.mxu0 %v994
  %1769 = vmatprep.subr.bf16.mxu0 0
  %1770 = vmatpush1.bf16.msra.mxu0 0
  %1771 = vmatprep.subr.bf16.mxu0 0
  %1772 = vmatpush1.bf16.msra.mxu0 0
  %1773 = vmatprep.subr.bf16.mxu0 0
  %1774 = vmatpush1.bf16.msra.mxu0 0
  %1775 = vmatprep.subr.bf16.mxu0 0
  %1776 = vmatpush1.bf16.msra.mxu0 0
  %1777 = vmatprep.subr.bf16.mxu0 0
  %1778 = vmatpush1.bf16.msra.mxu0 0
  %1779 = vmatprep.subr.bf16.mxu0 0
  %1780 = vmatpush1.bf16.msra.mxu0 0
  %1781 = vmatprep.subr.bf16.mxu0 0
  %1782 = vmatpush1.bf16.msra.mxu0 0
  %1783 = vmatprep.subr.bf16.mxu0 0
  %1784 = vmatpush1.bf16.msra.mxu0 0
  %1785 = vmatprep.mubr.bf16.mxu0 0
  %1786 = vmatmul.mubr.bf16.gmra.mrb[0].mxu0 %v1711
  %v1787 = vpop.f32.mrb[0].mxu0
  %v1788 = vadd.f32 0.0, %v1787
  %v1789 = vpop.f32.mrb[0].mxu0
  %v1790 = vadd.f32 0.0, %v1789
  %v1791 = vpop.f32.mrb[0].mxu0
  %v1792 = vpop.f32.mrb[0].mxu0
  %1793 = vdwg.mxu0
  %v1794 = vadd.f32 %v1700, %v1747
  %v1795 = vadd.f32 %v1701, %v1749
  %v1796 = vadd.f32 %v1702, %v1788
  %v1797 = vadd.f32 %v1703, %v1790
  %v1798 = vxor.u32 %v1794, 2147483648
  %v1799 = vmul.f32 %v1798, 1.442695
  %v1800 = vpow.pop %v1799
  %v1801 = vadd.f32 %v1800, 1.0
  %v1802 = vrcp.pop %v1801
  %v1803 = vmul.f32 1.0, %v1802
  %v1804 = vxor.u32 %v1795, 2147483648
  %v1805 = vmul.f32 %v1804, 1.442695
  %v1806 = vpow.pop %v1805
  %v1807 = vadd.f32 %v1806, 1.0
  %v1808 = vrcp.pop %v1807
  %v1809 = vmul.f32 1.0, %v1808
  %v1810 = vtanh.pop %v1796
  %v1811 = vxor.u32 %v1797, 2147483648
  %v1812 = vmul.f32 %v1811, 1.442695
  %v1813 = vpow.pop %v1812
  %v1814 = vadd.f32 %v1813, 1.0
  %v1815 = vrcp.pop %v1814
  %v1816 = vmul.f32 1.0, %v1815
  %v1817 = vmul.f32 %v1809, %v1710
  %v1818 = vmul.f32 %v1803, %v1810
  %v1819 = vadd.f32 %v1817, %v1818
  %v1820 = vtanh.pop %v1819
  %v1821 = vmul.f32 %v1816, %v1820
  %v1822 = vsel %vm1699, 1, 0
  %1823 = vset.pattern.permute.xlu0 0
  %1824 = vperm.xlu0 %1823, %v1822
  %v1825 = vpop.permute.xlu0 %1824
  %vm1826 = vcmp.eq.s32.totalorder %v1825, 1
  %v1827 = vsel %vm1826, %v1821, 0.0
  %s1828 = scalar_lea.vmem %s6, 40
  %1829 = vst [vmem:[%s1828] sm:$0xff] %v1827
  %v1830 = vsel %vm1826, %v1821, %v1693
  %v1831 = vsel %vm1826, %v1819, %v1694
  %s1832 = scalar_lea.vmem %s1, 48
  %v1833 = vld [vmem:[%s1832] sm:$0xff]
  %s1834 = scalar_lea.vmem %s2, 48
  %v1835 = vld [vmem:[%s1834] sm:$0xff]
  %vm1836 = vcmp.ne.f32.partialorder %v1835, 0.0
  %v1837 = vld [vmem:[%s721] sm:$0xff]
  %v1838 = vld [vmem:[%s721 + $0x8] sm:$0xff]
  %v1839 = vld [vmem:[%s721 + $0x10] sm:$0xff]
  %v1840 = vld [vmem:[%s721 + $0x18] sm:$0xff]
  %1842 = vset.pattern.permute.xlu0 0
  %1843 = vperm.xlu0 %1842, %v1833
  %v1844 = vpop.permute.xlu0 %1843
  %v1846 = vmul.f32 %v1830, %v1844
  %v1847 = vmul.f32 %v1831, %v1844
  %v1848 = vpack.c.bf16 %v1846, %v1846
  %1849 = vmatprep.subr.bf16.mxu0 %v965
  %1850 = vmatpush1.bf16.msra.mxu0 %v964
  %1851 = vmatprep.subr.bf16.mxu0 %v969
  %1852 = vmatpush1.bf16.msra.mxu0 %v968
  %1853 = vmatprep.subr.bf16.mxu0 %v973
  %1854 = vmatpush1.bf16.msra.mxu0 %v972
  %1855 = vmatprep.subr.bf16.mxu0 %v977
  %1856 = vmatpush1.bf16.msra.mxu0 %v976
  %1857 = vmatprep.subr.bf16.mxu0 %v981
  %1858 = vmatpush1.bf16.msra.mxu0 %v980
  %1859 = vmatprep.subr.bf16.mxu0 %v985
  %1860 = vmatpush1.bf16.msra.mxu0 %v984
  %1861 = vmatprep.subr.bf16.mxu0 %v989
  %1862 = vmatpush1.bf16.msra.mxu0 %v988
  %1863 = vmatprep.subr.bf16.mxu0 %v993
  %1864 = vmatpush1.bf16.msra.mxu0 %v992
  %1865 = vmatprep.subr.bf16.mxu0 0
  %1866 = vmatpush1.bf16.msra.mxu0 0
  %1867 = vmatprep.subr.bf16.mxu0 0
  %1868 = vmatpush1.bf16.msra.mxu0 0
  %1869 = vmatprep.subr.bf16.mxu0 0
  %1870 = vmatpush1.bf16.msra.mxu0 0
  %1871 = vmatprep.subr.bf16.mxu0 0
  %1872 = vmatpush1.bf16.msra.mxu0 0
  %1873 = vmatprep.subr.bf16.mxu0 0
  %1874 = vmatpush1.bf16.msra.mxu0 0
  %1875 = vmatprep.subr.bf16.mxu0 0
  %1876 = vmatpush1.bf16.msra.mxu0 0
  %1877 = vmatprep.subr.bf16.mxu0 0
  %1878 = vmatpush1.bf16.msra.mxu0 0
  %1879 = vmatprep.subr.bf16.mxu0 0
  %1880 = vmatpush1.bf16.msra.mxu0 0
  %1881 = vmatprep.mubr.bf16.mxu0 0
  %1882 = vmatmul.mubr.bf16.gmra.mrb[0].mxu0 %v1848
  %v1883 = vpop.f32.mrb[0].mxu0
  %v1884 = vadd.f32 0.0, %v1883
  %v1885 = vpop.f32.mrb[0].mxu0
  %v1886 = vadd.f32 0.0, %v1885
  %v1887 = vpop.f32.mrb[0].mxu0
  %v1888 = vpop.f32.mrb[0].mxu0
  %1889 = vdwg.mxu0
  %1890 = vmatprep.subr.bf16.mxu0 %v967
  %1891 = vmatpush1.bf16.msra.mxu0 %v966
  %1892 = vmatprep.subr.bf16.mxu0 %v971
  %1893 = vmatpush1.bf16.msra.mxu0 %v970
  %1894 = vmatprep.subr.bf16.mxu0 %v975
  %1895 = vmatpush1.bf16.msra.mxu0 %v974
  %1896 = vmatprep.subr.bf16.mxu0 %v979
  %1897 = vmatpush1.bf16.msra.mxu0 %v978
  %1898 = vmatprep.subr.bf16.mxu0 %v983
  %1899 = vmatpush1.bf16.msra.mxu0 %v982
  %1900 = vmatprep.subr.bf16.mxu0 %v987
  %1901 = vmatpush1.bf16.msra.mxu0 %v986
  %1902 = vmatprep.subr.bf16.mxu0 %v991
  %1903 = vmatpush1.bf16.msra.mxu0 %v990
  %1904 = vmatprep.subr.bf16.mxu0 %v995
  %1905 = vmatpush1.bf16.msra.mxu0 %v994
  %1906 = vmatprep.subr.bf16.mxu0 0
  %1907 = vmatpush1.bf16.msra.mxu0 0
  %1908 = vmatprep.subr.bf16.mxu0 0
  %1909 = vmatpush1.bf16.msra.mxu0 0
  %1910 = vmatprep.subr.bf16.mxu0 0
  %1911 = vmatpush1.bf16.msra.mxu0 0
  %1912 = vmatprep.subr.bf16.mxu0 0
  %1913 = vmatpush1.bf16.msra.mxu0 0
  %1914 = vmatprep.subr.bf16.mxu0 0
  %1915 = vmatpush1.bf16.msra.mxu0 0
  %1916 = vmatprep.subr.bf16.mxu0 0
  %1917 = vmatpush1.bf16.msra.mxu0 0
  %1918 = vmatprep.subr.bf16.mxu0 0
  %1919 = vmatpush1.bf16.msra.mxu0 0
  %1920 = vmatprep.subr.bf16.mxu0 0
  %1921 = vmatpush1.bf16.msra.mxu0 0
  %1922 = vmatprep.mubr.bf16.mxu0 0
  %1923 = vmatmul.mubr.bf16.gmra.mrb[0].mxu0 %v1848
  %v1924 = vpop.f32.mrb[0].mxu0
  %v1925 = vadd.f32 0.0, %v1924
  %v1926 = vpop.f32.mrb[0].mxu0
  %v1927 = vadd.f32 0.0, %v1926
  %v1928 = vpop.f32.mrb[0].mxu0
  %v1929 = vpop.f32.mrb[0].mxu0
  %1930 = vdwg.mxu0
  %v1931 = vadd.f32 %v1837, %v1884
  %v1932 = vadd.f32 %v1838, %v1886
  %v1933 = vadd.f32 %v1839, %v1925
  %v1934 = vadd.f32 %v1840, %v1927
  %v1935 = vxor.u32 %v1931, 2147483648
  %v1936 = vmul.f32 %v1935, 1.442695
  %v1937 = vpow.pop %v1936
  %v1938 = vadd.f32 %v1937, 1.0
  %v1939 = vrcp.pop %v1938
  %v1940 = vmul.f32 1.0, %v1939
  %v1941 = vxor.u32 %v1932, 2147483648
  %v1942 = vmul.f32 %v1941, 1.442695
  %v1943 = vpow.pop %v1942
  %v1944 = vadd.f32 %v1943, 1.0
  %v1945 = vrcp.pop %v1944
  %v1946 = vmul.f32 1.0, %v1945
  %v1947 = vtanh.pop %v1933
  %v1948 = vxor.u32 %v1934, 2147483648
  %v1949 = vmul.f32 %v1948, 1.442695
  %v1950 = vpow.pop %v1949
  %v1951 = vadd.f32 %v1950, 1.0
  %v1952 = vrcp.pop %v1951
  %v1953 = vmul.f32 1.0, %v1952
  %v1954 = vmul.f32 %v1946, %v1847
  %v1955 = vmul.f32 %v1940, %v1947
  %v1956 = vadd.f32 %v1954, %v1955
  %v1957 = vtanh.pop %v1956
  %v1958 = vmul.f32 %v1953, %v1957
  %v1959 = vsel %vm1836, 1, 0
  %1960 = vset.pattern.permute.xlu0 0
  %1961 = vperm.xlu0 %1960, %v1959
  %v1962 = vpop.permute.xlu0 %1961
  %vm1963 = vcmp.eq.s32.totalorder %v1962, 1
  %v1964 = vsel %vm1963, %v1958, 0.0
  %s1965 = scalar_lea.vmem %s6, 48
  %1966 = vst [vmem:[%s1965] sm:$0xff] %v1964
  %v1967 = vsel %vm1963, %v1958, %v1830
  %v1968 = vsel %vm1963, %v1956, %v1831
  %s1969 = scalar_lea.vmem %s1, 56
  %v1970 = vld [vmem:[%s1969] sm:$0xff]
  %s1971 = scalar_lea.vmem %s2, 56
  %v1972 = vld [vmem:[%s1971] sm:$0xff]
  %vm1973 = vcmp.ne.f32.partialorder %v1972, 0.0
  %v1974 = vld [vmem:[%s814] sm:$0xff]
  %v1975 = vld [vmem:[%s814 + $0x8] sm:$0xff]
  %v1976 = vld [vmem:[%s814 + $0x10] sm:$0xff]
  %v1977 = vld [vmem:[%s814 + $0x18] sm:$0xff]
  %1979 = vset.pattern.permute.xlu0 0
  %1980 = vperm.xlu0 %1979, %v1970
  %v1981 = vpop.permute.xlu0 %1980
  %v1983 = vmul.f32 %v1967, %v1981
  %v1984 = vmul.f32 %v1968, %v1981
  %v1985 = vpack.c.bf16 %v1983, %v1983
  %1986 = vmatprep.subr.bf16.mxu0 %v965
  %1987 = vmatpush1.bf16.msra.mxu0 %v964
  %1988 = vmatprep.subr.bf16.mxu0 %v969
  %1989 = vmatpush1.bf16.msra.mxu0 %v968
  %1990 = vmatprep.subr.bf16.mxu0 %v973
  %1991 = vmatpush1.bf16.msra.mxu0 %v972
  %1992 = vmatprep.subr.bf16.mxu0 %v977
  %1993 = vmatpush1.bf16.msra.mxu0 %v976
  %1994 = vmatprep.subr.bf16.mxu0 %v981
  %1995 = vmatpush1.bf16.msra.mxu0 %v980
  %1996 = vmatprep.subr.bf16.mxu0 %v985
  %1997 = vmatpush1.bf16.msra.mxu0 %v984
  %1998 = vmatprep.subr.bf16.mxu0 %v989
  %1999 = vmatpush1.bf16.msra.mxu0 %v988
  %2000 = vmatprep.subr.bf16.mxu0 %v993
  %2001 = vmatpush1.bf16.msra.mxu0 %v992
  %2002 = vmatprep.subr.bf16.mxu0 0
  %2003 = vmatpush1.bf16.msra.mxu0 0
  %2004 = vmatprep.subr.bf16.mxu0 0
  %2005 = vmatpush1.bf16.msra.mxu0 0
  %2006 = vmatprep.subr.bf16.mxu0 0
  %2007 = vmatpush1.bf16.msra.mxu0 0
  %2008 = vmatprep.subr.bf16.mxu0 0
  %2009 = vmatpush1.bf16.msra.mxu0 0
  %2010 = vmatprep.subr.bf16.mxu0 0
  %2011 = vmatpush1.bf16.msra.mxu0 0
  %2012 = vmatprep.subr.bf16.mxu0 0
  %2013 = vmatpush1.bf16.msra.mxu0 0
  %2014 = vmatprep.subr.bf16.mxu0 0
  %2015 = vmatpush1.bf16.msra.mxu0 0
  %2016 = vmatprep.subr.bf16.mxu0 0
  %2017 = vmatpush1.bf16.msra.mxu0 0
  %2018 = vmatprep.mubr.bf16.mxu0 0
  %2019 = vmatmul.mubr.bf16.gmra.mrb[0].mxu0 %v1985
  %v2020 = vpop.f32.mrb[0].mxu0
  %v2021 = vadd.f32 0.0, %v2020
  %v2022 = vpop.f32.mrb[0].mxu0
  %v2023 = vadd.f32 0.0, %v2022
  %v2024 = vpop.f32.mrb[0].mxu0
  %v2025 = vpop.f32.mrb[0].mxu0
  %2026 = vdwg.mxu0
  %2027 = vmatprep.subr.bf16.mxu0 %v967
  %2028 = vmatpush1.bf16.msra.mxu0 %v966
  %2029 = vmatprep.subr.bf16.mxu0 %v971
  %2030 = vmatpush1.bf16.msra.mxu0 %v970
  %2031 = vmatprep.subr.bf16.mxu0 %v975
  %2032 = vmatpush1.bf16.msra.mxu0 %v974
  %2033 = vmatprep.subr.bf16.mxu0 %v979
  %2034 = vmatpush1.bf16.msra.mxu0 %v978
  %2035 = vmatprep.subr.bf16.mxu0 %v983
  %2036 = vmatpush1.bf16.msra.mxu0 %v982
  %2037 = vmatprep.subr.bf16.mxu0 %v987
  %2038 = vmatpush1.bf16.msra.mxu0 %v986
  %2039 = vmatprep.subr.bf16.mxu0 %v991
  %2040 = vmatpush1.bf16.msra.mxu0 %v990
  %2041 = vmatprep.subr.bf16.mxu0 %v995
  %2042 = vmatpush1.bf16.msra.mxu0 %v994
  %2043 = vmatprep.subr.bf16.mxu0 0
  %2044 = vmatpush1.bf16.msra.mxu0 0
  %2045 = vmatprep.subr.bf16.mxu0 0
  %2046 = vmatpush1.bf16.msra.mxu0 0
  %2047 = vmatprep.subr.bf16.mxu0 0
  %2048 = vmatpush1.bf16.msra.mxu0 0
  %2049 = vmatprep.subr.bf16.mxu0 0
  %2050 = vmatpush1.bf16.msra.mxu0 0
  %2051 = vmatprep.subr.bf16.mxu0 0
  %2052 = vmatpush1.bf16.msra.mxu0 0
  %2053 = vmatprep.subr.bf16.mxu0 0
  %2054 = vmatpush1.bf16.msra.mxu0 0
  %2055 = vmatprep.subr.bf16.mxu0 0
  %2056 = vmatpush1.bf16.msra.mxu0 0
  %2057 = vmatprep.subr.bf16.mxu0 0
  %2058 = vmatpush1.bf16.msra.mxu0 0
  %2059 = vmatprep.mubr.bf16.mxu0 0
  %2060 = vmatmul.mubr.bf16.gmra.mrb[0].mxu0 %v1985
  %v2061 = vpop.f32.mrb[0].mxu0
  %v2062 = vadd.f32 0.0, %v2061
  %v2063 = vpop.f32.mrb[0].mxu0
  %v2064 = vadd.f32 0.0, %v2063
  %v2065 = vpop.f32.mrb[0].mxu0
  %v2066 = vpop.f32.mrb[0].mxu0
  %2067 = vdwg.mxu0
  %v2068 = vadd.f32 %v1974, %v2021
  %v2069 = vadd.f32 %v1975, %v2023
  %v2070 = vadd.f32 %v1976, %v2062
  %v2071 = vadd.f32 %v1977, %v2064
  %v2072 = vxor.u32 %v2068, 2147483648
  %v2073 = vmul.f32 %v2072, 1.442695
  %v2074 = vpow.pop %v2073
  %v2075 = vadd.f32 %v2074, 1.0
  %v2076 = vrcp.pop %v2075
  %v2077 = vmul.f32 1.0, %v2076
  %v2078 = vxor.u32 %v2069, 2147483648
  %v2079 = vmul.f32 %v2078, 1.442695
  %v2080 = vpow.pop %v2079
  %v2081 = vadd.f32 %v2080, 1.0
  %v2082 = vrcp.pop %v2081
  %v2083 = vmul.f32 1.0, %v2082
  %v2084 = vtanh.pop %v2070
  %v2085 = vxor.u32 %v2071, 2147483648
  %v2086 = vmul.f32 %v2085, 1.442695
  %v2087 = vpow.pop %v2086
  %v2088 = vadd.f32 %v2087, 1.0
  %v2089 = vrcp.pop %v2088
  %v2090 = vmul.f32 1.0, %v2089
  %v2091 = vmul.f32 %v2083, %v1984
  %v2092 = vmul.f32 %v2077, %v2084
  %v2093 = vadd.f32 %v2091, %v2092
  %v2094 = vtanh.pop %v2093
  %v2095 = vmul.f32 %v2090, %v2094
  %v2096 = vsel %vm1973, 1, 0
  %2097 = vset.pattern.permute.xlu0 0
  %2098 = vperm.xlu0 %2097, %v2096
  %v2099 = vpop.permute.xlu0 %2098
  %vm2100 = vcmp.eq.s32.totalorder %v2099, 1
  %v2101 = vsel %vm2100, %v2095, 0.0
  %s2102 = scalar_lea.vmem %s6, 56
  %2103 = vst [vmem:[%s2102] sm:$0xff] %v2101
  %v2104 = vsel %vm2100, %v2095, %v1967
  %v2105 = vsel %vm2100, %v2093, %v1968
  %2106 = vst [vmem:[#allocation3] sm:$0xff] %v2104
  %2107 = vst [vmem:[#allocation4] sm:$0xff] %v2105
  // Predicated region
  $region30: #{rnn_device_forward.1} parent=0 // pred_check
    _
  $region31: #{rnn_device_forward.1} parent=0 // pred_check_branch
    %2109 = sbr.rel (0) target = $region33
  $region32: #{rnn_device_forward.1} parent=0 // pred_region
    _
  $region33: #{rnn_device_forward.1} parent=0 // pred_fallthru
    _
  // Predicated region
  $region34: #{rnn_device_forward.1} parent=0 // pred_check
    _
  $region35: #{rnn_device_forward.1} parent=0 // pred_check_branch
    %2111 = sbr.rel (0) target = $region37
  $region36: #{rnn_device_forward.1} parent=0 // pred_region
    _
  $region37: #{rnn_device_forward.1} parent=0 // pred_fallthru
    _

</llo_original>
